<compile_context>
chip_gen: v5e
topology: v5e:2x2
jax: 0.10.0
libtpu: 0.0.40
codegen_flags: <defaults>
</compile_context>

<pallas_src>
import jax
import jax.numpy as jnp
import numpy as np
from jax.experimental import pallas as pl
from jax.experimental.pallas import tpu as pltpu

EPS = 1e-5


# ----------------------------- kernel helpers -----------------------------

def _write_padded(pad_ref, interior_f32):
    """Write the (Hp+2, Wp+2, C) zero-padded conv input with aligned band stores.

    interior_f32: (Hp, Wp, C) f32 values; stored into the bf16 scratch.
    Borders are rewritten every grid step on purpose: with "parallel"
    dimension semantics each TensorCore owns its own scratch, so a
    program_id==0 guard would leave one core's borders uninitialized.
    """
    Hp, Wp, C = interior_f32.shape
    dt = pad_ref.dtype
    zrow = jnp.zeros((1, Wp + 2, C), dt)
    pad_ref[0:1, :, :] = zrow
    pad_ref[Hp + 1:Hp + 2, :, :] = zrow
    zcol = jnp.zeros((Hp, 1, C), jnp.float32)
    band = jnp.concatenate([zcol, interior_f32, zcol], axis=1)   # (Hp, Wp+2, C)
    pad_ref[1:Hp + 1, :, :] = band.astype(dt)


def _im2col_conv3x3(pad_ref, w_ref, Hp, Wp, C):
    """3x3 'same' conv as ONE bf16 matmul: (M, 9C) @ (9C, Cout), f32 acc."""
    M = Hp * Wp
    patches = jnp.concatenate(
        [pad_ref[dy:dy + Hp, dx:dx + Wp, :] for dy in range(3) for dx in range(3)],
        axis=-1)                                             # (Hp, Wp, 9C) bf16
    patches = patches.reshape(M, 9 * C)                      # single reshape
    return jnp.dot(patches, w_ref[...],
                   preferred_element_type=jnp.float32)       # (M, Cout) f32


def _partial_bn_stats(y, s_ref):
    """Emit per-image, per-channel [sum, centered sum-of-squares] in f32."""
    M = y.shape[0]
    s = jnp.sum(y, axis=0, keepdims=True)                    # (1, Cout)
    mean_i = s / M
    m2 = jnp.sum((y - mean_i) ** 2, axis=0, keepdims=True)   # (1, Cout)
    s_ref[0, 0:1, :] = s
    s_ref[0, 1:2, :] = m2


# ------------------------------- kernels ----------------------------------

def pool_conv1_kernel(x_ref, w1_ref, y1_ref, s1_ref, pad_ref):
    # x_ref:  (1, H, W, Cin) bf16      w1_ref: (9*Cin, Cout) bf16
    # y1_ref: (1, Hp*Wp, Cout) bf16    s1_ref: (1, 2, Cout) f32
    # pad_ref: (Hp+2, Wp+2, Cin) bf16 scratch
    _, H, W, Cin = x_ref.shape
    Hp, Wp = H // 2, W // 2

    # MaxPool2d(2).  The HBM read is bf16 (halved bandwidth); the pooling
    # relayouts themselves stay on the proven f32 path.
    x = x_ref[0].astype(jnp.float32)                 # (H, W, Cin)
    xr = x.reshape(Hp, 2, W, Cin)                    # leading-dim split (free)
    xh = jnp.maximum(xr[:, 0], xr[:, 1])             # (Hp, W, Cin)
    pooled = jnp.max(xh.reshape(Hp, Wp, 2, Cin), axis=2)   # (Hp, Wp, Cin)

    _write_padded(pad_ref, pooled)

    # Conv1 (bias omitted: it cancels exactly under batch-stat BatchNorm).
    y = _im2col_conv3x3(pad_ref, w1_ref, Hp, Wp, Cin)       # (M, Cout) f32

    _partial_bn_stats(y, s1_ref)
    y1_ref[0] = y.astype(y1_ref.dtype)


def bn1_conv2_kernel(y1_ref, sc1_ref, sh1_ref, w2_ref, y2_ref, s2_ref, pad_ref):
    # y1_ref: (1, Hp*Wp, C) bf16   sc1/sh1: (1, C) f32 (BN1 folded scale/shift)
    # w2_ref: (9*C, Cout) bf16     y2_ref: (1, Hp*Wp, Cout) bf16
    # s2_ref: (1, 2, Cout) f32     pad_ref: (Hp+2, Wp+2, C) bf16 scratch
    Hpad, Wpad, C = pad_ref.shape
    Hp, Wp = Hpad - 2, Wpad - 2

    # BN1 (folded batch stats) + ReLU in f32.
    h = jnp.maximum(y1_ref[0].astype(jnp.float32) * sc1_ref[...] + sh1_ref[...],
                    0.0)                                    # (M, C) f32
    _write_padded(pad_ref, h.reshape(Hp, Wp, C))

    # Conv2 (bias omitted: cancels under batch-stat BatchNorm).
    y = _im2col_conv3x3(pad_ref, w2_ref, Hp, Wp, C)         # (M, Cout) f32

    _partial_bn_stats(y, s2_ref)
    y2_ref[0] = y.astype(y2_ref.dtype)


def bn2_relu_kernel(y2_ref, sc2_ref, sh2_ref, o_ref):
    # Lane-dense elementwise epilogue (last dim = Wp*Cout); scale/shift are
    # pre-tiled per lane, and the pass runs in place on y2's buffer (aliased).
    o_ref[0] = jnp.maximum(
        y2_ref[0].astype(jnp.float32) * sc2_ref[...] + sh2_ref[...], 0.0
    ).astype(o_ref.dtype)


# ------------------------------- wrapper -----------------------------------

def _vmem_limit_bytes():
    """Per-generation VMEM cap: <= 3/4 of physical (v7x only has 64 MiB)."""
    cap = 64 * 1024 * 1024
    try:
        cap = int(pltpu.get_tpu_info().vmem_capacity_bytes)
    except Exception:
        pass
    return max(32 * 1024 * 1024, min(cap * 3 // 4, 96 * 1024 * 1024))


def _bn_scale_shift(stats, m_per_img, gamma, beta):
    """Combine per-image [sum, centered sumsq] into BN scale/shift (train mode)."""
    n_img = stats.shape[0]
    total = n_img * m_per_img
    sums = stats[:, 0, :]                               # (N, C)
    m2s = stats[:, 1, :]                                # (N, C)
    mean = jnp.sum(sums, axis=0) / total                # (C,)
    mean_i = sums / m_per_img                           # (N, C)
    # Parallel (Chan) variance combine: robust vs E[y^2]-E[y]^2 cancellation.
    var = (jnp.sum(m2s, axis=0)
           + m_per_img * jnp.sum((mean_i - mean) ** 2, axis=0)) / total
    var = jnp.maximum(var, 0.0)                         # biased variance
    scale = gamma.reshape(-1) * jax.lax.rsqrt(var + EPS)
    shift = beta.reshape(-1) - mean * scale
    return scale.reshape(1, -1), shift.reshape(1, -1)


@jax.jit
def downsample(x_nchw, params):
    """PyTorch-equivalent DownSample forward (training-mode BN). x: (N,Cin,H,W)."""
    w1, b1, g1, be1, w2, b2, g2, be2 = params
    del b1, b2  # conv bias is exactly cancelled by batch-statistics BatchNorm
    N, Cin, H, W = x_nchw.shape
    Cout = w1.shape[-1]
    assert H % 2 == 0 and W % 2 == 0
    Hp, Wp = H // 2, W // 2
    M = Hp * Wp

    # TODO(synk): wrapper NCHW<->NHWC transposes remain to match the PyTorch
    # interface; in a full NHWC model they would be elided.
    x_nhwc = jnp.transpose(x_nchw, (0, 2, 3, 1)).astype(jnp.bfloat16)
    w1p = w1.reshape(9 * Cin, Cout).astype(jnp.bfloat16)    # im2col weight layout
    w2p = w2.reshape(9 * Cout, Cout).astype(jnp.bfloat16)

    cparams = pltpu.CompilerParams(
        dimension_semantics=("parallel",),          # megacore sharding on v7x
        vmem_limit_bytes=_vmem_limit_bytes(),
    )

    # ---- stage 1: MaxPool + Conv1, per-image partial BN1 stats ----
    # TODO(synk): for large H,W add a spatial row-block grid axis with a 1-row
    # halo; whole-image blocks are fine at these shapes but not at 256x256x64.
    y1, s1 = pl.pallas_call(
        pool_conv1_kernel,
        grid=(N,),
        in_specs=[
            pl.BlockSpec((1, H, W, Cin), lambda n: (n, 0, 0, 0)),
            pl.BlockSpec((9 * Cin, Cout), lambda n: (0, 0)),
        ],
        out_specs=(
            pl.BlockSpec((1, M, Cout), lambda n: (n, 0, 0)),
            pl.BlockSpec((1, 2, Cout), lambda n: (n, 0, 0)),
        ),
        out_shape=(
            jax.ShapeDtypeStruct((N, M, Cout), jnp.bfloat16),
            jax.ShapeDtypeStruct((N, 2, Cout), jnp.float32),
        ),
        scratch_shapes=[pltpu.VMEM((Hp + 2, Wp + 2, Cin), jnp.bfloat16)],
        compiler_params=cparams,
    )(x_nhwc, w1p)

    sc1, sh1 = _bn_scale_shift(s1, M, g1, be1)

    # ---- stage 2: BN1 + ReLU + Conv2, per-image partial BN2 stats ----
    y2, s2 = pl.pallas_call(
        bn1_conv2_kernel,
        grid=(N,),
        in_specs=[
            pl.BlockSpec((1, M, Cout), lambda n: (n, 0, 0)),
            pl.BlockSpec((1, Cout), lambda n: (0, 0)),
            pl.BlockSpec((1, Cout), lambda n: (0, 0)),
            pl.BlockSpec((9 * Cout, Cout), lambda n: (0, 0)),
        ],
        out_specs=(
            pl.BlockSpec((1, M, Cout), lambda n: (n, 0, 0)),
            pl.BlockSpec((1, 2, Cout), lambda n: (n, 0, 0)),
        ),
        out_shape=(
            jax.ShapeDtypeStruct((N, M, Cout), jnp.bfloat16),
            jax.ShapeDtypeStruct((N, 2, Cout), jnp.float32),
        ),
        scratch_shapes=[pltpu.VMEM((Hp + 2, Wp + 2, Cout), jnp.bfloat16)],
        compiler_params=cparams,
    )(y1, sc1, sh1, w2p)

    sc2, sh2 = _bn_scale_shift(s2, M, g2, be2)

    # ---- stage 3: BN2 + ReLU, lane-dense, in place on y2's buffer ----
    y2_dense = y2.reshape(N, Hp, Wp * Cout)   # free bitcast (same linear layout)
    sc2_t = jnp.tile(sc2, (1, Wp))            # per-lane scale, lane idx = w*Cout+c
    sh2_t = jnp.tile(sh2, (1, Wp))

    out_dense = pl.pallas_call(
        bn2_relu_kernel,
        grid=(N,),
        in_specs=[
            pl.BlockSpec((1, Hp, Wp * Cout), lambda n: (n, 0, 0)),
            pl.BlockSpec((1, Wp * Cout), lambda n: (0, 0)),
            pl.BlockSpec((1, Wp * Cout), lambda n: (0, 0)),
        ],
        out_specs=pl.BlockSpec((1, Hp, Wp * Cout), lambda n: (n, 0, 0)),
        out_shape=jax.ShapeDtypeStruct((N, Hp, Wp * Cout), jnp.bfloat16),
        input_output_aliases={0: 0},          # BN2+ReLU in place on y2
        compiler_params=cparams,
    )(y2_dense, sc2_t, sh2_t)

    out_nhwc = out_dense.reshape(N, Hp, Wp, Cout)
    return jnp.transpose(out_nhwc, (0, 3, 1, 2)).astype(jnp.float32)   # NCHW


# ------------------------------ reference ----------------------------------

def _reference(x_nchw, params):
    """Pure-JAX f32 reference of the same forward (PyTorch train-mode BN)."""
    w1, b1, g1, be1, w2, b2, g2, be2 = params
    x = jnp.transpose(x_nchw, (0, 2, 3, 1))
    N, H, W, Cin = x.shape
    x = jnp.max(x.reshape(N, H // 2, 2, W // 2, 2, Cin), axis=(2, 4))

    def conv_bn_relu(x, w, b, g, be):
        y = jax.lax.conv_general_dilated(
            x, w, window_strides=(1, 1), padding="SAME",
            dimension_numbers=("NHWC", "HWIO", "NHWC")) + b.reshape(1, 1, 1, -1)
        m = jnp.mean(y, axis=(0, 1, 2), keepdims=True)
        v = jnp.mean((y - m) ** 2, axis=(0, 1, 2), keepdims=True)
        y = (y - m) * jax.lax.rsqrt(v + EPS)
        y = y * g.reshape(1, 1, 1, -1) + be.reshape(1, 1, 1, -1)
        return jnp.maximum(y, 0.0)

    x = conv_bn_relu(x, w1, b1, g1, be1)
    x = conv_bn_relu(x, w2, b2, g2, be2)
    return jnp.transpose(x, (0, 3, 1, 2))


if __name__ == "__main__":
    key = jax.random.PRNGKey(0)
    N, Cin, Cout, H, W = 2, 4, 8, 16, 16
    k = jax.random.split(key, 5)

    x = jax.random.normal(k[0], (N, Cin, H, W), jnp.float32)

    # Deterministic PyTorch-style init (kaiming-uniform bounds), HWIO layout.
    fan1 = Cin * 9
    bound1 = 1.0 / (fan1 ** 0.5)
    w1 = jax.random.uniform(k[1], (3, 3, Cin, Cout), jnp.float32, -bound1, bound1)
    b1 = jax.random.uniform(k[2], (1, Cout), jnp.float32, -bound1, bound1)
    fan2 = Cout * 9
    bound2 = 1.0 / (fan2 ** 0.5)
    w2 = jax.random.uniform(k[3], (3, 3, Cout, Cout), jnp.float32, -bound2, bound2)
    b2 = jax.random.uniform(k[4], (1, Cout), jnp.float32, -bound2, bound2)
    # BatchNorm affine params (PyTorch default init: weight=1, bias=0).
    g1 = jnp.ones((1, Cout), jnp.float32)
    be1 = jnp.zeros((1, Cout), jnp.float32)
    g2 = jnp.ones((1, Cout), jnp.float32)
    be2 = jnp.zeros((1, Cout), jnp.float32)

    params = (w1, b1, g1, be1, w2, b2, g2, be2)

    out = downsample(x, params)
    jax.block_until_ready(out)

    ref = _reference(x, params)
    # Tolerance sized for bf16 input/weights/intermediates (accumulation is
    # f32 and BN renormalizes, so absolute error stays ~1e-2 vs O(1) outputs).
    np.testing.assert_allclose(np.asarray(out), np.asarray(ref),
                               rtol=1e-1, atol=1e-1)
    print("KERNEL_OK")
</pallas_src>

<mosaic_0001>
module attributes {stable_mosaic.version = 11 : i64} {
  func.func @pool_conv1_kernel(%arg0: i32, %arg1: memref<1x16x16x4xbf16, #tpu.memory_space<vmem>>, %arg2: memref<36x8xbf16, #tpu.memory_space<vmem>>, %arg3: memref<1x64x8xbf16, #tpu.memory_space<vmem>>, %arg4: memref<1x2x8xf32, #tpu.memory_space<vmem>>, %arg5: memref<10x10x4xbf16, #tpu.memory_space<vmem>>) attributes {dimension_semantics = [#tpu.dimension_semantics<parallel>], iteration_bounds = array<i64: 2>, scalar_prefetch = 0 : i64, scratch_operands = 1 : i64, tpu.core_type = #tpu.core_type<tc>, window_params = [{transform_indices = @transform_0, window_bounds = array<i64: 1, 16, 16, 4>}, {pipeline_mode = #tpu.pipeline_mode<synchronous>, transform_indices = @transform_1, window_bounds = array<i64: 36, 8>}, {transform_indices = @transform_2, window_bounds = array<i64: 1, 64, 8>}, {transform_indices = @transform_3, window_bounds = array<i64: 1, 2, 8>}]} {
    %c0 = arith.constant 0 : index
    %c0_0 = arith.constant 0 : index
    %c0_1 = arith.constant 0 : index
    %c0_2 = arith.constant 0 : index
    %0 = vector.load %arg1[%c0, %c0_0, %c0_1, %c0_2] : memref<1x16x16x4xbf16, #tpu.memory_space<vmem>>, vector<1x16x16x4xbf16>
    %1 = vector.shape_cast %0 : vector<1x16x16x4xbf16> to vector<16x16x4xbf16>
    %2 = arith.extf %1 : vector<16x16x4xbf16> to vector<16x16x4xf32>
    %3 = vector.shape_cast %2 : vector<16x16x4xf32> to vector<8x2x16x4xf32>
    %4 = vector.extract_strided_slice %3 {offsets = [0, 0, 0, 0], sizes = [8, 1, 16, 4], strides = [1, 1, 1, 1]} : vector<8x2x16x4xf32> to vector<8x1x16x4xf32>
    %5 = vector.shape_cast %4 : vector<8x1x16x4xf32> to vector<8x16x4xf32>
    %6 = vector.extract_strided_slice %3 {offsets = [0, 1, 0, 0], sizes = [8, 1, 16, 4], strides = [1, 1, 1, 1]} : vector<8x2x16x4xf32> to vector<8x1x16x4xf32>
    %7 = vector.shape_cast %6 : vector<8x1x16x4xf32> to vector<8x16x4xf32>
    %8 = arith.maximumf %5, %7 : vector<8x16x4xf32>
    %9 = vector.shape_cast %8 : vector<8x16x4xf32> to vector<8x8x2x4xf32>
    %cst = arith.constant dense<0xFF800000> : vector<8x8x4xf32>
    %10 = vector.multi_reduction <maximumf>, %9, %cst [2] : vector<8x8x2x4xf32> to vector<8x8x4xf32>
    %cst_3 = arith.constant 0.000000e+00 : bf16
    %11 = vector.broadcast %cst_3 : bf16 to vector<1x10x4xbf16>
    %c0_4 = arith.constant 0 : index
    %c0_5 = arith.constant 0 : index
    %c0_6 = arith.constant 0 : index
    %12 = vector.load %arg5[%c0_4, %c0_5, %c0_6] : memref<10x10x4xbf16, #tpu.memory_space<vmem>>, vector<1x10x4xbf16>
    tpu.vector_store %arg5[%c0_4, %c0_5, %c0_6], %11 {strides = array<i32>} : memref<10x10x4xbf16, #tpu.memory_space<vmem>>, vector<1x10x4xbf16>,
    %c9 = arith.constant 9 : index
    %c0_7 = arith.constant 0 : index
    %c0_8 = arith.constant 0 : index
    %13 = vector.load %arg5[%c9, %c0_7, %c0_8] : memref<10x10x4xbf16, #tpu.memory_space<vmem>>, vector<1x10x4xbf16>
    tpu.vector_store %arg5[%c9, %c0_7, %c0_8], %11 {strides = array<i32>} : memref<10x10x4xbf16, #tpu.memory_space<vmem>>, vector<1x10x4xbf16>,
    %cst_9 = arith.constant 0.000000e+00 : f32
    %14 = vector.broadcast %cst_9 : f32 to vector<8x1x4xf32>
    %15 = tpu.concatenate %14, %10, %14 in 1 : vector<8x1x4xf32>, vector<8x8x4xf32>, vector<8x1x4xf32> -> vector<8x10x4xf32>
    %16 = arith.truncf %15 : vector<8x10x4xf32> to vector<8x10x4xbf16>
    %c1 = arith.constant 1 : index
    %c0_10 = arith.constant 0 : index
    %c0_11 = arith.constant 0 : index
    %17 = vector.load %arg5[%c1, %c0_10, %c0_11] : memref<10x10x4xbf16, #tpu.memory_space<vmem>>, vector<8x10x4xbf16>
    tpu.vector_store %arg5[%c1, %c0_10, %c0_11], %16 {strides = array<i32>} : memref<10x10x4xbf16, #tpu.memory_space<vmem>>, vector<8x10x4xbf16>,
    %c0_12 = arith.constant 0 : index
    %c0_13 = arith.constant 0 : index
    %c0_14 = arith.constant 0 : index
    %18 = vector.load %arg5[%c0_12, %c0_13, %c0_14] : memref<10x10x4xbf16, #tpu.memory_space<vmem>>, vector<8x8x4xbf16>
    %c0_15 = arith.constant 0 : index
    %c1_16 = arith.constant 1 : index
    %c0_17 = arith.constant 0 : index
    %19 = vector.load %arg5[%c0_15, %c1_16, %c0_17] : memref<10x10x4xbf16, #tpu.memory_space<vmem>>, vector<8x8x4xbf16>
    %c0_18 = arith.constant 0 : index
    %c2 = arith.constant 2 : index
    %c0_19 = arith.constant 0 : index
    %20 = vector.load %arg5[%c0_18, %c2, %c0_19] : memref<10x10x4xbf16, #tpu.memory_space<vmem>>, vector<8x8x4xbf16>
    %c1_20 = arith.constant 1 : index
    %c0_21 = arith.constant 0 : index
    %c0_22 = arith.constant 0 : index
    %21 = vector.load %arg5[%c1_20, %c0_21, %c0_22] : memref<10x10x4xbf16, #tpu.memory_space<vmem>>, vector<8x8x4xbf16>
    %c1_23 = arith.constant 1 : index
    %c1_24 = arith.constant 1 : index
    %c0_25 = arith.constant 0 : index
    %22 = vector.load %arg5[%c1_23, %c1_24, %c0_25] : memref<10x10x4xbf16, #tpu.memory_space<vmem>>, vector<8x8x4xbf16>
    %c1_26 = arith.constant 1 : index
    %c2_27 = arith.constant 2 : index
    %c0_28 = arith.constant 0 : index
    %23 = vector.load %arg5[%c1_26, %c2_27, %c0_28] : memref<10x10x4xbf16, #tpu.memory_space<vmem>>, vector<8x8x4xbf16>
    %c2_29 = arith.constant 2 : index
    %c0_30 = arith.constant 0 : index
    %c0_31 = arith.constant 0 : index
    %24 = vector.load %arg5[%c2_29, %c0_30, %c0_31] : memref<10x10x4xbf16, #tpu.memory_space<vmem>>, vector<8x8x4xbf16>
    %c2_32 = arith.constant 2 : index
    %c1_33 = arith.constant 1 : index
    %c0_34 = arith.constant 0 : index
    %25 = vector.load %arg5[%c2_32, %c1_33, %c0_34] : memref<10x10x4xbf16, #tpu.memory_space<vmem>>, vector<8x8x4xbf16>
    %c2_35 = arith.constant 2 : index
    %c2_36 = arith.constant 2 : index
    %c0_37 = arith.constant 0 : index
    %26 = vector.load %arg5[%c2_35, %c2_36, %c0_37] : memref<10x10x4xbf16, #tpu.memory_space<vmem>>, vector<8x8x4xbf16>
    %27 = tpu.concatenate %18, %19, %20, %21, %22, %23, %24, %25, %26 in 2 : vector<8x8x4xbf16>, vector<8x8x4xbf16>, vector<8x8x4xbf16>, vector<8x8x4xbf16>, vector<8x8x4xbf16>, vector<8x8x4xbf16>, vector<8x8x4xbf16>, vector<8x8x4xbf16>, vector<8x8x4xbf16> -> vector<8x8x36xbf16>
    %28 = vector.shape_cast %27 : vector<8x8x36xbf16> to vector<64x36xbf16>
    %c0_38 = arith.constant 0 : index
    %c0_39 = arith.constant 0 : index
    %29 = vector.load %arg2[%c0_38, %c0_39] : memref<36x8xbf16, #tpu.memory_space<vmem>>, vector<36x8xbf16>
    %cst_40 = arith.constant dense<0.000000e+00> : vector<64x8xf32>
    %30 = tpu.matmul %28, %29, %cst_40 {dimension_numbers = #tpu.dot_dimension_numbers<[1], [0], [0], [1], [0, 0, 1, 1], [], []>} : vector<64x36xbf16>, vector<36x8xbf16>, vector<64x8xf32> -> vector<64x8xf32>
    %cst_41 = arith.constant dense<0.000000e+00> : vector<8xf32>
    %31 = vector.multi_reduction <add>, %30, %cst_41 [0] : vector<64x8xf32> to vector<8xf32>
    %32 = vector.shape_cast %31 : vector<8xf32> to vector<1x8xf32>
    %cst_42 = arith.constant 6.400000e+01 : f32
    %33 = vector.broadcast %cst_42 : f32 to vector<1x8xf32>
    %34 = arith.divf %32, %33 : vector<1x8xf32>
    %35 = vector.broadcast %34 : vector<1x8xf32> to vector<64x8xf32>
    %36 = arith.subf %30, %35 : vector<64x8xf32>
    %37 = arith.mulf %36, %36 : vector<64x8xf32>
    %cst_43 = arith.constant dense<0.000000e+00> : vector<8xf32>
    %38 = vector.multi_reduction <add>, %37, %cst_43 [0] : vector<64x8xf32> to vector<8xf32>
    %39 = vector.shape_cast %38 : vector<8xf32> to vector<1x8xf32>
    %c0_44 = arith.constant 0 : index
    %c0_45 = arith.constant 0 : index
    %c0_46 = arith.constant 0 : index
    %40 = vector.load %arg4[%c0_44, %c0_45, %c0_46] : memref<1x2x8xf32, #tpu.memory_space<vmem>>, vector<1x1x8xf32>
    %41 = vector.shape_cast %40 : vector<1x1x8xf32> to vector<1x8xf32>
    %42 = vector.shape_cast %32 : vector<1x8xf32> to vector<1x1x8xf32>
    tpu.vector_store %arg4[%c0_44, %c0_45, %c0_46], %42 {strides = array<i32>} : memref<1x2x8xf32, #tpu.memory_space<vmem>>, vector<1x1x8xf32>,
    %c0_47 = arith.constant 0 : index
    %c1_48 = arith.constant 1 : index
    %c0_49 = arith.constant 0 : index
    %43 = vector.load %arg4[%c0_47, %c1_48, %c0_49] : memref<1x2x8xf32, #tpu.memory_space<vmem>>, vector<1x1x8xf32>
    %44 = vector.shape_cast %43 : vector<1x1x8xf32> to vector<1x8xf32>
    %45 = vector.shape_cast %39 : vector<1x8xf32> to vector<1x1x8xf32>
    tpu.vector_store %arg4[%c0_47, %c1_48, %c0_49], %45 {strides = array<i32>} : memref<1x2x8xf32, #tpu.memory_space<vmem>>, vector<1x1x8xf32>,
    %46 = arith.truncf %30 : vector<64x8xf32> to vector<64x8xbf16>
    %c0_50 = arith.constant 0 : index
    %c0_51 = arith.constant 0 : index
    %c0_52 = arith.constant 0 : index
    %47 = vector.load %arg3[%c0_50, %c0_51, %c0_52] : memref<1x64x8xbf16, #tpu.memory_space<vmem>>, vector<1x64x8xbf16>
    %48 = vector.shape_cast %47 : vector<1x64x8xbf16> to vector<64x8xbf16>
    %49 = vector.shape_cast %46 : vector<64x8xbf16> to vector<1x64x8xbf16>
    tpu.vector_store %arg3[%c0_50, %c0_51, %c0_52], %49 {strides = array<i32>} : memref<1x64x8xbf16, #tpu.memory_space<vmem>>, vector<1x64x8xbf16>,
    return
  }
  func.func @transform_0(%arg0: i32) -> (i32, i32, i32, i32) {
    %c0_i32 = arith.constant 0 : i32
    %c0_i32_0 = arith.constant 0 : i32
    %c0_i32_1 = arith.constant 0 : i32
    %c0_i32_2 = arith.constant 0 : i32
    return %arg0, %c0_i32, %c0_i32_0, %c0_i32_1 : i32, i32, i32, i32
  }
  func.func @transform_1(%arg0: i32) -> (i32, i32) {
    %c0_i32 = arith.constant 0 : i32
    %c0_i32_0 = arith.constant 0 : i32
    %c0_i32_1 = arith.constant 0 : i32
    return %c0_i32, %c0_i32_0 : i32, i32
  }
  func.func @transform_2(%arg0: i32) -> (i32, i32, i32) {
    %c0_i32 = arith.constant 0 : i32
    %c0_i32_0 = arith.constant 0 : i32
    %c0_i32_1 = arith.constant 0 : i32
    return %arg0, %c0_i32, %c0_i32_0 : i32, i32, i32
  }
  func.func @transform_3(%arg0: i32) -> (i32, i32, i32) {
    %c0_i32 = arith.constant 0 : i32
    %c0_i32_0 = arith.constant 0 : i32
    %c0_i32_1 = arith.constant 0 : i32
    return %arg0, %c0_i32, %c0_i32_0 : i32, i32, i32
  }
}

module attributes {stable_mosaic.version = 11 : i64} {
  func.func @bn2_relu_kernel(%arg0: i32, %arg1: memref<1x8x64xbf16, #tpu.memory_space<vmem>>, %arg2: memref<1x64xf32, #tpu.memory_space<vmem>>, %arg3: memref<1x64xf32, #tpu.memory_space<vmem>>, %arg4: memref<1x8x64xbf16, #tpu.memory_space<vmem>>) attributes {dimension_semantics = [#tpu.dimension_semantics<parallel>], iteration_bounds = array<i64: 2>, scalar_prefetch = 0 : i64, scratch_operands = 0 : i64, tpu.core_type = #tpu.core_type<tc>, window_params = [{transform_indices = @transform_0, window_bounds = array<i64: 1, 8, 64>}, {pipeline_mode = #tpu.pipeline_mode<synchronous>, transform_indices = @transform_1, window_bounds = array<i64: 1, 64>}, {pipeline_mode = #tpu.pipeline_mode<synchronous>, transform_indices = @transform_2, window_bounds = array<i64: 1, 64>}, {transform_indices = @transform_3, window_bounds = array<i64: 1, 8, 64>}]} {
    %c0 = arith.constant 0 : index
    %c0_0 = arith.constant 0 : index
    %c0_1 = arith.constant 0 : index
    %0 = vector.load %arg1[%c0, %c0_0, %c0_1] : memref<1x8x64xbf16, #tpu.memory_space<vmem>>, vector<1x8x64xbf16>
    %1 = vector.shape_cast %0 : vector<1x8x64xbf16> to vector<8x64xbf16>
    %2 = arith.extf %1 : vector<8x64xbf16> to vector<8x64xf32>
    %c0_2 = arith.constant 0 : index
    %c0_3 = arith.constant 0 : index
    %3 = vector.load %arg2[%c0_2, %c0_3] : memref<1x64xf32, #tpu.memory_space<vmem>>, vector<1x64xf32>
    %4 = vector.broadcast %3 : vector<1x64xf32> to vector<8x64xf32>
    %5 = arith.mulf %2, %4 : vector<8x64xf32>
    %c0_4 = arith.constant 0 : index
    %c0_5 = arith.constant 0 : index
    %6 = vector.load %arg3[%c0_4, %c0_5] : memref<1x64xf32, #tpu.memory_space<vmem>>, vector<1x64xf32>
    %7 = vector.broadcast %6 : vector<1x64xf32> to vector<8x64xf32>
    %8 = arith.addf %5, %7 : vector<8x64xf32>
    %cst = arith.constant 0.000000e+00 : f32
    %9 = vector.broadcast %cst : f32 to vector<8x64xf32>
    %10 = arith.maximumf %8, %9 : vector<8x64xf32>
    %11 = arith.truncf %10 : vector<8x64xf32> to vector<8x64xbf16>
    %c0_6 = arith.constant 0 : index
    %c0_7 = arith.constant 0 : index
    %c0_8 = arith.constant 0 : index
    %12 = vector.load %arg4[%c0_6, %c0_7, %c0_8] : memref<1x8x64xbf16, #tpu.memory_space<vmem>>, vector<1x8x64xbf16>
    %13 = vector.shape_cast %12 : vector<1x8x64xbf16> to vector<8x64xbf16>
    %14 = vector.shape_cast %11 : vector<8x64xbf16> to vector<1x8x64xbf16>
    tpu.vector_store %arg4[%c0_6, %c0_7, %c0_8], %14 {strides = array<i32>} : memref<1x8x64xbf16, #tpu.memory_space<vmem>>, vector<1x8x64xbf16>,
    return
  }
  func.func @transform_0(%arg0: i32) -> (i32, i32, i32) {
    %c0_i32 = arith.constant 0 : i32
    %c0_i32_0 = arith.constant 0 : i32
    %c0_i32_1 = arith.constant 0 : i32
    return %arg0, %c0_i32, %c0_i32_0 : i32, i32, i32
  }
  func.func @transform_1(%arg0: i32) -> (i32, i32) {
    %c0_i32 = arith.constant 0 : i32
    %c0_i32_0 = arith.constant 0 : i32
    %c0_i32_1 = arith.constant 0 : i32
    return %c0_i32, %c0_i32_0 : i32, i32
  }
  func.func @transform_2(%arg0: i32) -> (i32, i32) {
    %c0_i32 = arith.constant 0 : i32
    %c0_i32_0 = arith.constant 0 : i32
    %c0_i32_1 = arith.constant 0 : i32
    return %c0_i32, %c0_i32_0 : i32, i32
  }
  func.func @transform_3(%arg0: i32) -> (i32, i32, i32) {
    %c0_i32 = arith.constant 0 : i32
    %c0_i32_0 = arith.constant 0 : i32
    %c0_i32_1 = arith.constant 0 : i32
    return %arg0, %c0_i32, %c0_i32_0 : i32, i32, i32
  }
}

module attributes {stable_mosaic.version = 11 : i64} {
  func.func @bn1_conv2_kernel(%arg0: i32, %arg1: memref<1x64x8xbf16, #tpu.memory_space<vmem>>, %arg2: memref<1x8xf32, #tpu.memory_space<vmem>>, %arg3: memref<1x8xf32, #tpu.memory_space<vmem>>, %arg4: memref<72x8xbf16, #tpu.memory_space<vmem>>, %arg5: memref<1x64x8xbf16, #tpu.memory_space<vmem>>, %arg6: memref<1x2x8xf32, #tpu.memory_space<vmem>>, %arg7: memref<10x10x8xbf16, #tpu.memory_space<vmem>>) attributes {dimension_semantics = [#tpu.dimension_semantics<parallel>], iteration_bounds = array<i64: 2>, scalar_prefetch = 0 : i64, scratch_operands = 1 : i64, tpu.core_type = #tpu.core_type<tc>, window_params = [{transform_indices = @transform_0, window_bounds = array<i64: 1, 64, 8>}, {pipeline_mode = #tpu.pipeline_mode<synchronous>, transform_indices = @transform_1, window_bounds = array<i64: 1, 8>}, {pipeline_mode = #tpu.pipeline_mode<synchronous>, transform_indices = @transform_2, window_bounds = array<i64: 1, 8>}, {pipeline_mode = #tpu.pipeline_mode<synchronous>, transform_indices = @transform_3, window_bounds = array<i64: 72, 8>}, {transform_indices = @transform_4, window_bounds = array<i64: 1, 64, 8>}, {transform_indices = @transform_5, window_bounds = array<i64: 1, 2, 8>}]} {
    %c0 = arith.constant 0 : index
    %c0_0 = arith.constant 0 : index
    %c0_1 = arith.constant 0 : index
    %0 = vector.load %arg1[%c0, %c0_0, %c0_1] : memref<1x64x8xbf16, #tpu.memory_space<vmem>>, vector<1x64x8xbf16>
    %1 = vector.shape_cast %0 : vector<1x64x8xbf16> to vector<64x8xbf16>
    %2 = arith.extf %1 : vector<64x8xbf16> to vector<64x8xf32>
    %c0_2 = arith.constant 0 : index
    %c0_3 = arith.constant 0 : index
    %3 = vector.load %arg2[%c0_2, %c0_3] : memref<1x8xf32, #tpu.memory_space<vmem>>, vector<1x8xf32>
    %4 = vector.broadcast %3 : vector<1x8xf32> to vector<64x8xf32>
    %5 = arith.mulf %2, %4 : vector<64x8xf32>
    %c0_4 = arith.constant 0 : index
    %c0_5 = arith.constant 0 : index
    %6 = vector.load %arg3[%c0_4, %c0_5] : memref<1x8xf32, #tpu.memory_space<vmem>>, vector<1x8xf32>
    %7 = vector.broadcast %6 : vector<1x8xf32> to vector<64x8xf32>
    %8 = arith.addf %5, %7 : vector<64x8xf32>
    %cst = arith.constant 0.000000e+00 : f32
    %9 = vector.broadcast %cst : f32 to vector<64x8xf32>
    %10 = arith.maximumf %8, %9 : vector<64x8xf32>
    %11 = vector.shape_cast %10 : vector<64x8xf32> to vector<8x8x8xf32>
    %cst_6 = arith.constant 0.000000e+00 : bf16
    %12 = vector.broadcast %cst_6 : bf16 to vector<1x10x8xbf16>
    %c0_7 = arith.constant 0 : index
    %c0_8 = arith.constant 0 : index
    %c0_9 = arith.constant 0 : index
    %13 = vector.load %arg7[%c0_7, %c0_8, %c0_9] : memref<10x10x8xbf16, #tpu.memory_space<vmem>>, vector<1x10x8xbf16>
    tpu.vector_store %arg7[%c0_7, %c0_8, %c0_9], %12 {strides = array<i32>} : memref<10x10x8xbf16, #tpu.memory_space<vmem>>, vector<1x10x8xbf16>,
    %c9 = arith.constant 9 : index
    %c0_10 = arith.constant 0 : index
    %c0_11 = arith.constant 0 : index
    %14 = vector.load %arg7[%c9, %c0_10, %c0_11] : memref<10x10x8xbf16, #tpu.memory_space<vmem>>, vector<1x10x8xbf16>
    tpu.vector_store %arg7[%c9, %c0_10, %c0_11], %12 {strides = array<i32>} : memref<10x10x8xbf16, #tpu.memory_space<vmem>>, vector<1x10x8xbf16>,
    %cst_12 = arith.constant 0.000000e+00 : f32
    %15 = vector.broadcast %cst_12 : f32 to vector<8x1x8xf32>
    %16 = tpu.concatenate %15, %11, %15 in 1 : vector<8x1x8xf32>, vector<8x8x8xf32>, vector<8x1x8xf32> -> vector<8x10x8xf32>
    %17 = arith.truncf %16 : vector<8x10x8xf32> to vector<8x10x8xbf16>
    %c1 = arith.constant 1 : index
    %c0_13 = arith.constant 0 : index
    %c0_14 = arith.constant 0 : index
    %18 = vector.load %arg7[%c1, %c0_13, %c0_14] : memref<10x10x8xbf16, #tpu.memory_space<vmem>>, vector<8x10x8xbf16>
    tpu.vector_store %arg7[%c1, %c0_13, %c0_14], %17 {strides = array<i32>} : memref<10x10x8xbf16, #tpu.memory_space<vmem>>, vector<8x10x8xbf16>,
    %c0_15 = arith.constant 0 : index
    %c0_16 = arith.constant 0 : index
    %c0_17 = arith.constant 0 : index
    %19 = vector.load %arg7[%c0_15, %c0_16, %c0_17] : memref<10x10x8xbf16, #tpu.memory_space<vmem>>, vector<8x8x8xbf16>
    %c0_18 = arith.constant 0 : index
    %c1_19 = arith.constant 1 : index
    %c0_20 = arith.constant 0 : index
    %20 = vector.load %arg7[%c0_18, %c1_19, %c0_20] : memref<10x10x8xbf16, #tpu.memory_space<vmem>>, vector<8x8x8xbf16>
    %c0_21 = arith.constant 0 : index
    %c2 = arith.constant 2 : index
    %c0_22 = arith.constant 0 : index
    %21 = vector.load %arg7[%c0_21, %c2, %c0_22] : memref<10x10x8xbf16, #tpu.memory_space<vmem>>, vector<8x8x8xbf16>
    %c1_23 = arith.constant 1 : index
    %c0_24 = arith.constant 0 : index
    %c0_25 = arith.constant 0 : index
    %22 = vector.load %arg7[%c1_23, %c0_24, %c0_25] : memref<10x10x8xbf16, #tpu.memory_space<vmem>>, vector<8x8x8xbf16>
    %c1_26 = arith.constant 1 : index
    %c1_27 = arith.constant 1 : index
    %c0_28 = arith.constant 0 : index
    %23 = vector.load %arg7[%c1_26, %c1_27, %c0_28] : memref<10x10x8xbf16, #tpu.memory_space<vmem>>, vector<8x8x8xbf16>
    %c1_29 = arith.constant 1 : index
    %c2_30 = arith.constant 2 : index
    %c0_31 = arith.constant 0 : index
    %24 = vector.load %arg7[%c1_29, %c2_30, %c0_31] : memref<10x10x8xbf16, #tpu.memory_space<vmem>>, vector<8x8x8xbf16>
    %c2_32 = arith.constant 2 : index
    %c0_33 = arith.constant 0 : index
    %c0_34 = arith.constant 0 : index
    %25 = vector.load %arg7[%c2_32, %c0_33, %c0_34] : memref<10x10x8xbf16, #tpu.memory_space<vmem>>, vector<8x8x8xbf16>
    %c2_35 = arith.constant 2 : index
    %c1_36 = arith.constant 1 : index
    %c0_37 = arith.constant 0 : index
    %26 = vector.load %arg7[%c2_35, %c1_36, %c0_37] : memref<10x10x8xbf16, #tpu.memory_space<vmem>>, vector<8x8x8xbf16>
    %c2_38 = arith.constant 2 : index
    %c2_39 = arith.constant 2 : index
    %c0_40 = arith.constant 0 : index
    %27 = vector.load %arg7[%c2_38, %c2_39, %c0_40] : memref<10x10x8xbf16, #tpu.memory_space<vmem>>, vector<8x8x8xbf16>
    %28 = tpu.concatenate %19, %20, %21, %22, %23, %24, %25, %26, %27 in 2 : vector<8x8x8xbf16>, vector<8x8x8xbf16>, vector<8x8x8xbf16>, vector<8x8x8xbf16>, vector<8x8x8xbf16>, vector<8x8x8xbf16>, vector<8x8x8xbf16>, vector<8x8x8xbf16>, vector<8x8x8xbf16> -> vector<8x8x72xbf16>
    %29 = vector.shape_cast %28 : vector<8x8x72xbf16> to vector<64x72xbf16>
    %c0_41 = arith.constant 0 : index
    %c0_42 = arith.constant 0 : index
    %30 = vector.load %arg4[%c0_41, %c0_42] : memref<72x8xbf16, #tpu.memory_space<vmem>>, vector<72x8xbf16>
    %cst_43 = arith.constant dense<0.000000e+00> : vector<64x8xf32>
    %31 = tpu.matmul %29, %30, %cst_43 {dimension_numbers = #tpu.dot_dimension_numbers<[1], [0], [0], [1], [0, 0, 1, 1], [], []>} : vector<64x72xbf16>, vector<72x8xbf16>, vector<64x8xf32> -> vector<64x8xf32>
    %cst_44 = arith.constant dense<0.000000e+00> : vector<8xf32>
    %32 = vector.multi_reduction <add>, %31, %cst_44 [0] : vector<64x8xf32> to vector<8xf32>
    %33 = vector.shape_cast %32 : vector<8xf32> to vector<1x8xf32>
    %cst_45 = arith.constant 6.400000e+01 : f32
    %34 = vector.broadcast %cst_45 : f32 to vector<1x8xf32>
    %35 = arith.divf %33, %34 : vector<1x8xf32>
    %36 = vector.broadcast %35 : vector<1x8xf32> to vector<64x8xf32>
    %37 = arith.subf %31, %36 : vector<64x8xf32>
    %38 = arith.mulf %37, %37 : vector<64x8xf32>
    %cst_46 = arith.constant dense<0.000000e+00> : vector<8xf32>
    %39 = vector.multi_reduction <add>, %38, %cst_46 [0] : vector<64x8xf32> to vector<8xf32>
    %40 = vector.shape_cast %39 : vector<8xf32> to vector<1x8xf32>
    %c0_47 = arith.constant 0 : index
    %c0_48 = arith.constant 0 : index
    %c0_49 = arith.constant 0 : index
    %41 = vector.load %arg6[%c0_47, %c0_48, %c0_49] : memref<1x2x8xf32, #tpu.memory_space<vmem>>, vector<1x1x8xf32>
    %42 = vector.shape_cast %41 : vector<1x1x8xf32> to vector<1x8xf32>
    %43 = vector.shape_cast %33 : vector<1x8xf32> to vector<1x1x8xf32>
    tpu.vector_store %arg6[%c0_47, %c0_48, %c0_49], %43 {strides = array<i32>} : memref<1x2x8xf32, #tpu.memory_space<vmem>>, vector<1x1x8xf32>,
    %c0_50 = arith.constant 0 : index
    %c1_51 = arith.constant 1 : index
    %c0_52 = arith.constant 0 : index
    %44 = vector.load %arg6[%c0_50, %c1_51, %c0_52] : memref<1x2x8xf32, #tpu.memory_space<vmem>>, vector<1x1x8xf32>
    %45 = vector.shape_cast %44 : vector<1x1x8xf32> to vector<1x8xf32>
    %46 = vector.shape_cast %40 : vector<1x8xf32> to vector<1x1x8xf32>
    tpu.vector_store %arg6[%c0_50, %c1_51, %c0_52], %46 {strides = array<i32>} : memref<1x2x8xf32, #tpu.memory_space<vmem>>, vector<1x1x8xf32>,
    %47 = arith.truncf %31 : vector<64x8xf32> to vector<64x8xbf16>
    %c0_53 = arith.constant 0 : index
    %c0_54 = arith.constant 0 : index
    %c0_55 = arith.constant 0 : index
    %48 = vector.load %arg5[%c0_53, %c0_54, %c0_55] : memref<1x64x8xbf16, #tpu.memory_space<vmem>>, vector<1x64x8xbf16>
    %49 = vector.shape_cast %48 : vector<1x64x8xbf16> to vector<64x8xbf16>
    %50 = vector.shape_cast %47 : vector<64x8xbf16> to vector<1x64x8xbf16>
    tpu.vector_store %arg5[%c0_53, %c0_54, %c0_55], %50 {strides = array<i32>} : memref<1x64x8xbf16, #tpu.memory_space<vmem>>, vector<1x64x8xbf16>,
    return
  }
  func.func @transform_0(%arg0: i32) -> (i32, i32, i32) {
    %c0_i32 = arith.constant 0 : i32
    %c0_i32_0 = arith.constant 0 : i32
    %c0_i32_1 = arith.constant 0 : i32
    return %arg0, %c0_i32, %c0_i32_0 : i32, i32, i32
  }
  func.func @transform_1(%arg0: i32) -> (i32, i32) {
    %c0_i32 = arith.constant 0 : i32
    %c0_i32_0 = arith.constant 0 : i32
    %c0_i32_1 = arith.constant 0 : i32
    return %c0_i32, %c0_i32_0 : i32, i32
  }
  func.func @transform_2(%arg0: i32) -> (i32, i32) {
    %c0_i32 = arith.constant 0 : i32
    %c0_i32_0 = arith.constant 0 : i32
    %c0_i32_1 = arith.constant 0 : i32
    return %c0_i32, %c0_i32_0 : i32, i32
  }
  func.func @transform_3(%arg0: i32) -> (i32, i32) {
    %c0_i32 = arith.constant 0 : i32
    %c0_i32_0 = arith.constant 0 : i32
    %c0_i32_1 = arith.constant 0 : i32
    return %c0_i32, %c0_i32_0 : i32, i32
  }
  func.func @transform_4(%arg0: i32) -> (i32, i32, i32) {
    %c0_i32 = arith.constant 0 : i32
    %c0_i32_0 = arith.constant 0 : i32
    %c0_i32_1 = arith.constant 0 : i32
    return %arg0, %c0_i32, %c0_i32_0 : i32, i32, i32
  }
  func.func @transform_5(%arg0: i32) -> (i32, i32, i32) {
    %c0_i32 = arith.constant 0 : i32
    %c0_i32_0 = arith.constant 0 : i32
    %c0_i32_1 = arith.constant 0 : i32
    return %arg0, %c0_i32, %c0_i32_0 : i32, i32, i32
  }
}

</mosaic_0001>

<llo_original>
// kernel: downsample.5
$region0: #{downsample.5}
  #allocation0 [shape = 'u32[]', space=smem, size = 0x4, offset = 0x4, fixed_abs, tag = 'smem constant byte address 0x4 - core index']
  #allocation1 [shape = 'u32[72,128]{1,0:T(1,128)}', space=vmem, size = 0x9000, scoped, tag = 'internal scratch']
  %s0 = inlined_call_operand.vmem [shape: bf16[2,8,64], index: 0, kind: input, shape index: {}, may-alias: {0,3}]
  %s1 = inlined_call_operand.vmem [shape: f32[1,64], index: 1, kind: input, shape index: {}]
  %s2 = inlined_call_operand.vmem [shape: f32[1,64], index: 2, kind: input, shape index: {}]
  %s3 = inlined_call_operand.vmem [shape: bf16[2,8,64], index: 3, kind: output, shape index: {}, may-alias: {0,3}]
  %s4 = sld [smem:[#allocation0]]
  $region45: #{downsample.5} parent=0
    _
  %s6 = ssub.s32 1, %s4
  %s7 = scalar_select 0, %s6, %s4
  loop: start=0, step=1, limit=4
  $region2: #{downsample.5} parent=0 // loop_pre_header
    _
  $region3: #{downsample.5} parent=0 // loop_header
    %s9 = sphi 0, %s13
    %p10 = scmp.ge.s32.totalorder %s9, 4
    %s19 = sphi 0, %s21
    %s22 = sphi 0, %s19
    %s23 = sphi 0, %s22
    %s39 = sphi 0, %s23
    %s43 = sphi 0, %s43
    %s45 = sphi 0, %s43
    %s46 = sphi 0, %s45
    %s60 = sphi 0, %s46
    %s64 = sphi 0, %s64
    %s66 = sphi 0, %s64
    %s67 = sphi 0, %s66
    %s81 = sphi 0, %s67
    %s87 = sphi 0, %s89
    %s90 = sphi 0, %s87
    %s91 = sphi 0, %s90
    %s107 = sphi 0, %s91
  $region4: #{downsample.5} parent=0 // loop_header_branch
    %12 = sbr.rel (%p10) target = $region8
  $region5: #{downsample.5} parent=0 // loop_body
    %s14 = ssub.s32 %s9, 1
    %s15 = ssub.s32 %s9, 2
    %s16 = sadd.s32 %s9, 1
    %s17 = ssub.s32 %s9, %s16
    %p18 = scmp.eq.s32.totalorder %s17, 0
    %s20 = sadd.s32 %s19, 1
    %s21 = scalar_select %p18, %s19, %s20
    %p24 = pneg %p18
    %p25 = scmp.eq.s32.totalorder %s9, 1
    %p26 = por %p24, %p25
    %p27 = scmp.ne.s32.totalorder %s19, %s22
    %p28 = scmp.eq.s32.totalorder %s9, 0
    %p29 = por %p27, %p28
    %p30 = scmp.ne.s32.totalorder %s19, %s22
    %p31 = scmp.eq.s32.totalorder %s14, 1
    %p32 = por %p30, %p31
    %p33 = scmp.ne.s32.totalorder %s22, %s23
    %p34 = scmp.eq.s32.totalorder %s14, 0
    %p35 = por %p33, %p34
    %p36 = scmp.ne.s32.totalorder %s22, %s23
    %p37 = scmp.eq.s32.totalorder %s15, 1
    %p38 = por %p36, %p37
    %p40 = scmp.ne.s32.totalorder %s23, %s39
    %p41 = scmp.eq.s32.totalorder %s15, 0
    %p42 = por %p40, %p41
    %s44 = sadd.s32 %s43, 1
    %p47 = scmp.eq.s32.totalorder %s9, 1
    %p48 = scmp.ne.s32.totalorder %s43, %s45
    %p49 = scmp.eq.s32.totalorder %s9, 0
    %p50 = por %p48, %p49
    %p51 = scmp.ne.s32.totalorder %s43, %s45
    %p52 = scmp.eq.s32.totalorder %s14, 1
    %p53 = por %p51, %p52
    %p54 = scmp.ne.s32.totalorder %s45, %s46
    %p55 = scmp.eq.s32.totalorder %s14, 0
    %p56 = por %p54, %p55
    %p57 = scmp.ne.s32.totalorder %s45, %s46
    %p58 = scmp.eq.s32.totalorder %s15, 1
    %p59 = por %p57, %p58
    %p61 = scmp.ne.s32.totalorder %s46, %s60
    %p62 = scmp.eq.s32.totalorder %s15, 0
    %p63 = por %p61, %p62
    %s65 = sadd.s32 %s64, 1
    %p68 = scmp.eq.s32.totalorder %s9, 1
    %p69 = scmp.ne.s32.totalorder %s64, %s66
    %p70 = scmp.eq.s32.totalorder %s9, 0
    %p71 = por %p69, %p70
    %p72 = scmp.ne.s32.totalorder %s64, %s66
    %p73 = scmp.eq.s32.totalorder %s14, 1
    %p74 = por %p72, %p73
    %p75 = scmp.ne.s32.totalorder %s66, %s67
    %p76 = scmp.eq.s32.totalorder %s14, 0
    %p77 = por %p75, %p76
    %p78 = scmp.ne.s32.totalorder %s66, %s67
    %p79 = scmp.eq.s32.totalorder %s15, 1
    %p80 = por %p78, %p79
    %p82 = scmp.ne.s32.totalorder %s67, %s81
    %p83 = scmp.eq.s32.totalorder %s15, 0
    %p84 = por %p82, %p83
    %s85 = ssub.s32 %s9, %s16
    %p86 = scmp.eq.s32.totalorder %s85, 0
    %s88 = sadd.s32 %s87, 1
    %s89 = scalar_select %p86, %s87, %s88
    %p92 = pneg %p86
    %p93 = scmp.eq.s32.totalorder %s9, 1
    %p94 = por %p92, %p93
    %p95 = scmp.ne.s32.totalorder %s87, %s90
    %p96 = scmp.eq.s32.totalorder %s9, 0
    %p97 = por %p95, %p96
    %p98 = scmp.ne.s32.totalorder %s87, %s90
    %p99 = scmp.eq.s32.totalorder %s14, 1
    %p100 = por %p98, %p99
    %p101 = scmp.ne.s32.totalorder %s90, %s91
    %p102 = scmp.eq.s32.totalorder %s14, 0
    %p103 = por %p101, %p102
    %p104 = scmp.ne.s32.totalorder %s90, %s91
    %p105 = scmp.eq.s32.totalorder %s15, 1
    %p106 = por %p104, %p105
    %p108 = scmp.ne.s32.totalorder %s91, %s107
    %p109 = scmp.eq.s32.totalorder %s15, 0
    %p110 = por %p108, %p109
    %p111 = scmp.le.s32.totalorder 1, %s9
    %p112 = scmp.lt.s32.totalorder %s9, 3
    %p113 = pnand %p111, %p112
    %p114 = pneg %p113
    // Predicated region
    $region9: #{downsample.5} parent=5 // pred_check
      _
    $region10: #{downsample.5} parent=5 // pred_check_branch
      %116 = sbr.rel (%p113) target = $region12
    $region11: #{downsample.5} parent=5 // pred_region
      %s117 = ssub.s32 %s9, 1
      // Predicated region
      $region13: #{downsample.5} parent=11 // pred_check
        %p118 = pneg %p56
      $region14: #{downsample.5} parent=11 // pred_check_branch
        %120 = sbr.rel (%p118) target = $region16
      $region15: #{downsample.5} parent=11 // pred_region
        _
      $region16: #{downsample.5} parent=11 // pred_fallthru
        _
      // Predicated region
      $region17: #{downsample.5} parent=11 // pred_check
        %p121 = pneg %p77
      $region18: #{downsample.5} parent=11 // pred_check_branch
        %123 = sbr.rel (%p121) target = $region20
      $region19: #{downsample.5} parent=11 // pred_region
        _
      $region20: #{downsample.5} parent=11 // pred_fallthru
        _
    $region12: #{downsample.5} parent=5 // pred_fallthru
      _
    %p124 = scmp.lt.s32.totalorder %s9, 2
    // Predicated region
    $region21: #{downsample.5} parent=5 // pred_check
      %p125 = pneg %p124
    $region22: #{downsample.5} parent=5 // pred_check_branch
      %127 = sbr.rel (%p125) target = $region24
    $region23: #{downsample.5} parent=5 // pred_region
      // Predicated region
      $region25: #{downsample.5} parent=23 // pred_check
        %p128 = pneg %p29
      $region26: #{downsample.5} parent=23 // pred_check_branch
        %130 = sbr.rel (%p128) target = $region28
      $region27: #{downsample.5} parent=23 // pred_region
        %p131 = scmp.lt.s32.totalorder %s9, 1
        %s132 = scalar_select %p131, %s9, 1
        %s133 = smul.addr %s132, 4
        %s134 = scalar_lea.vmem %s0, %s133
      $region28: #{downsample.5} parent=23 // pred_fallthru
        _
    $region24: #{downsample.5} parent=5 // pred_fallthru
      _
    %p135 = scmp.le.s32.totalorder 1, %s9
    %p136 = scmp.lt.s32.totalorder %s9, 3
    %p137 = pnand %p135, %p136
    %p138 = pneg %p137
    // Predicated region
    $region29: #{downsample.5} parent=5 // pred_check
      _
    $region30: #{downsample.5} parent=5 // pred_check_branch
      %140 = sbr.rel (%p137) target = $region32
    $region31: #{downsample.5} parent=5 // pred_region
      %s141 = ssub.s32 %s9, 1
      %p142 = scmp.lt.s32.totalorder %s14, 1
      %s143 = scalar_select %p142, %s14, 1
      %s144 = smul.addr %s143, 4
      %s145 = scalar_lea.vmem %s0, %s144
      %p146 = pneg %p35
      %p147 = pneg %p32
      %p148 = pneg %p56
      %p149 = pneg %p53
      %p150 = pneg %p77
      %p151 = pneg %p74
      %p152 = pneg %p103
      %p153 = pneg %p100
      %p154 = scmp.lt.s32.totalorder %s14, 1
      %s155 = scalar_select %p154, %s14, 1
      %s156 = smul.addr %s155, 4
      %s157 = scalar_lea.vmem %s3, %s156
      %p158 = scmp.lt.s32.totalorder %s14, 1
      %s159 = scalar_select %p158, %s14, 1
      %s160 = smul.addr %s159, 4
      %s161 = scalar_lea.vmem %s0, %s160
      %p162 = scmp.lt.s32.totalorder %s14, 1
      %s163 = scalar_select %p162, %s14, 1
      %s164 = smul.addr %s163, 4
      %s165 = scalar_lea.vmem %s3, %s164
      %v166 = vld [vmem:[%s161] sm:$0xf]
      %v167 = vunpack.c.l.bf16 %v166
      %v168 = vld [vmem:[%s1] sm:$0x1]
      %v170 = vperm.slane %v168, 0
      %v172 = vmul.f32 %v167, %v170
      %v173 = vld [vmem:[%s2] sm:$0x1]
      %v175 = vperm.slane %v173, 0
      %v177 = vadd.f32 %v172, %v175
      %v178 = vmax.f32 %v177, 0.0
      %v179 = vpack.c.bf16 %v178, %v178
      %vm180 = vcmask 519168
      %181 = vst.msk [vmem:[%s165] sm:$0xf] %vm180, %v179
      %p182 = scmp.lt.s32.totalorder %s14, 1
      %s183 = scalar_select %p182, %s14, 1
      %s184 = smul.addr %s183, 4
      %s185 = scalar_lea.vmem %s3, %s184
      // Predicated region
      $region33: #{downsample.5} parent=31 // pred_check
        %p186 = pneg %p100
      $region34: #{downsample.5} parent=31 // pred_check_branch
        %188 = sbr.rel (%p186) target = $region36
      $region35: #{downsample.5} parent=31 // pred_region
        _
      $region36: #{downsample.5} parent=31 // pred_fallthru
        _
    $region32: #{downsample.5} parent=5 // pred_fallthru
      _
    %p189 = scmp.le.s32.totalorder 2, %s9
    // Predicated region
    $region37: #{downsample.5} parent=5 // pred_check
      %p190 = pneg %p189
    $region38: #{downsample.5} parent=5 // pred_check_branch
      %192 = sbr.rel (%p190) target = $region40
    $region39: #{downsample.5} parent=5 // pred_region
      %s193 = ssub.s32 %s9, 2
      // Predicated region
      $region41: #{downsample.5} parent=39 // pred_check
        %p194 = pneg %p106
      $region42: #{downsample.5} parent=39 // pred_check_branch
        %196 = sbr.rel (%p194) target = $region44
      $region43: #{downsample.5} parent=39 // pred_region
        %p197 = scmp.lt.s32.totalorder %s15, 1
        %s198 = scalar_select %p197, %s15, 1
        %s199 = smul.addr %s198, 4
        %s200 = scalar_lea.vmem %s3, %s199
      $region44: #{downsample.5} parent=39 // pred_fallthru
        _
    $region40: #{downsample.5} parent=5 // pred_fallthru
      _
  $region6: #{downsample.5} parent=0 // loop_footer
    %s13 = sadd.s32 1, %s9
  $region7: #{downsample.5} parent=0 // loop_footer_branch
    %8 = sbr.rel target = $region3
  $region8: #{downsample.5} parent=0 // loop_exit
    _

// kernel: downsample.4
$region0: #{downsample.4}
  #allocation0 [shape = 'u32[]', space=smem, size = 0x4, offset = 0x4, fixed_abs, tag = 'smem constant byte address 0x4 - core index']
  #allocation1 [shape = 'u32[72,128]{1,0:T(1,128)}', space=vmem, size = 0x9000, scoped, tag = 'internal scratch']
  #allocation2 [shape = 'bf16[10,10,8]{2,1,0:T(8,128)(2,1)}', space=vmem, size = 0xa000, scoped, tag = 'scratch operand']
  %s0 = inlined_call_operand.vmem [shape: bf16[2,64,8], index: 0, kind: input, shape index: {}]
  %s1 = inlined_call_operand.vmem [shape: f32[1,8], index: 1, kind: input, shape index: {}]
  %s2 = inlined_call_operand.vmem [shape: f32[1,8], index: 2, kind: input, shape index: {}]
  %s3 = inlined_call_operand.vmem [shape: bf16[72,8], index: 3, kind: input, shape index: {}]
  %s4 = inlined_call_operand.vmem [shape: bf16[2,64,8], index: 4, kind: output, shape index: {0}]
  %s5 = inlined_call_operand.vmem [shape: f32[2,2,8], index: 5, kind: output, shape index: {1}]
  %6 = xla_tuple %s4, %s5
  %s7 = sld [smem:[#allocation0]]
  $region57: #{downsample.4} parent=0
    _
  %s9 = ssub.s32 1, %s7
  %s10 = scalar_select 0, %s9, %s7
  loop: start=0, step=1, limit=4
  $region2: #{downsample.4} parent=0 // loop_pre_header
    _
  $region3: #{downsample.4} parent=0 // loop_header
    %s12 = sphi 0, %s16
    %p13 = scmp.ge.s32.totalorder %s12, 4
    %s22 = sphi 0, %s24
    %s25 = sphi 0, %s22
    %s26 = sphi 0, %s25
    %s42 = sphi 0, %s26
    %s46 = sphi 0, %s46
    %s48 = sphi 0, %s46
    %s49 = sphi 0, %s48
    %s63 = sphi 0, %s49
    %s67 = sphi 0, %s67
    %s69 = sphi 0, %s67
    %s70 = sphi 0, %s69
    %s84 = sphi 0, %s70
    %s88 = sphi 0, %s88
    %s90 = sphi 0, %s88
    %s91 = sphi 0, %s90
    %s105 = sphi 0, %s91
    %s111 = sphi 0, %s113
    %s114 = sphi 0, %s111
    %s115 = sphi 0, %s114
    %s131 = sphi 0, %s115
    %s137 = sphi 0, %s139
    %s140 = sphi 0, %s137
    %s141 = sphi 0, %s140
    %s157 = sphi 0, %s141
  $region4: #{downsample.4} parent=0 // loop_header_branch
    %15 = sbr.rel (%p13) target = $region8
  $region5: #{downsample.4} parent=0 // loop_body
    %s17 = ssub.s32 %s12, 1
    %s18 = ssub.s32 %s12, 2
    %s19 = sadd.s32 %s12, 1
    %s20 = ssub.s32 %s12, %s19
    %p21 = scmp.eq.s32.totalorder %s20, 0
    %s23 = sadd.s32 %s22, 1
    %s24 = scalar_select %p21, %s22, %s23
    %p27 = pneg %p21
    %p28 = scmp.eq.s32.totalorder %s12, 1
    %p29 = por %p27, %p28
    %p30 = scmp.ne.s32.totalorder %s22, %s25
    %p31 = scmp.eq.s32.totalorder %s12, 0
    %p32 = por %p30, %p31
    %p33 = scmp.ne.s32.totalorder %s22, %s25
    %p34 = scmp.eq.s32.totalorder %s17, 1
    %p35 = por %p33, %p34
    %p36 = scmp.ne.s32.totalorder %s25, %s26
    %p37 = scmp.eq.s32.totalorder %s17, 0
    %p38 = por %p36, %p37
    %p39 = scmp.ne.s32.totalorder %s25, %s26
    %p40 = scmp.eq.s32.totalorder %s18, 1
    %p41 = por %p39, %p40
    %p43 = scmp.ne.s32.totalorder %s26, %s42
    %p44 = scmp.eq.s32.totalorder %s18, 0
    %p45 = por %p43, %p44
    %s47 = sadd.s32 %s46, 1
    %p50 = scmp.eq.s32.totalorder %s12, 1
    %p51 = scmp.ne.s32.totalorder %s46, %s48
    %p52 = scmp.eq.s32.totalorder %s12, 0
    %p53 = por %p51, %p52
    %p54 = scmp.ne.s32.totalorder %s46, %s48
    %p55 = scmp.eq.s32.totalorder %s17, 1
    %p56 = por %p54, %p55
    %p57 = scmp.ne.s32.totalorder %s48, %s49
    %p58 = scmp.eq.s32.totalorder %s17, 0
    %p59 = por %p57, %p58
    %p60 = scmp.ne.s32.totalorder %s48, %s49
    %p61 = scmp.eq.s32.totalorder %s18, 1
    %p62 = por %p60, %p61
    %p64 = scmp.ne.s32.totalorder %s49, %s63
    %p65 = scmp.eq.s32.totalorder %s18, 0
    %p66 = por %p64, %p65
    %s68 = sadd.s32 %s67, 1
    %p71 = scmp.eq.s32.totalorder %s12, 1
    %p72 = scmp.ne.s32.totalorder %s67, %s69
    %p73 = scmp.eq.s32.totalorder %s12, 0
    %p74 = por %p72, %p73
    %p75 = scmp.ne.s32.totalorder %s67, %s69
    %p76 = scmp.eq.s32.totalorder %s17, 1
    %p77 = por %p75, %p76
    %p78 = scmp.ne.s32.totalorder %s69, %s70
    %p79 = scmp.eq.s32.totalorder %s17, 0
    %p80 = por %p78, %p79
    %p81 = scmp.ne.s32.totalorder %s69, %s70
    %p82 = scmp.eq.s32.totalorder %s18, 1
    %p83 = por %p81, %p82
    %p85 = scmp.ne.s32.totalorder %s70, %s84
    %p86 = scmp.eq.s32.totalorder %s18, 0
    %p87 = por %p85, %p86
    %s89 = sadd.s32 %s88, 1
    %p92 = scmp.eq.s32.totalorder %s12, 1
    %p93 = scmp.ne.s32.totalorder %s88, %s90
    %p94 = scmp.eq.s32.totalorder %s12, 0
    %p95 = por %p93, %p94
    %p96 = scmp.ne.s32.totalorder %s88, %s90
    %p97 = scmp.eq.s32.totalorder %s17, 1
    %p98 = por %p96, %p97
    %p99 = scmp.ne.s32.totalorder %s90, %s91
    %p100 = scmp.eq.s32.totalorder %s17, 0
    %p101 = por %p99, %p100
    %p102 = scmp.ne.s32.totalorder %s90, %s91
    %p103 = scmp.eq.s32.totalorder %s18, 1
    %p104 = por %p102, %p103
    %p106 = scmp.ne.s32.totalorder %s91, %s105
    %p107 = scmp.eq.s32.totalorder %s18, 0
    %p108 = por %p106, %p107
    %s109 = ssub.s32 %s12, %s19
    %p110 = scmp.eq.s32.totalorder %s109, 0
    %s112 = sadd.s32 %s111, 1
    %s113 = scalar_select %p110, %s111, %s112
    %p116 = pneg %p110
    %p117 = scmp.eq.s32.totalorder %s12, 1
    %p118 = por %p116, %p117
    %p119 = scmp.ne.s32.totalorder %s111, %s114
    %p120 = scmp.eq.s32.totalorder %s12, 0
    %p121 = por %p119, %p120
    %p122 = scmp.ne.s32.totalorder %s111, %s114
    %p123 = scmp.eq.s32.totalorder %s17, 1
    %p124 = por %p122, %p123
    %p125 = scmp.ne.s32.totalorder %s114, %s115
    %p126 = scmp.eq.s32.totalorder %s17, 0
    %p127 = por %p125, %p126
    %p128 = scmp.ne.s32.totalorder %s114, %s115
    %p129 = scmp.eq.s32.totalorder %s18, 1
    %p130 = por %p128, %p129
    %p132 = scmp.ne.s32.totalorder %s115, %s131
    %p133 = scmp.eq.s32.totalorder %s18, 0
    %p134 = por %p132, %p133
    %s135 = ssub.s32 %s12, %s19
    %p136 = scmp.eq.s32.totalorder %s135, 0
    %s138 = sadd.s32 %s137, 1
    %s139 = scalar_select %p136, %s137, %s138
    %p142 = pneg %p136
    %p143 = scmp.eq.s32.totalorder %s12, 1
    %p144 = por %p142, %p143
    %p145 = scmp.ne.s32.totalorder %s137, %s140
    %p146 = scmp.eq.s32.totalorder %s12, 0
    %p147 = por %p145, %p146
    %p148 = scmp.ne.s32.totalorder %s137, %s140
    %p149 = scmp.eq.s32.totalorder %s17, 1
    %p150 = por %p148, %p149
    %p151 = scmp.ne.s32.totalorder %s140, %s141
    %p152 = scmp.eq.s32.totalorder %s17, 0
    %p153 = por %p151, %p152
    %p154 = scmp.ne.s32.totalorder %s140, %s141
    %p155 = scmp.eq.s32.totalorder %s18, 1
    %p156 = por %p154, %p155
    %p158 = scmp.ne.s32.totalorder %s141, %s157
    %p159 = scmp.eq.s32.totalorder %s18, 0
    %p160 = por %p158, %p159
    %p161 = scmp.le.s32.totalorder 1, %s12
    %p162 = scmp.lt.s32.totalorder %s12, 3
    %p163 = pnand %p161, %p162
    %p164 = pneg %p163
    // Predicated region
    $region9: #{downsample.4} parent=5 // pred_check
      _
    $region10: #{downsample.4} parent=5 // pred_check_branch
      %166 = sbr.rel (%p163) target = $region12
    $region11: #{downsample.4} parent=5 // pred_region
      %s167 = ssub.s32 %s12, 1
      // Predicated region
      $region13: #{downsample.4} parent=11 // pred_check
        %p168 = pneg %p59
      $region14: #{downsample.4} parent=11 // pred_check_branch
        %170 = sbr.rel (%p168) target = $region16
      $region15: #{downsample.4} parent=11 // pred_region
        _
      $region16: #{downsample.4} parent=11 // pred_fallthru
        _
      // Predicated region
      $region17: #{downsample.4} parent=11 // pred_check
        %p171 = pneg %p80
      $region18: #{downsample.4} parent=11 // pred_check_branch
        %173 = sbr.rel (%p171) target = $region20
      $region19: #{downsample.4} parent=11 // pred_region
        _
      $region20: #{downsample.4} parent=11 // pred_fallthru
        _
      // Predicated region
      $region21: #{downsample.4} parent=11 // pred_check
        %p174 = pneg %p101
      $region22: #{downsample.4} parent=11 // pred_check_branch
        %176 = sbr.rel (%p174) target = $region24
      $region23: #{downsample.4} parent=11 // pred_region
        _
      $region24: #{downsample.4} parent=11 // pred_fallthru
        _
    $region12: #{downsample.4} parent=5 // pred_fallthru
      _
    %p177 = scmp.lt.s32.totalorder %s12, 2
    // Predicated region
    $region25: #{downsample.4} parent=5 // pred_check
      %p178 = pneg %p177
    $region26: #{downsample.4} parent=5 // pred_check_branch
      %180 = sbr.rel (%p178) target = $region28
    $region27: #{downsample.4} parent=5 // pred_region
      // Predicated region
      $region29: #{downsample.4} parent=27 // pred_check
        %p181 = pneg %p32
      $region30: #{downsample.4} parent=27 // pred_check_branch
        %183 = sbr.rel (%p181) target = $region32
      $region31: #{downsample.4} parent=27 // pred_region
        %p184 = scmp.lt.s32.totalorder %s12, 1
        %s185 = scalar_select %p184, %s12, 1
        %s186 = smul.addr %s185, 8
        %s187 = smul.addr %s186, 4
        %s188 = scalar_lea.vmem %s0, %s187
      $region32: #{downsample.4} parent=27 // pred_fallthru
        _
    $region28: #{downsample.4} parent=5 // pred_fallthru
      _
    %p189 = scmp.le.s32.totalorder 1, %s12
    %p190 = scmp.lt.s32.totalorder %s12, 3
    %p191 = pnand %p189, %p190
    %p192 = pneg %p191
    // Predicated region
    $region33: #{downsample.4} parent=5 // pred_check
      _
    $region34: #{downsample.4} parent=5 // pred_check_branch
      %194 = sbr.rel (%p191) target = $region36
    $region35: #{downsample.4} parent=5 // pred_region
      %s195 = ssub.s32 %s12, 1
      %p196 = scmp.lt.s32.totalorder %s17, 1
      %s197 = scalar_select %p196, %s17, 1
      %s198 = smul.addr %s197, 8
      %s199 = smul.addr %s198, 4
      %s200 = scalar_lea.vmem %s0, %s199
      %p201 = pneg %p38
      %p202 = pneg %p35
      %p203 = pneg %p59
      %p204 = pneg %p56
      %p205 = pneg %p80
      %p206 = pneg %p77
      %p207 = pneg %p101
      %p208 = pneg %p98
      %p209 = pneg %p127
      %p210 = pneg %p124
      %p211 = scmp.lt.s32.totalorder %s17, 1
      %s212 = scalar_select %p211, %s17, 1
      %s213 = smul.addr %s212, 8
      %s214 = smul.addr %s213, 4
      %s215 = scalar_lea.vmem %s4, %s214
      %p216 = pneg %p153
      %p217 = pneg %p150
      %p218 = scmp.lt.s32.totalorder %s17, 1
      %s219 = scalar_select %p218, %s17, 1
      %s220 = smul.addr %s219, 2
      %s221 = scalar_lea.vmem %s5, %s220
      %p222 = scmp.lt.s32.totalorder %s17, 1
      %s223 = scalar_select %p222, %s17, 1
      %s224 = smul.addr %s223, 8
      %s225 = smul.addr %s224, 4
      %s226 = scalar_lea.vmem %s0, %s225
      %p227 = scmp.lt.s32.totalorder %s17, 1
      %s228 = scalar_select %p227, %s17, 1
      %s229 = smul.addr %s228, 8
      %s230 = smul.addr %s229, 4
      %s231 = scalar_lea.vmem %s4, %s230
      %p232 = scmp.lt.s32.totalorder %s17, 1
      %s233 = scalar_select %p232, %s17, 1
      %s234 = smul.addr %s233, 2
      %s235 = scalar_lea.vmem %s5, %s234
      %v237 = vld [vmem:[%s226] sm:$0xf]
      %v238 = vld [vmem:[%s226 + $0x4] sm:$0xf]
      %v239 = vld [vmem:[%s226 + $0x8] sm:$0xf]
      %v240 = vld [vmem:[%s226 + $0xc] sm:$0xf]
      %v241 = vld [vmem:[%s226 + $0x10] sm:$0xf]
      %v242 = vld [vmem:[%s226 + $0x14] sm:$0xf]
      %v243 = vld [vmem:[%s226 + $0x18] sm:$0xf]
      %v244 = vld [vmem:[%s226 + $0x1c] sm:$0xf]
      %v245 = vunpack.c.l.bf16 %v237
      %v246 = vunpack.c.l.bf16 %v238
      %v247 = vunpack.c.l.bf16 %v239
      %v248 = vunpack.c.l.bf16 %v240
      %v249 = vunpack.c.l.bf16 %v241
      %v250 = vunpack.c.l.bf16 %v242
      %v251 = vunpack.c.l.bf16 %v243
      %v252 = vunpack.c.l.bf16 %v244
      %v253 = vld [vmem:[%s1] sm:$0x1]
      %v255 = vperm.slane %v253, 0
      %v257 = vmul.f32 %v245, %v255
      %v258 = vmul.f32 %v246, %v255
      %v259 = vmul.f32 %v247, %v255
      %v260 = vmul.f32 %v248, %v255
      %v261 = vmul.f32 %v249, %v255
      %v262 = vmul.f32 %v250, %v255
      %v263 = vmul.f32 %v251, %v255
      %v264 = vmul.f32 %v252, %v255
      %v265 = vld [vmem:[%s2] sm:$0x1]
      %v267 = vperm.slane %v265, 0
      %v269 = vadd.f32 %v257, %v267
      %v270 = vadd.f32 %v258, %v267
      %v271 = vadd.f32 %v259, %v267
      %v272 = vadd.f32 %v260, %v267
      %v273 = vadd.f32 %v261, %v267
      %v274 = vadd.f32 %v262, %v267
      %v275 = vadd.f32 %v263, %v267
      %v276 = vadd.f32 %v264, %v267
      %v277 = vmax.f32 %v269, 0.0
      %v278 = vmax.f32 %v270, 0.0
      %v279 = vmax.f32 %v271, 0.0
      %v280 = vmax.f32 %v272, 0.0
      %v281 = vmax.f32 %v273, 0.0
      %v282 = vmax.f32 %v274, 0.0
      %v283 = vmax.f32 %v275, 0.0
      %v284 = vmax.f32 %v276, 0.0
      %vm285 = vcmask 60416
      %286 = vst.msk [vmem:[#allocation2] sm:$0xf] %vm285, 0
      %vm287 = vcmask 57344
      %288 = vst.msk [vmem:[#allocation2 + $0x4] sm:$0x1] %vm287, 0
      %s289 = scalar_lea.vmem [#allocation2], 72
      %290 = vst.msk [vmem:[%s289] sm:$0xf] %vm285, 0
      %291 = vst.msk [vmem:[%s289 + $0x4] sm:$0x1] %vm287, 0
      %v300 = vrot.slane %v277, 7
      %v301 = vrot.slane %v278, 7
      %v302 = vrot.slane %v279, 7
      %v303 = vrot.slane %v280, 7
      %v304 = vrot.slane %v281, 7
      %v305 = vrot.slane %v282, 7
      %v306 = vrot.slane %v283, 7
      %v307 = vrot.slane %v284, 7
      %vm316 = vcmask 1040384
      %v317 = vsel %vm316, 0.0, %v300
      %v318 = vsel %vm316, 0.0, %v301
      %v319 = vsel %vm316, 0.0, %v302
      %v320 = vsel %vm316, 0.0, %v303
      %v321 = vsel %vm316, 0.0, %v304
      %v322 = vsel %vm316, 0.0, %v305
      %v323 = vsel %vm316, 0.0, %v306
      %v324 = vsel %vm316, 0.0, %v307
      %v325 = vsel %vm316, %v300, 0.0
      %v326 = vsel %vm316, %v301, 0.0
      %v327 = vsel %vm316, %v302, 0.0
      %v328 = vsel %vm316, %v303, 0.0
      %v329 = vsel %vm316, %v304, 0.0
      %v330 = vsel %vm316, %v305, 0.0
      %v331 = vsel %vm316, %v306, 0.0
      %v332 = vsel %vm316, %v307, 0.0
      %v333 = vpack.c.bf16 %v317, %v317
      %v334 = vpack.c.bf16 %v325, %v325
      %v335 = vpack.c.bf16 %v318, %v318
      %v336 = vpack.c.bf16 %v326, %v326
      %v337 = vpack.c.bf16 %v319, %v319
      %v338 = vpack.c.bf16 %v327, %v327
      %v339 = vpack.c.bf16 %v320, %v320
      %v340 = vpack.c.bf16 %v328, %v328
      %v341 = vpack.c.bf16 %v321, %v321
      %v342 = vpack.c.bf16 %v329, %v329
      %v343 = vpack.c.bf16 %v322, %v322
      %v344 = vpack.c.bf16 %v330, %v330
      %v345 = vpack.c.bf16 %v323, %v323
      %v346 = vpack.c.bf16 %v331, %v331
      %v347 = vpack.c.bf16 %v324, %v324
      %v348 = vpack.c.bf16 %v332, %v332
      %s349 = scalar_lea.vmem [#allocation2], 8
      %350 = vst.msk [vmem:[%s349] sm:$0xf] %vm285, %v333
      %351 = vst.msk [vmem:[%s349 + $0x4] sm:$0x1] %vm287, %v334
      %352 = vst.msk [vmem:[%s349 + $0x8] sm:$0xf] %vm285, %v335
      %353 = vst.msk [vmem:[%s349 + $0xc] sm:$0x1] %vm287, %v336
      %354 = vst.msk [vmem:[%s349 + $0x10] sm:$0xf] %vm285, %v337
      %355 = vst.msk [vmem:[%s349 + $0x14] sm:$0x1] %vm287, %v338
      %356 = vst.msk [vmem:[%s349 + $0x18] sm:$0xf] %vm285, %v339
      %357 = vst.msk [vmem:[%s349 + $0x1c] sm:$0x1] %vm287, %v340
      %358 = vst.msk [vmem:[%s349 + $0x20] sm:$0xf] %vm285, %v341
      %359 = vst.msk [vmem:[%s349 + $0x24] sm:$0x1] %vm287, %v342
      %360 = vst.msk [vmem:[%s349 + $0x28] sm:$0xf] %vm285, %v343
      %361 = vst.msk [vmem:[%s349 + $0x2c] sm:$0x1] %vm287, %v344
      %362 = vst.msk [vmem:[%s349 + $0x30] sm:$0xf] %vm285, %v345
      %363 = vst.msk [vmem:[%s349 + $0x34] sm:$0x1] %vm287, %v346
      %364 = vst.msk [vmem:[%s349 + $0x38] sm:$0xf] %vm285, %v347
      %365 = vst.msk [vmem:[%s349 + $0x3c] sm:$0x1] %vm287, %v348
      %v366 = vld [vmem:[#allocation2] sm:$0xf]
      %v367 = vld [vmem:[#allocation2 + $0x8] sm:$0xf]
      %v368 = vld [vmem:[#allocation2 + $0x10] sm:$0xf]
      %v369 = vld [vmem:[#allocation2 + $0x18] sm:$0xf]
      %v370 = vld [vmem:[#allocation2 + $0x20] sm:$0xf]
      %v371 = vld [vmem:[#allocation2 + $0x28] sm:$0xf]
      %v372 = vld [vmem:[#allocation2 + $0x30] sm:$0xf]
      %v373 = vld [vmem:[#allocation2 + $0x38] sm:$0xf]
      %v374 = vld [vmem:[#allocation2 + $0x4] sm:$0x1]
      %v375 = vld [vmem:[#allocation2 + $0xc] sm:$0x1]
      %v376 = vld [vmem:[#allocation2 + $0x14] sm:$0x1]
      %v377 = vld [vmem:[#allocation2 + $0x1c] sm:$0x1]
      %v378 = vld [vmem:[#allocation2 + $0x24] sm:$0x1]
      %v379 = vld [vmem:[#allocation2 + $0x2c] sm:$0x1]
      %v380 = vld [vmem:[#allocation2 + $0x34] sm:$0x1]
      %v381 = vld [vmem:[#allocation2 + $0x3c] sm:$0x1]
      %v382 = vld [vmem:[#allocation2] sm:$0xe]
      %v383 = vld [vmem:[#allocation2 + $0x8] sm:$0xe]
      %v384 = vld [vmem:[#allocation2 + $0x10] sm:$0xe]
      %v385 = vld [vmem:[#allocation2 + $0x18] sm:$0xe]
      %v386 = vld [vmem:[#allocation2 + $0x20] sm:$0xe]
      %v387 = vld [vmem:[#allocation2 + $0x28] sm:$0xe]
      %v388 = vld [vmem:[#allocation2 + $0x30] sm:$0xe]
      %v389 = vld [vmem:[#allocation2 + $0x38] sm:$0xe]
      %v390 = vld [vmem:[%s349] sm:$0xf]
      %v391 = vld [vmem:[%s349 + $0x8] sm:$0xf]
      %v392 = vld [vmem:[%s349 + $0x10] sm:$0xf]
      %v393 = vld [vmem:[%s349 + $0x18] sm:$0xf]
      %v394 = vld [vmem:[%s349 + $0x20] sm:$0xf]
      %v395 = vld [vmem:[%s349 + $0x28] sm:$0xf]
      %v396 = vld [vmem:[%s349 + $0x30] sm:$0xf]
      %v397 = vld [vmem:[%s349 + $0x38] sm:$0xf]
      %v398 = vld [vmem:[%s349 + $0x4] sm:$0x1]
      %v399 = vld [vmem:[%s349 + $0xc] sm:$0x1]
      %v400 = vld [vmem:[%s349 + $0x14] sm:$0x1]
      %v401 = vld [vmem:[%s349 + $0x1c] sm:$0x1]
      %v402 = vld [vmem:[%s349 + $0x24] sm:$0x1]
      %v403 = vld [vmem:[%s349 + $0x2c] sm:$0x1]
      %v404 = vld [vmem:[%s349 + $0x34] sm:$0x1]
      %v405 = vld [vmem:[%s349 + $0x3c] sm:$0x1]
      %v406 = vld [vmem:[%s349] sm:$0xe]
      %v407 = vld [vmem:[%s349 + $0x8] sm:$0xe]
      %v408 = vld [vmem:[%s349 + $0x10] sm:$0xe]
      %v409 = vld [vmem:[%s349 + $0x18] sm:$0xe]
      %v410 = vld [vmem:[%s349 + $0x20] sm:$0xe]
      %v411 = vld [vmem:[%s349 + $0x28] sm:$0xe]
      %v412 = vld [vmem:[%s349 + $0x30] sm:$0xe]
      %v413 = vld [vmem:[%s349 + $0x38] sm:$0xe]
      %s414 = scalar_lea.vmem [#allocation2], 16
      %v415 = vld [vmem:[%s414] sm:$0xf]
      %v416 = vld [vmem:[%s414 + $0x8] sm:$0xf]
      %v417 = vld [vmem:[%s414 + $0x10] sm:$0xf]
      %v418 = vld [vmem:[%s414 + $0x18] sm:$0xf]
      %v419 = vld [vmem:[%s414 + $0x20] sm:$0xf]
      %v420 = vld [vmem:[%s414 + $0x28] sm:$0xf]
      %v421 = vld [vmem:[%s414 + $0x30] sm:$0xf]
      %v422 = vld [vmem:[%s414 + $0x38] sm:$0xf]
      %v423 = vld [vmem:[%s414 + $0x4] sm:$0x1]
      %v424 = vld [vmem:[%s414 + $0xc] sm:$0x1]
      %v425 = vld [vmem:[%s414 + $0x14] sm:$0x1]
      %v426 = vld [vmem:[%s414 + $0x1c] sm:$0x1]
      %v427 = vld [vmem:[%s414 + $0x24] sm:$0x1]
      %v428 = vld [vmem:[%s414 + $0x2c] sm:$0x1]
      %v429 = vld [vmem:[%s414 + $0x34] sm:$0x1]
      %v430 = vld [vmem:[%s414 + $0x3c] sm:$0x1]
      %v431 = vld [vmem:[%s414] sm:$0xe]
      %v432 = vld [vmem:[%s414 + $0x8] sm:$0xe]
      %v433 = vld [vmem:[%s414 + $0x10] sm:$0xe]
      %v434 = vld [vmem:[%s414 + $0x18] sm:$0xe]
      %v435 = vld [vmem:[%s414 + $0x20] sm:$0xe]
      %v436 = vld [vmem:[%s414 + $0x28] sm:$0xe]
      %v437 = vld [vmem:[%s414 + $0x30] sm:$0xe]
      %v438 = vld [vmem:[%s414 + $0x38] sm:$0xe]
      %v455 = vunpack.c.l.b16 %v366
      %v456 = vunpack.c.l.b16 %v374
      %v457 = vunpack.c.l.b16 %v367
      %v458 = vunpack.c.l.b16 %v375
      %v459 = vunpack.c.l.b16 %v368
      %v460 = vunpack.c.l.b16 %v376
      %v461 = vunpack.c.l.b16 %v369
      %v462 = vunpack.c.l.b16 %v377
      %v463 = vunpack.c.l.b16 %v370
      %v464 = vunpack.c.l.b16 %v378
      %v465 = vunpack.c.l.b16 %v371
      %v466 = vunpack.c.l.b16 %v379
      %v467 = vunpack.c.l.b16 %v372
      %v468 = vunpack.c.l.b16 %v380
      %v469 = vunpack.c.l.b16 %v373
      %v470 = vunpack.c.l.b16 %v381
      %v471 = vpack.c.b16 %v456, %v455
      %v472 = vpack.c.b16 %v458, %v457
      %v473 = vpack.c.b16 %v460, %v459
      %v474 = vpack.c.b16 %v462, %v461
      %v475 = vpack.c.b16 %v464, %v463
      %v476 = vpack.c.b16 %v466, %v465
      %v477 = vpack.c.b16 %v468, %v467
      %v478 = vpack.c.b16 %v470, %v469
      %v480 = vshrl.u32 %v471, 16
      %v482 = vshll.u32 %v471, 16
      %v484 = vrot.slane %v482, 1
      %v485 = vor.u32 %v480, %v484
      %v487 = vshrl.u32 %v472, 16
      %v489 = vshll.u32 %v472, 16
      %v491 = vrot.slane %v489, 1
      %v492 = vor.u32 %v487, %v491
      %v494 = vshrl.u32 %v473, 16
      %v496 = vshll.u32 %v473, 16
      %v498 = vrot.slane %v496, 1
      %v499 = vor.u32 %v494, %v498
      %v501 = vshrl.u32 %v474, 16
      %v503 = vshll.u32 %v474, 16
      %v505 = vrot.slane %v503, 1
      %v506 = vor.u32 %v501, %v505
      %v508 = vshrl.u32 %v475, 16
      %v510 = vshll.u32 %v475, 16
      %v512 = vrot.slane %v510, 1
      %v513 = vor.u32 %v508, %v512
      %v515 = vshrl.u32 %v476, 16
      %v517 = vshll.u32 %v476, 16
      %v519 = vrot.slane %v517, 1
      %v520 = vor.u32 %v515, %v519
      %v522 = vshrl.u32 %v477, 16
      %v524 = vshll.u32 %v477, 16
      %v526 = vrot.slane %v524, 1
      %v527 = vor.u32 %v522, %v526
      %v529 = vshrl.u32 %v478, 16
      %v531 = vshll.u32 %v478, 16
      %v533 = vrot.slane %v531, 1
      %v534 = vor.u32 %v529, %v533
      %535 = vrot.lane.b32.xlu0 %v485, 8
      %v536 = vpop.permute.xlu0 %535
      %537 = vrot.lane.b32.xlu0 %v492, 8
      %v538 = vpop.permute.xlu0 %537
      %539 = vrot.lane.b32.xlu0 %v499, 8
      %v540 = vpop.permute.xlu0 %539
      %541 = vrot.lane.b32.xlu0 %v506, 8
      %v542 = vpop.permute.xlu0 %541
      %543 = vrot.lane.b32.xlu0 %v513, 8
      %v544 = vpop.permute.xlu0 %543
      %545 = vrot.lane.b32.xlu0 %v520, 8
      %v546 = vpop.permute.xlu0 %545
      %547 = vrot.lane.b32.xlu0 %v527, 8
      %v548 = vpop.permute.xlu0 %547
      %549 = vrot.lane.b32.xlu0 %v534, 8
      %v550 = vpop.permute.xlu0 %549
      %v559 = vunpack.c.l.b16 %v382
      %v560 = vunpack.c.l.b16 %v383
      %v561 = vunpack.c.l.b16 %v384
      %v562 = vunpack.c.l.b16 %v385
      %v563 = vunpack.c.l.b16 %v386
      %v564 = vunpack.c.l.b16 %v387
      %v565 = vunpack.c.l.b16 %v388
      %v566 = vunpack.c.l.b16 %v389
      %v567 = vpack.c.b16 %v456, %v559
      %v568 = vpack.c.b16 %v458, %v560
      %v569 = vpack.c.b16 %v460, %v561
      %v570 = vpack.c.b16 %v462, %v562
      %v571 = vpack.c.b16 %v464, %v563
      %v572 = vpack.c.b16 %v466, %v564
      %v573 = vpack.c.b16 %v468, %v565
      %v574 = vpack.c.b16 %v470, %v566
      %v575 = vrot.slane %v567, 1
      %v576 = vrot.slane %v568, 1
      %v577 = vrot.slane %v569, 1
      %v578 = vrot.slane %v570, 1
      %v579 = vrot.slane %v571, 1
      %v580 = vrot.slane %v572, 1
      %v581 = vrot.slane %v573, 1
      %v582 = vrot.slane %v574, 1
      %583 = vrot.lane.b32.xlu0 %v575, 16
      %v584 = vpop.permute.xlu0 %583
      %585 = vrot.lane.b32.xlu0 %v576, 16
      %v586 = vpop.permute.xlu0 %585
      %587 = vrot.lane.b32.xlu0 %v577, 16
      %v588 = vpop.permute.xlu0 %587
      %589 = vrot.lane.b32.xlu0 %v578, 16
      %v590 = vpop.permute.xlu0 %589
      %591 = vrot.lane.b32.xlu0 %v579, 16
      %v592 = vpop.permute.xlu0 %591
      %593 = vrot.lane.b32.xlu0 %v580, 16
      %v594 = vpop.permute.xlu0 %593
      %595 = vrot.lane.b32.xlu0 %v581, 16
      %v596 = vpop.permute.xlu0 %595
      %597 = vrot.lane.b32.xlu0 %v582, 16
      %v598 = vpop.permute.xlu0 %597
      %v607 = vunpack.c.l.b16 %v390
      %v608 = vunpack.c.l.b16 %v391
      %v609 = vunpack.c.l.b16 %v392
      %v610 = vunpack.c.l.b16 %v393
      %v611 = vunpack.c.l.b16 %v394
      %v612 = vunpack.c.l.b16 %v395
      %v613 = vunpack.c.l.b16 %v396
      %v614 = vunpack.c.l.b16 %v397
      %v615 = vpack.c.b16 %v607, %v607
      %v616 = vpack.c.b16 %v608, %v608
      %v617 = vpack.c.b16 %v609, %v609
      %v618 = vpack.c.b16 %v610, %v610
      %v619 = vpack.c.b16 %v611, %v611
      %v620 = vpack.c.b16 %v612, %v612
      %v621 = vpack.c.b16 %v613, %v613
      %v622 = vpack.c.b16 %v614, %v614
      %623 = vrot.lane.b32.xlu0 %v615, 24
      %v624 = vpop.permute.xlu0 %623
      %625 = vrot.lane.b32.xlu0 %v616, 24
      %v626 = vpop.permute.xlu0 %625
      %627 = vrot.lane.b32.xlu0 %v617, 24
      %v628 = vpop.permute.xlu0 %627
      %629 = vrot.lane.b32.xlu0 %v618, 24
      %v630 = vpop.permute.xlu0 %629
      %631 = vrot.lane.b32.xlu0 %v619, 24
      %v632 = vpop.permute.xlu0 %631
      %633 = vrot.lane.b32.xlu0 %v620, 24
      %v634 = vpop.permute.xlu0 %633
      %635 = vrot.lane.b32.xlu0 %v621, 24
      %v636 = vpop.permute.xlu0 %635
      %637 = vrot.lane.b32.xlu0 %v622, 24
      %v638 = vpop.permute.xlu0 %637
      %v647 = vunpack.c.l.b16 %v398
      %v648 = vunpack.c.l.b16 %v399
      %v649 = vunpack.c.l.b16 %v400
      %v650 = vunpack.c.l.b16 %v401
      %v651 = vunpack.c.l.b16 %v402
      %v652 = vunpack.c.l.b16 %v403
      %v653 = vunpack.c.l.b16 %v404
      %v654 = vunpack.c.l.b16 %v405
      %v655 = vpack.c.b16 %v647, %v607
      %v656 = vpack.c.b16 %v648, %v608
      %v657 = vpack.c.b16 %v649, %v609
      %v658 = vpack.c.b16 %v650, %v610
      %v659 = vpack.c.b16 %v651, %v611
      %v660 = vpack.c.b16 %v652, %v612
      %v661 = vpack.c.b16 %v653, %v613
      %v662 = vpack.c.b16 %v654, %v614
      %v664 = vshrl.u32 %v655, 16
      %v666 = vshll.u32 %v655, 16
      %v668 = vrot.slane %v666, 1
      %v669 = vor.u32 %v664, %v668
      %v671 = vshrl.u32 %v656, 16
      %v673 = vshll.u32 %v656, 16
      %v675 = vrot.slane %v673, 1
      %v676 = vor.u32 %v671, %v675
      %v678 = vshrl.u32 %v657, 16
      %v680 = vshll.u32 %v657, 16
      %v682 = vrot.slane %v680, 1
      %v683 = vor.u32 %v678, %v682
      %v685 = vshrl.u32 %v658, 16
      %v687 = vshll.u32 %v658, 16
      %v689 = vrot.slane %v687, 1
      %v690 = vor.u32 %v685, %v689
      %v692 = vshrl.u32 %v659, 16
      %v694 = vshll.u32 %v659, 16
      %v696 = vrot.slane %v694, 1
      %v697 = vor.u32 %v692, %v696
      %v699 = vshrl.u32 %v660, 16
      %v701 = vshll.u32 %v660, 16
      %v703 = vrot.slane %v701, 1
      %v704 = vor.u32 %v699, %v703
      %v706 = vshrl.u32 %v661, 16
      %v708 = vshll.u32 %v661, 16
      %v710 = vrot.slane %v708, 1
      %v711 = vor.u32 %v706, %v710
      %v713 = vshrl.u32 %v662, 16
      %v715 = vshll.u32 %v662, 16
      %v717 = vrot.slane %v715, 1
      %v718 = vor.u32 %v713, %v717
      %719 = vrot.lane.b32.xlu0 %v669, 32
      %v720 = vpop.permute.xlu0 %719
      %721 = vrot.lane.b32.xlu0 %v676, 32
      %v722 = vpop.permute.xlu0 %721
      %723 = vrot.lane.b32.xlu0 %v683, 32
      %v724 = vpop.permute.xlu0 %723
      %725 = vrot.lane.b32.xlu0 %v690, 32
      %v726 = vpop.permute.xlu0 %725
      %727 = vrot.lane.b32.xlu0 %v697, 32
      %v728 = vpop.permute.xlu0 %727
      %729 = vrot.lane.b32.xlu0 %v704, 32
      %v730 = vpop.permute.xlu0 %729
      %731 = vrot.lane.b32.xlu0 %v711, 32
      %v732 = vpop.permute.xlu0 %731
      %733 = vrot.lane.b32.xlu0 %v718, 32
      %v734 = vpop.permute.xlu0 %733
      %v743 = vunpack.c.l.b16 %v406
      %v744 = vunpack.c.l.b16 %v407
      %v745 = vunpack.c.l.b16 %v408
      %v746 = vunpack.c.l.b16 %v409
      %v747 = vunpack.c.l.b16 %v410
      %v748 = vunpack.c.l.b16 %v411
      %v749 = vunpack.c.l.b16 %v412
      %v750 = vunpack.c.l.b16 %v413
      %v751 = vpack.c.b16 %v647, %v743
      %v752 = vpack.c.b16 %v648, %v744
      %v753 = vpack.c.b16 %v649, %v745
      %v754 = vpack.c.b16 %v650, %v746
      %v755 = vpack.c.b16 %v651, %v747
      %v756 = vpack.c.b16 %v652, %v748
      %v757 = vpack.c.b16 %v653, %v749
      %v758 = vpack.c.b16 %v654, %v750
      %v759 = vrot.slane %v751, 1
      %v760 = vrot.slane %v752, 1
      %v761 = vrot.slane %v753, 1
      %v762 = vrot.slane %v754, 1
      %v763 = vrot.slane %v755, 1
      %v764 = vrot.slane %v756, 1
      %v765 = vrot.slane %v757, 1
      %v766 = vrot.slane %v758, 1
      %767 = vrot.lane.b32.xlu0 %v759, 40
      %v768 = vpop.permute.xlu0 %767
      %769 = vrot.lane.b32.xlu0 %v760, 40
      %v770 = vpop.permute.xlu0 %769
      %771 = vrot.lane.b32.xlu0 %v761, 40
      %v772 = vpop.permute.xlu0 %771
      %773 = vrot.lane.b32.xlu0 %v762, 40
      %v774 = vpop.permute.xlu0 %773
      %775 = vrot.lane.b32.xlu0 %v763, 40
      %v776 = vpop.permute.xlu0 %775
      %777 = vrot.lane.b32.xlu0 %v764, 40
      %v778 = vpop.permute.xlu0 %777
      %779 = vrot.lane.b32.xlu0 %v765, 40
      %v780 = vpop.permute.xlu0 %779
      %781 = vrot.lane.b32.xlu0 %v766, 40
      %v782 = vpop.permute.xlu0 %781
      %v791 = vunpack.c.l.b16 %v415
      %v792 = vunpack.c.l.b16 %v416
      %v793 = vunpack.c.l.b16 %v417
      %v794 = vunpack.c.l.b16 %v418
      %v795 = vunpack.c.l.b16 %v419
      %v796 = vunpack.c.l.b16 %v420
      %v797 = vunpack.c.l.b16 %v421
      %v798 = vunpack.c.l.b16 %v422
      %v799 = vpack.c.b16 %v791, %v791
      %v800 = vpack.c.b16 %v792, %v792
      %v801 = vpack.c.b16 %v793, %v793
      %v802 = vpack.c.b16 %v794, %v794
      %v803 = vpack.c.b16 %v795, %v795
      %v804 = vpack.c.b16 %v796, %v796
      %v805 = vpack.c.b16 %v797, %v797
      %v806 = vpack.c.b16 %v798, %v798
      %807 = vrot.lane.b32.xlu0 %v799, 48
      %v808 = vpop.permute.xlu0 %807
      %809 = vrot.lane.b32.xlu0 %v800, 48
      %v810 = vpop.permute.xlu0 %809
      %811 = vrot.lane.b32.xlu0 %v801, 48
      %v812 = vpop.permute.xlu0 %811
      %813 = vrot.lane.b32.xlu0 %v802, 48
      %v814 = vpop.permute.xlu0 %813
      %815 = vrot.lane.b32.xlu0 %v803, 48
      %v816 = vpop.permute.xlu0 %815
      %817 = vrot.lane.b32.xlu0 %v804, 48
      %v818 = vpop.permute.xlu0 %817
      %819 = vrot.lane.b32.xlu0 %v805, 48
      %v820 = vpop.permute.xlu0 %819
      %821 = vrot.lane.b32.xlu0 %v806, 48
      %v822 = vpop.permute.xlu0 %821
      %v831 = vunpack.c.l.b16 %v423
      %v832 = vunpack.c.l.b16 %v424
      %v833 = vunpack.c.l.b16 %v425
      %v834 = vunpack.c.l.b16 %v426
      %v835 = vunpack.c.l.b16 %v427
      %v836 = vunpack.c.l.b16 %v428
      %v837 = vunpack.c.l.b16 %v429
      %v838 = vunpack.c.l.b16 %v430
      %v839 = vpack.c.b16 %v831, %v791
      %v840 = vpack.c.b16 %v832, %v792
      %v841 = vpack.c.b16 %v833, %v793
      %v842 = vpack.c.b16 %v834, %v794
      %v843 = vpack.c.b16 %v835, %v795
      %v844 = vpack.c.b16 %v836, %v796
      %v845 = vpack.c.b16 %v837, %v797
      %v846 = vpack.c.b16 %v838, %v798
      %v848 = vshrl.u32 %v839, 16
      %v850 = vshll.u32 %v839, 16
      %v852 = vrot.slane %v850, 1
      %v853 = vor.u32 %v848, %v852
      %v855 = vshrl.u32 %v840, 16
      %v857 = vshll.u32 %v840, 16
      %v859 = vrot.slane %v857, 1
      %v860 = vor.u32 %v855, %v859
      %v862 = vshrl.u32 %v841, 16
      %v864 = vshll.u32 %v841, 16
      %v866 = vrot.slane %v864, 1
      %v867 = vor.u32 %v862, %v866
      %v869 = vshrl.u32 %v842, 16
      %v871 = vshll.u32 %v842, 16
      %v873 = vrot.slane %v871, 1
      %v874 = vor.u32 %v869, %v873
      %v876 = vshrl.u32 %v843, 16
      %v878 = vshll.u32 %v843, 16
      %v880 = vrot.slane %v878, 1
      %v881 = vor.u32 %v876, %v880
      %v883 = vshrl.u32 %v844, 16
      %v885 = vshll.u32 %v844, 16
      %v887 = vrot.slane %v885, 1
      %v888 = vor.u32 %v883, %v887
      %v890 = vshrl.u32 %v845, 16
      %v892 = vshll.u32 %v845, 16
      %v894 = vrot.slane %v892, 1
      %v895 = vor.u32 %v890, %v894
      %v897 = vshrl.u32 %v846, 16
      %v899 = vshll.u32 %v846, 16
      %v901 = vrot.slane %v899, 1
      %v902 = vor.u32 %v897, %v901
      %903 = vrot.lane.b32.xlu0 %v853, 56
      %v904 = vpop.permute.xlu0 %903
      %905 = vrot.lane.b32.xlu0 %v860, 56
      %v906 = vpop.permute.xlu0 %905
      %907 = vrot.lane.b32.xlu0 %v867, 56
      %v908 = vpop.permute.xlu0 %907
      %909 = vrot.lane.b32.xlu0 %v874, 56
      %v910 = vpop.permute.xlu0 %909
      %911 = vrot.lane.b32.xlu0 %v881, 56
      %v912 = vpop.permute.xlu0 %911
      %913 = vrot.lane.b32.xlu0 %v888, 56
      %v914 = vpop.permute.xlu0 %913
      %915 = vrot.lane.b32.xlu0 %v895, 56
      %v916 = vpop.permute.xlu0 %915
      %917 = vrot.lane.b32.xlu0 %v902, 56
      %v918 = vpop.permute.xlu0 %917
      %v927 = vunpack.c.l.b16 %v431
      %v928 = vunpack.c.l.b16 %v432
      %v929 = vunpack.c.l.b16 %v433
      %v930 = vunpack.c.l.b16 %v434
      %v931 = vunpack.c.l.b16 %v435
      %v932 = vunpack.c.l.b16 %v436
      %v933 = vunpack.c.l.b16 %v437
      %v934 = vunpack.c.l.b16 %v438
      %v935 = vpack.c.b16 %v831, %v927
      %v936 = vpack.c.b16 %v832, %v928
      %v937 = vpack.c.b16 %v833, %v929
      %v938 = vpack.c.b16 %v834, %v930
      %v939 = vpack.c.b16 %v835, %v931
      %v940 = vpack.c.b16 %v836, %v932
      %v941 = vpack.c.b16 %v837, %v933
      %v942 = vpack.c.b16 %v838, %v934
      %v943 = vrot.slane %v935, 1
      %v944 = vrot.slane %v936, 1
      %v945 = vrot.slane %v937, 1
      %v946 = vrot.slane %v938, 1
      %v947 = vrot.slane %v939, 1
      %v948 = vrot.slane %v940, 1
      %v949 = vrot.slane %v941, 1
      %v950 = vrot.slane %v942, 1
      %951 = vrot.lane.b32.xlu0 %v943, 64
      %v952 = vpop.permute.xlu0 %951
      %953 = vrot.lane.b32.xlu0 %v944, 64
      %v954 = vpop.permute.xlu0 %953
      %955 = vrot.lane.b32.xlu0 %v945, 64
      %v956 = vpop.permute.xlu0 %955
      %957 = vrot.lane.b32.xlu0 %v946, 64
      %v958 = vpop.permute.xlu0 %957
      %959 = vrot.lane.b32.xlu0 %v947, 64
      %v960 = vpop.permute.xlu0 %959
      %961 = vrot.lane.b32.xlu0 %v948, 64
      %v962 = vpop.permute.xlu0 %961
      %963 = vrot.lane.b32.xlu0 %v949, 64
      %v964 = vpop.permute.xlu0 %963
      %965 = vrot.lane.b32.xlu0 %v950, 64
      %v966 = vpop.permute.xlu0 %965
      %vm967 = vcmask 64512
      %v970 = vsel %vm967, %v366, %v536
      %v973 = vsel %vm967, %v367, %v538
      %v976 = vsel %vm967, %v368, %v540
      %v979 = vsel %vm967, %v369, %v542
      %v982 = vsel %vm967, %v370, %v544
      %v985 = vsel %vm967, %v371, %v546
      %v988 = vsel %vm967, %v372, %v548
      %v991 = vsel %vm967, %v373, %v550
      %vm992 = vcmask 130048
      %v994 = vsel %vm992, %v970, %v584
      %v996 = vsel %vm992, %v973, %v586
      %v998 = vsel %vm992, %v976, %v588
      %v1000 = vsel %vm992, %v979, %v590
      %v1002 = vsel %vm992, %v982, %v592
      %v1004 = vsel %vm992, %v985, %v594
      %v1006 = vsel %vm992, %v988, %v596
      %v1008 = vsel %vm992, %v991, %v598
      %vm1009 = vcmask 195584
      %v1011 = vsel %vm1009, %v994, %v624
      %v1013 = vsel %vm1009, %v996, %v626
      %v1015 = vsel %vm1009, %v998, %v628
      %v1017 = vsel %vm1009, %v1000, %v630
      %v1019 = vsel %vm1009, %v1002, %v632
      %v1021 = vsel %vm1009, %v1004, %v634
      %v1023 = vsel %vm1009, %v1006, %v636
      %v1025 = vsel %vm1009, %v1008, %v638
      %vm1026 = vcmask 261120
      %v1028 = vsel %vm1026, %v1011, %v720
      %v1030 = vsel %vm1026, %v1013, %v722
      %v1032 = vsel %vm1026, %v1015, %v724
      %v1034 = vsel %vm1026, %v1017, %v726
      %v1036 = vsel %vm1026, %v1019, %v728
      %v1038 = vsel %vm1026, %v1021, %v730
      %v1040 = vsel %vm1026, %v1023, %v732
      %v1042 = vsel %vm1026, %v1025, %v734
      %vm1043 = vcmask 326656
      %v1045 = vsel %vm1043, %v1028, %v768
      %v1047 = vsel %vm1043, %v1030, %v770
      %v1049 = vsel %vm1043, %v1032, %v772
      %v1051 = vsel %vm1043, %v1034, %v774
      %v1053 = vsel %vm1043, %v1036, %v776
      %v1055 = vsel %vm1043, %v1038, %v778
      %v1057 = vsel %vm1043, %v1040, %v780
      %v1059 = vsel %vm1043, %v1042, %v782
      %vm1060 = vcmask 392192
      %v1062 = vsel %vm1060, %v1045, %v808
      %v1064 = vsel %vm1060, %v1047, %v810
      %v1066 = vsel %vm1060, %v1049, %v812
      %v1068 = vsel %vm1060, %v1051, %v814
      %v1070 = vsel %vm1060, %v1053, %v816
      %v1072 = vsel %vm1060, %v1055, %v818
      %v1074 = vsel %vm1060, %v1057, %v820
      %v1076 = vsel %vm1060, %v1059, %v822
      %vm1077 = vcmask 457728
      %v1079 = vsel %vm1077, %v1062, %v904
      %v1081 = vsel %vm1077, %v1064, %v906
      %v1083 = vsel %vm1077, %v1066, %v908
      %v1085 = vsel %vm1077, %v1068, %v910
      %v1087 = vsel %vm1077, %v1070, %v912
      %v1089 = vsel %vm1077, %v1072, %v914
      %v1091 = vsel %vm1077, %v1074, %v916
      %v1093 = vsel %vm1077, %v1076, %v918
      %vm1094 = vcmask 523264
      %v1096 = vsel %vm1094, %v1079, %v952
      %v1098 = vsel %vm1094, %v1081, %v954
      %v1100 = vsel %vm1094, %v1083, %v956
      %v1102 = vsel %vm1094, %v1085, %v958
      %v1104 = vsel %vm1094, %v1087, %v960
      %v1106 = vsel %vm1094, %v1089, %v962
      %v1108 = vsel %vm1094, %v1091, %v964
      %v1110 = vsel %vm1094, %v1093, %v966
      %v1111 = vld [vmem:[%s3] sm:$0xf]
      %v1112 = vld [vmem:[%s3 + $0x4] sm:$0xf]
      %v1113 = vld [vmem:[%s3 + $0x8] sm:$0xf]
      %v1114 = vld [vmem:[%s3 + $0xc] sm:$0xf]
      %v1115 = vld [vmem:[%s3 + $0x10] sm:$0xf]
      %v1116 = vld [vmem:[%s3 + $0x14] sm:$0xf]
      %v1117 = vld [vmem:[%s3 + $0x18] sm:$0xf]
      %v1118 = vld [vmem:[%s3 + $0x1c] sm:$0xf]
      %v1119 = vld [vmem:[%s3 + $0x20] sm:$0xf]
      %v1128 = vunpack.c.l.b16 %v1096
      %v1129 = vunpack.c.l.b16 %v1098
      %v1130 = vunpack.c.l.b16 %v1100
      %v1131 = vunpack.c.l.b16 %v1102
      %v1132 = vunpack.c.l.b16 %v1104
      %v1133 = vunpack.c.l.b16 %v1106
      %v1134 = vunpack.c.l.b16 %v1108
      %v1135 = vunpack.c.l.b16 %v1110
      %v1136 = vpack.c.b16 %v1129, %v1128
      %v1137 = vpack.c.b16 %v1131, %v1130
      %v1138 = vpack.c.b16 %v1133, %v1132
      %v1139 = vpack.c.b16 %v1135, %v1134
      %v1149 = vunpack.c.l.b16 %v1111
      %v1150 = vunpack.c.l.b16 %v1112
      %v1151 = vunpack.c.l.b16 %v1113
      %v1152 = vunpack.c.l.b16 %v1114
      %v1153 = vunpack.c.l.b16 %v1115
      %v1154 = vunpack.c.l.b16 %v1116
      %v1155 = vunpack.c.l.b16 %v1117
      %v1156 = vunpack.c.l.b16 %v1118
      %v1157 = vunpack.c.l.b16 %v1119
      %v1158 = vpack.c.b16 %v1150, %v1149
      %v1159 = vpack.c.b16 %v1152, %v1151
      %v1160 = vpack.c.b16 %v1154, %v1153
      %v1161 = vpack.c.b16 %v1156, %v1155
      %v1162 = vpack.c.b16 %v1157, %v1157
      %vm1167 = vcmask 588800
      %v1169 = vsel %vm1167, %v1136, 0
      %v1172 = vsel %vm1167, %v1137, 0
      %v1175 = vsel %vm1167, %v1138, 0
      %v1178 = vsel %vm1167, %v1139, 0
      %vm1180 = vcmask 1043456
      %v1182 = vsel %vm1180, %v1162, 0
      %1184 = vmatpush.bf16.msra.mxu0 0
      %1185 = vmatpush.bf16.msra.mxu0 0
      %1186 = vmatpush.bf16.msra.mxu0 0
      %1187 = vmatpush.bf16.msra.mxu0 %v1182
      %1188 = vmatpush.bf16.msra.mxu0 %v1161
      %1189 = vmatpush.bf16.msra.mxu0 %v1160
      %1190 = vmatpush.bf16.msra.mxu0 %v1159
      %1191 = vmatpush.bf16.msra.mxu0 %v1158
      %1192 = vmatmul.bf16.gmra.mxu0 %v1169
      %v1193 = vpop.f32.mrf.mxu0
      %v1194 = vadd.f32 0.0, %v1193
      %v1195 = vpop.f32.mrf.mxu0
      %v1196 = vadd.f32 0.0, %v1195
      %1197 = vmatmul.bf16.gmra.mxu0 %v1172
      %v1198 = vpop.f32.mrf.mxu0
      %v1199 = vadd.f32 0.0, %v1198
      %v1200 = vpop.f32.mrf.mxu0
      %v1201 = vadd.f32 0.0, %v1200
      %1202 = vmatmul.bf16.gmra.mxu0 %v1175
      %v1203 = vpop.f32.mrf.mxu0
      %v1204 = vadd.f32 0.0, %v1203
      %v1205 = vpop.f32.mrf.mxu0
      %v1206 = vadd.f32 0.0, %v1205
      %1207 = vmatmul.bf16.gmra.mxu0 %v1178
      %v1208 = vpop.f32.mrf.mxu0
      %v1209 = vadd.f32 0.0, %v1208
      %v1210 = vpop.f32.mrf.mxu0
      %v1211 = vadd.f32 0.0, %v1210
      %1212 = vdwg.mxu0
      %v1213 = vsel %vm967, %v1194, 0.0
      %v1214 = vsel %vm967, %v1196, 0.0
      %v1215 = vadd.f32 %v1213, %v1214
      %v1216 = vsel %vm967, %v1199, 0.0
      %v1217 = vadd.f32 %v1215, %v1216
      %v1218 = vsel %vm967, %v1201, 0.0
      %v1219 = vadd.f32 %v1217, %v1218
      %v1220 = vsel %vm967, %v1204, 0.0
      %v1221 = vadd.f32 %v1219, %v1220
      %v1222 = vsel %vm967, %v1206, 0.0
      %v1223 = vadd.f32 %v1221, %v1222
      %v1224 = vsel %vm967, %v1209, 0.0
      %v1225 = vadd.f32 %v1223, %v1224
      %v1226 = vsel %vm967, %v1211, 0.0
      %v1227 = vadd.f32 %v1225, %v1226
      %v1228 = vrot.slane %v1227, 4
      %v1229 = vadd.f32 %v1227, %v1228
      %v1230 = vrot.slane %v1229, 2
      %v1231 = vadd.f32 %v1229, %v1230
      %v1232 = vrot.slane %v1231, 1
      %v1233 = vadd.f32 %v1231, %v1232
      %v1234 = vrcp.pop 64.0
      %v1235 = vmul.f32 64.0, %v1234
      %v1236 = vsub.f32 1.0, %v1235
      %v1237 = vmul.f32 %v1234, %v1236
      %v1238 = vadd.f32 %v1234, %v1237
      %vm1239 = vweird.f32 %v1234
      %v1240 = vsel %vm1239, %v1234, %v1238
      %v1241 = vmul.f32 %v1233, %v1240
      %v1242 = vsub.f32 %v1194, %v1241
      %v1243 = vsub.f32 %v1196, %v1241
      %v1244 = vsub.f32 %v1199, %v1241
      %v1245 = vsub.f32 %v1201, %v1241
      %v1246 = vsub.f32 %v1204, %v1241
      %v1247 = vsub.f32 %v1206, %v1241
      %v1248 = vsub.f32 %v1209, %v1241
      %v1249 = vsub.f32 %v1211, %v1241
      %v1250 = vmul.f32 %v1242, %v1242
      %v1251 = vmul.f32 %v1243, %v1243
      %v1252 = vmul.f32 %v1244, %v1244
      %v1253 = vmul.f32 %v1245, %v1245
      %v1254 = vmul.f32 %v1246, %v1246
      %v1255 = vmul.f32 %v1247, %v1247
      %v1256 = vmul.f32 %v1248, %v1248
      %v1257 = vmul.f32 %v1249, %v1249
      %v1258 = vsel %vm967, %v1250, 0.0
      %v1259 = vsel %vm967, %v1251, 0.0
      %v1260 = vadd.f32 %v1258, %v1259
      %v1261 = vsel %vm967, %v1252, 0.0
      %v1262 = vadd.f32 %v1260, %v1261
      %v1263 = vsel %vm967, %v1253, 0.0
      %v1264 = vadd.f32 %v1262, %v1263
      %v1265 = vsel %vm967, %v1254, 0.0
      %v1266 = vadd.f32 %v1264, %v1265
      %v1267 = vsel %vm967, %v1255, 0.0
      %v1268 = vadd.f32 %v1266, %v1267
      %v1269 = vsel %vm967, %v1256, 0.0
      %v1270 = vadd.f32 %v1268, %v1269
      %v1271 = vsel %vm967, %v1257, 0.0
      %v1272 = vadd.f32 %v1270, %v1271
      %v1273 = vrot.slane %v1272, 4
      %v1274 = vadd.f32 %v1272, %v1273
      %v1275 = vrot.slane %v1274, 2
      %v1276 = vadd.f32 %v1274, %v1275
      %v1277 = vrot.slane %v1276, 1
      %v1278 = vadd.f32 %v1276, %v1277
      %1279 = vst.msk [vmem:[%s235] sm:$0x1] %vm287, %v1233
      %1280 = vst.msk [vmem:[%s235 + $0x1] sm:$0x1] %vm287, %v1278
      %v1281 = vpack.c.bf16 %v1194, %v1194
      %v1282 = vpack.c.bf16 %v1196, %v1196
      %v1283 = vpack.c.bf16 %v1199, %v1199
      %v1284 = vpack.c.bf16 %v1201, %v1201
      %v1285 = vpack.c.bf16 %v1204, %v1204
      %v1286 = vpack.c.bf16 %v1206, %v1206
      %v1287 = vpack.c.bf16 %v1209, %v1209
      %v1288 = vpack.c.bf16 %v1211, %v1211
      %1289 = vst.msk [vmem:[%s231] sm:$0xf] %vm285, %v1281
      %1290 = vst.msk [vmem:[%s231 + $0x4] sm:$0xf] %vm285, %v1282
      %1291 = vst.msk [vmem:[%s231 + $0x8] sm:$0xf] %vm285, %v1283
      %1292 = vst.msk [vmem:[%s231 + $0xc] sm:$0xf] %vm285, %v1284
      %1293 = vst.msk [vmem:[%s231 + $0x10] sm:$0xf] %vm285, %v1285
      %1294 = vst.msk [vmem:[%s231 + $0x14] sm:$0xf] %vm285, %v1286
      %1295 = vst.msk [vmem:[%s231 + $0x18] sm:$0xf] %vm285, %v1287
      %1296 = vst.msk [vmem:[%s231 + $0x1c] sm:$0xf] %vm285, %v1288
      %p1297 = scmp.lt.s32.totalorder %s17, 1
      %s1298 = scalar_select %p1297, %s17, 1
      %s1299 = smul.addr %s1298, 8
      %s1300 = smul.addr %s1299, 4
      %s1301 = scalar_lea.vmem %s4, %s1300
      %p1302 = scmp.lt.s32.totalorder %s17, 1
      %s1303 = scalar_select %p1302, %s17, 1
      %s1304 = smul.addr %s1303, 2
      %s1305 = scalar_lea.vmem %s5, %s1304
      // Predicated region
      $region37: #{downsample.4} parent=35 // pred_check
        %p1306 = pneg %p124
      $region38: #{downsample.4} parent=35 // pred_check_branch
        %1308 = sbr.rel (%p1306) target = $region40
      $region39: #{downsample.4} parent=35 // pred_region
        _
      $region40: #{downsample.4} parent=35 // pred_fallthru
        _
      // Predicated region
      $region41: #{downsample.4} parent=35 // pred_check
        %p1309 = pneg %p150
      $region42: #{downsample.4} parent=35 // pred_check_branch
        %1311 = sbr.rel (%p1309) target = $region44
      $region43: #{downsample.4} parent=35 // pred_region
        _
      $region44: #{downsample.4} parent=35 // pred_fallthru
        _
    $region36: #{downsample.4} parent=5 // pred_fallthru
      _
    %p1312 = scmp.le.s32.totalorder 2, %s12
    // Predicated region
    $region45: #{downsample.4} parent=5 // pred_check
      %p1313 = pneg %p1312
    $region46: #{downsample.4} parent=5 // pred_check_branch
      %1315 = sbr.rel (%p1313) target = $region48
    $region47: #{downsample.4} parent=5 // pred_region
      %s1316 = ssub.s32 %s12, 2
      // Predicated region
      $region49: #{downsample.4} parent=47 // pred_check
        %p1317 = pneg %p130
      $region50: #{downsample.4} parent=47 // pred_check_branch
        %1319 = sbr.rel (%p1317) target = $region52
      $region51: #{downsample.4} parent=47 // pred_region
        %p1320 = scmp.lt.s32.totalorder %s18, 1
        %s1321 = scalar_select %p1320, %s18, 1
        %s1322 = smul.addr %s1321, 8
        %s1323 = smul.addr %s1322, 4
        %s1324 = scalar_lea.vmem %s4, %s1323
      $region52: #{downsample.4} parent=47 // pred_fallthru
        _
      // Predicated region
      $region53: #{downsample.4} parent=47 // pred_check
        %p1325 = pneg %p156
      $region54: #{downsample.4} parent=47 // pred_check_branch
        %1327 = sbr.rel (%p1325) target = $region56
      $region55: #{downsample.4} parent=47 // pred_region
        %p1328 = scmp.lt.s32.totalorder %s18, 1
        %s1329 = scalar_select %p1328, %s18, 1
        %s1330 = smul.addr %s1329, 2
        %s1331 = scalar_lea.vmem %s5, %s1330
      $region56: #{downsample.4} parent=47 // pred_fallthru
        _
    $region48: #{downsample.4} parent=5 // pred_fallthru
      _
  $region6: #{downsample.4} parent=0 // loop_footer
    %s16 = sadd.s32 1, %s12
  $region7: #{downsample.4} parent=0 // loop_footer_branch
    %11 = sbr.rel target = $region3
  $region8: #{downsample.4} parent=0 // loop_exit
    _

// kernel: downsample.3
$region0: #{downsample.3}
  #allocation0 [shape = 'u32[]', space=smem, size = 0x4, offset = 0x4, fixed_abs, tag = 'smem constant byte address 0x4 - core index']
  #allocation1 [shape = 'u32[72,128]{1,0:T(1,128)}', space=vmem, size = 0x9000, scoped, tag = 'internal scratch']
  #allocation2 [shape = 'bf16[10,10,4]{2,1,0:T(8,128)(2,1)}', space=vmem, size = 0xa000, scoped, tag = 'scratch operand']
  %s0 = inlined_call_operand.vmem [shape: bf16[2,16,16,4], index: 0, kind: input, shape index: {}]
  %s1 = inlined_call_operand.vmem [shape: bf16[36,8], index: 1, kind: input, shape index: {}]
  %s2 = inlined_call_operand.vmem [shape: bf16[2,64,8], index: 2, kind: output, shape index: {0}]
  %s3 = inlined_call_operand.vmem [shape: f32[2,2,8], index: 3, kind: output, shape index: {1}]
  %4 = xla_tuple %s2, %s3
  %s5 = sld [smem:[#allocation0]]
  $region49: #{downsample.3} parent=0
    _
  %s7 = ssub.s32 1, %s5
  %s8 = scalar_select 0, %s7, %s5
  loop: start=0, step=1, limit=4
  $region2: #{downsample.3} parent=0 // loop_pre_header
    _
  $region3: #{downsample.3} parent=0 // loop_header
    %s10 = sphi 0, %s14
    %p11 = scmp.ge.s32.totalorder %s10, 4
    %s20 = sphi 0, %s22
    %s23 = sphi 0, %s20
    %s24 = sphi 0, %s23
    %s40 = sphi 0, %s24
    %s44 = sphi 0, %s44
    %s46 = sphi 0, %s44
    %s47 = sphi 0, %s46
    %s61 = sphi 0, %s47
    %s67 = sphi 0, %s69
    %s70 = sphi 0, %s67
    %s71 = sphi 0, %s70
    %s87 = sphi 0, %s71
    %s93 = sphi 0, %s95
    %s96 = sphi 0, %s93
    %s97 = sphi 0, %s96
    %s113 = sphi 0, %s97
  $region4: #{downsample.3} parent=0 // loop_header_branch
    %13 = sbr.rel (%p11) target = $region8
  $region5: #{downsample.3} parent=0 // loop_body
    %s15 = ssub.s32 %s10, 1
    %s16 = ssub.s32 %s10, 2
    %s17 = sadd.s32 %s10, 1
    %s18 = ssub.s32 %s10, %s17
    %p19 = scmp.eq.s32.totalorder %s18, 0
    %s21 = sadd.s32 %s20, 1
    %s22 = scalar_select %p19, %s20, %s21
    %p25 = pneg %p19
    %p26 = scmp.eq.s32.totalorder %s10, 1
    %p27 = por %p25, %p26
    %p28 = scmp.ne.s32.totalorder %s20, %s23
    %p29 = scmp.eq.s32.totalorder %s10, 0
    %p30 = por %p28, %p29
    %p31 = scmp.ne.s32.totalorder %s20, %s23
    %p32 = scmp.eq.s32.totalorder %s15, 1
    %p33 = por %p31, %p32
    %p34 = scmp.ne.s32.totalorder %s23, %s24
    %p35 = scmp.eq.s32.totalorder %s15, 0
    %p36 = por %p34, %p35
    %p37 = scmp.ne.s32.totalorder %s23, %s24
    %p38 = scmp.eq.s32.totalorder %s16, 1
    %p39 = por %p37, %p38
    %p41 = scmp.ne.s32.totalorder %s24, %s40
    %p42 = scmp.eq.s32.totalorder %s16, 0
    %p43 = por %p41, %p42
    %s45 = sadd.s32 %s44, 1
    %p48 = scmp.eq.s32.totalorder %s10, 1
    %p49 = scmp.ne.s32.totalorder %s44, %s46
    %p50 = scmp.eq.s32.totalorder %s10, 0
    %p51 = por %p49, %p50
    %p52 = scmp.ne.s32.totalorder %s44, %s46
    %p53 = scmp.eq.s32.totalorder %s15, 1
    %p54 = por %p52, %p53
    %p55 = scmp.ne.s32.totalorder %s46, %s47
    %p56 = scmp.eq.s32.totalorder %s15, 0
    %p57 = por %p55, %p56
    %p58 = scmp.ne.s32.totalorder %s46, %s47
    %p59 = scmp.eq.s32.totalorder %s16, 1
    %p60 = por %p58, %p59
    %p62 = scmp.ne.s32.totalorder %s47, %s61
    %p63 = scmp.eq.s32.totalorder %s16, 0
    %p64 = por %p62, %p63
    %s65 = ssub.s32 %s10, %s17
    %p66 = scmp.eq.s32.totalorder %s65, 0
    %s68 = sadd.s32 %s67, 1
    %s69 = scalar_select %p66, %s67, %s68
    %p72 = pneg %p66
    %p73 = scmp.eq.s32.totalorder %s10, 1
    %p74 = por %p72, %p73
    %p75 = scmp.ne.s32.totalorder %s67, %s70
    %p76 = scmp.eq.s32.totalorder %s10, 0
    %p77 = por %p75, %p76
    %p78 = scmp.ne.s32.totalorder %s67, %s70
    %p79 = scmp.eq.s32.totalorder %s15, 1
    %p80 = por %p78, %p79
    %p81 = scmp.ne.s32.totalorder %s70, %s71
    %p82 = scmp.eq.s32.totalorder %s15, 0
    %p83 = por %p81, %p82
    %p84 = scmp.ne.s32.totalorder %s70, %s71
    %p85 = scmp.eq.s32.totalorder %s16, 1
    %p86 = por %p84, %p85
    %p88 = scmp.ne.s32.totalorder %s71, %s87
    %p89 = scmp.eq.s32.totalorder %s16, 0
    %p90 = por %p88, %p89
    %s91 = ssub.s32 %s10, %s17
    %p92 = scmp.eq.s32.totalorder %s91, 0
    %s94 = sadd.s32 %s93, 1
    %s95 = scalar_select %p92, %s93, %s94
    %p98 = pneg %p92
    %p99 = scmp.eq.s32.totalorder %s10, 1
    %p100 = por %p98, %p99
    %p101 = scmp.ne.s32.totalorder %s93, %s96
    %p102 = scmp.eq.s32.totalorder %s10, 0
    %p103 = por %p101, %p102
    %p104 = scmp.ne.s32.totalorder %s93, %s96
    %p105 = scmp.eq.s32.totalorder %s15, 1
    %p106 = por %p104, %p105
    %p107 = scmp.ne.s32.totalorder %s96, %s97
    %p108 = scmp.eq.s32.totalorder %s15, 0
    %p109 = por %p107, %p108
    %p110 = scmp.ne.s32.totalorder %s96, %s97
    %p111 = scmp.eq.s32.totalorder %s16, 1
    %p112 = por %p110, %p111
    %p114 = scmp.ne.s32.totalorder %s97, %s113
    %p115 = scmp.eq.s32.totalorder %s16, 0
    %p116 = por %p114, %p115
    %p117 = scmp.le.s32.totalorder 1, %s10
    %p118 = scmp.lt.s32.totalorder %s10, 3
    %p119 = pnand %p117, %p118
    %p120 = pneg %p119
    // Predicated region
    $region9: #{downsample.3} parent=5 // pred_check
      _
    $region10: #{downsample.3} parent=5 // pred_check_branch
      %122 = sbr.rel (%p119) target = $region12
    $region11: #{downsample.3} parent=5 // pred_region
      %s123 = ssub.s32 %s10, 1
      // Predicated region
      $region13: #{downsample.3} parent=11 // pred_check
        %p124 = pneg %p57
      $region14: #{downsample.3} parent=11 // pred_check_branch
        %126 = sbr.rel (%p124) target = $region16
      $region15: #{downsample.3} parent=11 // pred_region
        _
      $region16: #{downsample.3} parent=11 // pred_fallthru
        _
    $region12: #{downsample.3} parent=5 // pred_fallthru
      _
    %p127 = scmp.lt.s32.totalorder %s10, 2
    // Predicated region
    $region17: #{downsample.3} parent=5 // pred_check
      %p128 = pneg %p127
    $region18: #{downsample.3} parent=5 // pred_check_branch
      %130 = sbr.rel (%p128) target = $region20
    $region19: #{downsample.3} parent=5 // pred_region
      // Predicated region
      $region21: #{downsample.3} parent=19 // pred_check
        %p131 = pneg %p30
      $region22: #{downsample.3} parent=19 // pred_check_branch
        %133 = sbr.rel (%p131) target = $region24
      $region23: #{downsample.3} parent=19 // pred_region
        %p134 = scmp.lt.s32.totalorder %s10, 1
        %s135 = scalar_select %p134, %s10, 1
        %s136 = smul.addr %s135, 32
        %s137 = smul.addr %s136, 4
        %s138 = scalar_lea.vmem %s0, %s137
      $region24: #{downsample.3} parent=19 // pred_fallthru
        _
    $region20: #{downsample.3} parent=5 // pred_fallthru
      _
    %p139 = scmp.le.s32.totalorder 1, %s10
    %p140 = scmp.lt.s32.totalorder %s10, 3
    %p141 = pnand %p139, %p140
    %p142 = pneg %p141
    // Predicated region
    $region25: #{downsample.3} parent=5 // pred_check
      _
    $region26: #{downsample.3} parent=5 // pred_check_branch
      %144 = sbr.rel (%p141) target = $region28
    $region27: #{downsample.3} parent=5 // pred_region
      %s145 = ssub.s32 %s10, 1
      %p146 = scmp.lt.s32.totalorder %s15, 1
      %s147 = scalar_select %p146, %s15, 1
      %s148 = smul.addr %s147, 32
      %s149 = smul.addr %s148, 4
      %s150 = scalar_lea.vmem %s0, %s149
      %p151 = pneg %p36
      %p152 = pneg %p33
      %p153 = pneg %p57
      %p154 = pneg %p54
      %p155 = pneg %p83
      %p156 = pneg %p80
      %p157 = scmp.lt.s32.totalorder %s15, 1
      %s158 = scalar_select %p157, %s15, 1
      %s159 = smul.addr %s158, 8
      %s160 = smul.addr %s159, 4
      %s161 = scalar_lea.vmem %s2, %s160
      %p162 = pneg %p109
      %p163 = pneg %p106
      %p164 = scmp.lt.s32.totalorder %s15, 1
      %s165 = scalar_select %p164, %s15, 1
      %s166 = smul.addr %s165, 2
      %s167 = scalar_lea.vmem %s3, %s166
      %p168 = scmp.lt.s32.totalorder %s15, 1
      %s169 = scalar_select %p168, %s15, 1
      %s170 = smul.addr %s169, 32
      %s171 = smul.addr %s170, 4
      %s172 = scalar_lea.vmem %s0, %s171
      %p173 = scmp.lt.s32.totalorder %s15, 1
      %s174 = scalar_select %p173, %s15, 1
      %s175 = smul.addr %s174, 8
      %s176 = smul.addr %s175, 4
      %s177 = scalar_lea.vmem %s2, %s176
      %p178 = scmp.lt.s32.totalorder %s15, 1
      %s179 = scalar_select %p178, %s15, 1
      %s180 = smul.addr %s179, 2
      %s181 = scalar_lea.vmem %s3, %s180
      %v183 = vld [vmem:[%s172] sm:$0xf]
      %v184 = vld [vmem:[%s172 + $0x4] sm:$0xf]
      %v185 = vld [vmem:[%s172 + $0x8] sm:$0xf]
      %v186 = vld [vmem:[%s172 + $0xc] sm:$0xf]
      %v187 = vld [vmem:[%s172 + $0x10] sm:$0xf]
      %v188 = vld [vmem:[%s172 + $0x14] sm:$0xf]
      %v189 = vld [vmem:[%s172 + $0x18] sm:$0xf]
      %v190 = vld [vmem:[%s172 + $0x1c] sm:$0xf]
      %v191 = vld [vmem:[%s172 + $0x20] sm:$0xf]
      %v192 = vld [vmem:[%s172 + $0x24] sm:$0xf]
      %v193 = vld [vmem:[%s172 + $0x28] sm:$0xf]
      %v194 = vld [vmem:[%s172 + $0x2c] sm:$0xf]
      %v195 = vld [vmem:[%s172 + $0x30] sm:$0xf]
      %v196 = vld [vmem:[%s172 + $0x34] sm:$0xf]
      %v197 = vld [vmem:[%s172 + $0x38] sm:$0xf]
      %v198 = vld [vmem:[%s172 + $0x3c] sm:$0xf]
      %v199 = vld [vmem:[%s172 + $0x40] sm:$0xf]
      %v200 = vld [vmem:[%s172 + $0x44] sm:$0xf]
      %v201 = vld [vmem:[%s172 + $0x48] sm:$0xf]
      %v202 = vld [vmem:[%s172 + $0x4c] sm:$0xf]
      %v203 = vld [vmem:[%s172 + $0x50] sm:$0xf]
      %v204 = vld [vmem:[%s172 + $0x54] sm:$0xf]
      %v205 = vld [vmem:[%s172 + $0x58] sm:$0xf]
      %v206 = vld [vmem:[%s172 + $0x5c] sm:$0xf]
      %v207 = vld [vmem:[%s172 + $0x60] sm:$0xf]
      %v208 = vld [vmem:[%s172 + $0x64] sm:$0xf]
      %v209 = vld [vmem:[%s172 + $0x68] sm:$0xf]
      %v210 = vld [vmem:[%s172 + $0x6c] sm:$0xf]
      %v211 = vld [vmem:[%s172 + $0x70] sm:$0xf]
      %v212 = vld [vmem:[%s172 + $0x74] sm:$0xf]
      %v213 = vld [vmem:[%s172 + $0x78] sm:$0xf]
      %v214 = vld [vmem:[%s172 + $0x7c] sm:$0xf]
      %v215 = vunpack.c.l.bf16 %v183
      %v216 = vunpack.c.l.bf16 %v184
      %v217 = vunpack.c.l.bf16 %v185
      %v218 = vunpack.c.l.bf16 %v186
      %v219 = vunpack.c.l.bf16 %v187
      %v220 = vunpack.c.l.bf16 %v188
      %v221 = vunpack.c.l.bf16 %v189
      %v222 = vunpack.c.l.bf16 %v190
      %v223 = vunpack.c.l.bf16 %v191
      %v224 = vunpack.c.l.bf16 %v192
      %v225 = vunpack.c.l.bf16 %v193
      %v226 = vunpack.c.l.bf16 %v194
      %v227 = vunpack.c.l.bf16 %v195
      %v228 = vunpack.c.l.bf16 %v196
      %v229 = vunpack.c.l.bf16 %v197
      %v230 = vunpack.c.l.bf16 %v198
      %v231 = vunpack.c.l.bf16 %v199
      %v232 = vunpack.c.l.bf16 %v200
      %v233 = vunpack.c.l.bf16 %v201
      %v234 = vunpack.c.l.bf16 %v202
      %v235 = vunpack.c.l.bf16 %v203
      %v236 = vunpack.c.l.bf16 %v204
      %v237 = vunpack.c.l.bf16 %v205
      %v238 = vunpack.c.l.bf16 %v206
      %v239 = vunpack.c.l.bf16 %v207
      %v240 = vunpack.c.l.bf16 %v208
      %v241 = vunpack.c.l.bf16 %v209
      %v242 = vunpack.c.l.bf16 %v210
      %v243 = vunpack.c.l.bf16 %v211
      %v244 = vunpack.c.l.bf16 %v212
      %v245 = vunpack.c.l.bf16 %v213
      %v246 = vunpack.c.l.bf16 %v214
      %v247 = vmax.f32 %v215, %v217
      %v248 = vmax.f32 %v216, %v218
      %v249 = vmax.f32 %v219, %v221
      %v250 = vmax.f32 %v220, %v222
      %v251 = vmax.f32 %v223, %v225
      %v252 = vmax.f32 %v224, %v226
      %v253 = vmax.f32 %v227, %v229
      %v254 = vmax.f32 %v228, %v230
      %v255 = vmax.f32 %v231, %v233
      %v256 = vmax.f32 %v232, %v234
      %v257 = vmax.f32 %v235, %v237
      %v258 = vmax.f32 %v236, %v238
      %v259 = vmax.f32 %v239, %v241
      %v260 = vmax.f32 %v240, %v242
      %v261 = vmax.f32 %v243, %v245
      %v262 = vmax.f32 %v244, %v246
      %v279 = vrot.slane %v247, 2
      %v280 = vrot.slane %v247, 4
      %v281 = vrot.slane %v247, 6
      %v282 = vrot.slane %v248, 2
      %v283 = vrot.slane %v248, 4
      %v284 = vrot.slane %v248, 6
      %v285 = vrot.slane %v249, 2
      %v286 = vrot.slane %v249, 4
      %v287 = vrot.slane %v249, 6
      %v288 = vrot.slane %v250, 2
      %v289 = vrot.slane %v250, 4
      %v290 = vrot.slane %v250, 6
      %v291 = vrot.slane %v251, 2
      %v292 = vrot.slane %v251, 4
      %v293 = vrot.slane %v251, 6
      %v294 = vrot.slane %v252, 2
      %v295 = vrot.slane %v252, 4
      %v296 = vrot.slane %v252, 6
      %v297 = vrot.slane %v253, 2
      %v298 = vrot.slane %v253, 4
      %v299 = vrot.slane %v253, 6
      %v300 = vrot.slane %v254, 2
      %v301 = vrot.slane %v254, 4
      %v302 = vrot.slane %v254, 6
      %v303 = vrot.slane %v255, 2
      %v304 = vrot.slane %v255, 4
      %v305 = vrot.slane %v255, 6
      %v306 = vrot.slane %v256, 2
      %v307 = vrot.slane %v256, 4
      %v308 = vrot.slane %v256, 6
      %v309 = vrot.slane %v257, 2
      %v310 = vrot.slane %v257, 4
      %v311 = vrot.slane %v257, 6
      %v312 = vrot.slane %v258, 2
      %v313 = vrot.slane %v258, 4
      %v314 = vrot.slane %v258, 6
      %v315 = vrot.slane %v259, 2
      %v316 = vrot.slane %v259, 4
      %v317 = vrot.slane %v259, 6
      %v318 = vrot.slane %v260, 2
      %v319 = vrot.slane %v260, 4
      %v320 = vrot.slane %v260, 6
      %v321 = vrot.slane %v261, 2
      %v322 = vrot.slane %v261, 4
      %v323 = vrot.slane %v261, 6
      %v324 = vrot.slane %v262, 2
      %v325 = vrot.slane %v262, 4
      %v326 = vrot.slane %v262, 6
      %vm375 = vcmask 25600
      %v376 = vsel %vm375, %v247, -inf
      %v377 = vrot.slane %v376, 4
      %v378 = vmax.f32 %v376, %v377
      %v379 = vrot.slane %v378, 2
      %v380 = vmax.f32 %v378, %v379
      %v381 = vrot.slane %v380, 1
      %v382 = vmax.f32 %v380, %v381
      %v383 = vsel %vm375, %v279, -inf
      %v384 = vrot.slane %v383, 4
      %v385 = vmax.f32 %v383, %v384
      %v386 = vrot.slane %v385, 2
      %v387 = vmax.f32 %v385, %v386
      %v388 = vrot.slane %v387, 1
      %v389 = vmax.f32 %v387, %v388
      %v390 = vsel %vm375, %v280, -inf
      %v391 = vrot.slane %v390, 4
      %v392 = vmax.f32 %v390, %v391
      %v393 = vrot.slane %v392, 2
      %v394 = vmax.f32 %v392, %v393
      %v395 = vrot.slane %v394, 1
      %v396 = vmax.f32 %v394, %v395
      %v397 = vsel %vm375, %v281, -inf
      %v398 = vrot.slane %v397, 4
      %v399 = vmax.f32 %v397, %v398
      %v400 = vrot.slane %v399, 2
      %v401 = vmax.f32 %v399, %v400
      %v402 = vrot.slane %v401, 1
      %v403 = vmax.f32 %v401, %v402
      %v404 = vsel %vm375, %v248, -inf
      %v405 = vrot.slane %v404, 4
      %v406 = vmax.f32 %v404, %v405
      %v407 = vrot.slane %v406, 2
      %v408 = vmax.f32 %v406, %v407
      %v409 = vrot.slane %v408, 1
      %v410 = vmax.f32 %v408, %v409
      %v411 = vsel %vm375, %v282, -inf
      %v412 = vrot.slane %v411, 4
      %v413 = vmax.f32 %v411, %v412
      %v414 = vrot.slane %v413, 2
      %v415 = vmax.f32 %v413, %v414
      %v416 = vrot.slane %v415, 1
      %v417 = vmax.f32 %v415, %v416
      %v418 = vsel %vm375, %v283, -inf
      %v419 = vrot.slane %v418, 4
      %v420 = vmax.f32 %v418, %v419
      %v421 = vrot.slane %v420, 2
      %v422 = vmax.f32 %v420, %v421
      %v423 = vrot.slane %v422, 1
      %v424 = vmax.f32 %v422, %v423
      %v425 = vsel %vm375, %v284, -inf
      %v426 = vrot.slane %v425, 4
      %v427 = vmax.f32 %v425, %v426
      %v428 = vrot.slane %v427, 2
      %v429 = vmax.f32 %v427, %v428
      %v430 = vrot.slane %v429, 1
      %v431 = vmax.f32 %v429, %v430
      %v432 = vsel %vm375, %v249, -inf
      %v433 = vrot.slane %v432, 4
      %v434 = vmax.f32 %v432, %v433
      %v435 = vrot.slane %v434, 2
      %v436 = vmax.f32 %v434, %v435
      %v437 = vrot.slane %v436, 1
      %v438 = vmax.f32 %v436, %v437
      %v439 = vsel %vm375, %v285, -inf
      %v440 = vrot.slane %v439, 4
      %v441 = vmax.f32 %v439, %v440
      %v442 = vrot.slane %v441, 2
      %v443 = vmax.f32 %v441, %v442
      %v444 = vrot.slane %v443, 1
      %v445 = vmax.f32 %v443, %v444
      %v446 = vsel %vm375, %v286, -inf
      %v447 = vrot.slane %v446, 4
      %v448 = vmax.f32 %v446, %v447
      %v449 = vrot.slane %v448, 2
      %v450 = vmax.f32 %v448, %v449
      %v451 = vrot.slane %v450, 1
      %v452 = vmax.f32 %v450, %v451
      %v453 = vsel %vm375, %v287, -inf
      %v454 = vrot.slane %v453, 4
      %v455 = vmax.f32 %v453, %v454
      %v456 = vrot.slane %v455, 2
      %v457 = vmax.f32 %v455, %v456
      %v458 = vrot.slane %v457, 1
      %v459 = vmax.f32 %v457, %v458
      %v460 = vsel %vm375, %v250, -inf
      %v461 = vrot.slane %v460, 4
      %v462 = vmax.f32 %v460, %v461
      %v463 = vrot.slane %v462, 2
      %v464 = vmax.f32 %v462, %v463
      %v465 = vrot.slane %v464, 1
      %v466 = vmax.f32 %v464, %v465
      %v467 = vsel %vm375, %v288, -inf
      %v468 = vrot.slane %v467, 4
      %v469 = vmax.f32 %v467, %v468
      %v470 = vrot.slane %v469, 2
      %v471 = vmax.f32 %v469, %v470
      %v472 = vrot.slane %v471, 1
      %v473 = vmax.f32 %v471, %v472
      %v474 = vsel %vm375, %v289, -inf
      %v475 = vrot.slane %v474, 4
      %v476 = vmax.f32 %v474, %v475
      %v477 = vrot.slane %v476, 2
      %v478 = vmax.f32 %v476, %v477
      %v479 = vrot.slane %v478, 1
      %v480 = vmax.f32 %v478, %v479
      %v481 = vsel %vm375, %v290, -inf
      %v482 = vrot.slane %v481, 4
      %v483 = vmax.f32 %v481, %v482
      %v484 = vrot.slane %v483, 2
      %v485 = vmax.f32 %v483, %v484
      %v486 = vrot.slane %v485, 1
      %v487 = vmax.f32 %v485, %v486
      %v488 = vsel %vm375, %v251, -inf
      %v489 = vrot.slane %v488, 4
      %v490 = vmax.f32 %v488, %v489
      %v491 = vrot.slane %v490, 2
      %v492 = vmax.f32 %v490, %v491
      %v493 = vrot.slane %v492, 1
      %v494 = vmax.f32 %v492, %v493
      %v495 = vsel %vm375, %v291, -inf
      %v496 = vrot.slane %v495, 4
      %v497 = vmax.f32 %v495, %v496
      %v498 = vrot.slane %v497, 2
      %v499 = vmax.f32 %v497, %v498
      %v500 = vrot.slane %v499, 1
      %v501 = vmax.f32 %v499, %v500
      %v502 = vsel %vm375, %v292, -inf
      %v503 = vrot.slane %v502, 4
      %v504 = vmax.f32 %v502, %v503
      %v505 = vrot.slane %v504, 2
      %v506 = vmax.f32 %v504, %v505
      %v507 = vrot.slane %v506, 1
      %v508 = vmax.f32 %v506, %v507
      %v509 = vsel %vm375, %v293, -inf
      %v510 = vrot.slane %v509, 4
      %v511 = vmax.f32 %v509, %v510
      %v512 = vrot.slane %v511, 2
      %v513 = vmax.f32 %v511, %v512
      %v514 = vrot.slane %v513, 1
      %v515 = vmax.f32 %v513, %v514
      %v516 = vsel %vm375, %v252, -inf
      %v517 = vrot.slane %v516, 4
      %v518 = vmax.f32 %v516, %v517
      %v519 = vrot.slane %v518, 2
      %v520 = vmax.f32 %v518, %v519
      %v521 = vrot.slane %v520, 1
      %v522 = vmax.f32 %v520, %v521
      %v523 = vsel %vm375, %v294, -inf
      %v524 = vrot.slane %v523, 4
      %v525 = vmax.f32 %v523, %v524
      %v526 = vrot.slane %v525, 2
      %v527 = vmax.f32 %v525, %v526
      %v528 = vrot.slane %v527, 1
      %v529 = vmax.f32 %v527, %v528
      %v530 = vsel %vm375, %v295, -inf
      %v531 = vrot.slane %v530, 4
      %v532 = vmax.f32 %v530, %v531
      %v533 = vrot.slane %v532, 2
      %v534 = vmax.f32 %v532, %v533
      %v535 = vrot.slane %v534, 1
      %v536 = vmax.f32 %v534, %v535
      %v537 = vsel %vm375, %v296, -inf
      %v538 = vrot.slane %v537, 4
      %v539 = vmax.f32 %v537, %v538
      %v540 = vrot.slane %v539, 2
      %v541 = vmax.f32 %v539, %v540
      %v542 = vrot.slane %v541, 1
      %v543 = vmax.f32 %v541, %v542
      %v544 = vsel %vm375, %v253, -inf
      %v545 = vrot.slane %v544, 4
      %v546 = vmax.f32 %v544, %v545
      %v547 = vrot.slane %v546, 2
      %v548 = vmax.f32 %v546, %v547
      %v549 = vrot.slane %v548, 1
      %v550 = vmax.f32 %v548, %v549
      %v551 = vsel %vm375, %v297, -inf
      %v552 = vrot.slane %v551, 4
      %v553 = vmax.f32 %v551, %v552
      %v554 = vrot.slane %v553, 2
      %v555 = vmax.f32 %v553, %v554
      %v556 = vrot.slane %v555, 1
      %v557 = vmax.f32 %v555, %v556
      %v558 = vsel %vm375, %v298, -inf
      %v559 = vrot.slane %v558, 4
      %v560 = vmax.f32 %v558, %v559
      %v561 = vrot.slane %v560, 2
      %v562 = vmax.f32 %v560, %v561
      %v563 = vrot.slane %v562, 1
      %v564 = vmax.f32 %v562, %v563
      %v565 = vsel %vm375, %v299, -inf
      %v566 = vrot.slane %v565, 4
      %v567 = vmax.f32 %v565, %v566
      %v568 = vrot.slane %v567, 2
      %v569 = vmax.f32 %v567, %v568
      %v570 = vrot.slane %v569, 1
      %v571 = vmax.f32 %v569, %v570
      %v572 = vsel %vm375, %v254, -inf
      %v573 = vrot.slane %v572, 4
      %v574 = vmax.f32 %v572, %v573
      %v575 = vrot.slane %v574, 2
      %v576 = vmax.f32 %v574, %v575
      %v577 = vrot.slane %v576, 1
      %v578 = vmax.f32 %v576, %v577
      %v579 = vsel %vm375, %v300, -inf
      %v580 = vrot.slane %v579, 4
      %v581 = vmax.f32 %v579, %v580
      %v582 = vrot.slane %v581, 2
      %v583 = vmax.f32 %v581, %v582
      %v584 = vrot.slane %v583, 1
      %v585 = vmax.f32 %v583, %v584
      %v586 = vsel %vm375, %v301, -inf
      %v587 = vrot.slane %v586, 4
      %v588 = vmax.f32 %v586, %v587
      %v589 = vrot.slane %v588, 2
      %v590 = vmax.f32 %v588, %v589
      %v591 = vrot.slane %v590, 1
      %v592 = vmax.f32 %v590, %v591
      %v593 = vsel %vm375, %v302, -inf
      %v594 = vrot.slane %v593, 4
      %v595 = vmax.f32 %v593, %v594
      %v596 = vrot.slane %v595, 2
      %v597 = vmax.f32 %v595, %v596
      %v598 = vrot.slane %v597, 1
      %v599 = vmax.f32 %v597, %v598
      %v600 = vsel %vm375, %v255, -inf
      %v601 = vrot.slane %v600, 4
      %v602 = vmax.f32 %v600, %v601
      %v603 = vrot.slane %v602, 2
      %v604 = vmax.f32 %v602, %v603
      %v605 = vrot.slane %v604, 1
      %v606 = vmax.f32 %v604, %v605
      %v607 = vsel %vm375, %v303, -inf
      %v608 = vrot.slane %v607, 4
      %v609 = vmax.f32 %v607, %v608
      %v610 = vrot.slane %v609, 2
      %v611 = vmax.f32 %v609, %v610
      %v612 = vrot.slane %v611, 1
      %v613 = vmax.f32 %v611, %v612
      %v614 = vsel %vm375, %v304, -inf
      %v615 = vrot.slane %v614, 4
      %v616 = vmax.f32 %v614, %v615
      %v617 = vrot.slane %v616, 2
      %v618 = vmax.f32 %v616, %v617
      %v619 = vrot.slane %v618, 1
      %v620 = vmax.f32 %v618, %v619
      %v621 = vsel %vm375, %v305, -inf
      %v622 = vrot.slane %v621, 4
      %v623 = vmax.f32 %v621, %v622
      %v624 = vrot.slane %v623, 2
      %v625 = vmax.f32 %v623, %v624
      %v626 = vrot.slane %v625, 1
      %v627 = vmax.f32 %v625, %v626
      %v628 = vsel %vm375, %v256, -inf
      %v629 = vrot.slane %v628, 4
      %v630 = vmax.f32 %v628, %v629
      %v631 = vrot.slane %v630, 2
      %v632 = vmax.f32 %v630, %v631
      %v633 = vrot.slane %v632, 1
      %v634 = vmax.f32 %v632, %v633
      %v635 = vsel %vm375, %v306, -inf
      %v636 = vrot.slane %v635, 4
      %v637 = vmax.f32 %v635, %v636
      %v638 = vrot.slane %v637, 2
      %v639 = vmax.f32 %v637, %v638
      %v640 = vrot.slane %v639, 1
      %v641 = vmax.f32 %v639, %v640
      %v642 = vsel %vm375, %v307, -inf
      %v643 = vrot.slane %v642, 4
      %v644 = vmax.f32 %v642, %v643
      %v645 = vrot.slane %v644, 2
      %v646 = vmax.f32 %v644, %v645
      %v647 = vrot.slane %v646, 1
      %v648 = vmax.f32 %v646, %v647
      %v649 = vsel %vm375, %v308, -inf
      %v650 = vrot.slane %v649, 4
      %v651 = vmax.f32 %v649, %v650
      %v652 = vrot.slane %v651, 2
      %v653 = vmax.f32 %v651, %v652
      %v654 = vrot.slane %v653, 1
      %v655 = vmax.f32 %v653, %v654
      %v656 = vsel %vm375, %v257, -inf
      %v657 = vrot.slane %v656, 4
      %v658 = vmax.f32 %v656, %v657
      %v659 = vrot.slane %v658, 2
      %v660 = vmax.f32 %v658, %v659
      %v661 = vrot.slane %v660, 1
      %v662 = vmax.f32 %v660, %v661
      %v663 = vsel %vm375, %v309, -inf
      %v664 = vrot.slane %v663, 4
      %v665 = vmax.f32 %v663, %v664
      %v666 = vrot.slane %v665, 2
      %v667 = vmax.f32 %v665, %v666
      %v668 = vrot.slane %v667, 1
      %v669 = vmax.f32 %v667, %v668
      %v670 = vsel %vm375, %v310, -inf
      %v671 = vrot.slane %v670, 4
      %v672 = vmax.f32 %v670, %v671
      %v673 = vrot.slane %v672, 2
      %v674 = vmax.f32 %v672, %v673
      %v675 = vrot.slane %v674, 1
      %v676 = vmax.f32 %v674, %v675
      %v677 = vsel %vm375, %v311, -inf
      %v678 = vrot.slane %v677, 4
      %v679 = vmax.f32 %v677, %v678
      %v680 = vrot.slane %v679, 2
      %v681 = vmax.f32 %v679, %v680
      %v682 = vrot.slane %v681, 1
      %v683 = vmax.f32 %v681, %v682
      %v684 = vsel %vm375, %v258, -inf
      %v685 = vrot.slane %v684, 4
      %v686 = vmax.f32 %v684, %v685
      %v687 = vrot.slane %v686, 2
      %v688 = vmax.f32 %v686, %v687
      %v689 = vrot.slane %v688, 1
      %v690 = vmax.f32 %v688, %v689
      %v691 = vsel %vm375, %v312, -inf
      %v692 = vrot.slane %v691, 4
      %v693 = vmax.f32 %v691, %v692
      %v694 = vrot.slane %v693, 2
      %v695 = vmax.f32 %v693, %v694
      %v696 = vrot.slane %v695, 1
      %v697 = vmax.f32 %v695, %v696
      %v698 = vsel %vm375, %v313, -inf
      %v699 = vrot.slane %v698, 4
      %v700 = vmax.f32 %v698, %v699
      %v701 = vrot.slane %v700, 2
      %v702 = vmax.f32 %v700, %v701
      %v703 = vrot.slane %v702, 1
      %v704 = vmax.f32 %v702, %v703
      %v705 = vsel %vm375, %v314, -inf
      %v706 = vrot.slane %v705, 4
      %v707 = vmax.f32 %v705, %v706
      %v708 = vrot.slane %v707, 2
      %v709 = vmax.f32 %v707, %v708
      %v710 = vrot.slane %v709, 1
      %v711 = vmax.f32 %v709, %v710
      %v712 = vsel %vm375, %v259, -inf
      %v713 = vrot.slane %v712, 4
      %v714 = vmax.f32 %v712, %v713
      %v715 = vrot.slane %v714, 2
      %v716 = vmax.f32 %v714, %v715
      %v717 = vrot.slane %v716, 1
      %v718 = vmax.f32 %v716, %v717
      %v719 = vsel %vm375, %v315, -inf
      %v720 = vrot.slane %v719, 4
      %v721 = vmax.f32 %v719, %v720
      %v722 = vrot.slane %v721, 2
      %v723 = vmax.f32 %v721, %v722
      %v724 = vrot.slane %v723, 1
      %v725 = vmax.f32 %v723, %v724
      %v726 = vsel %vm375, %v316, -inf
      %v727 = vrot.slane %v726, 4
      %v728 = vmax.f32 %v726, %v727
      %v729 = vrot.slane %v728, 2
      %v730 = vmax.f32 %v728, %v729
      %v731 = vrot.slane %v730, 1
      %v732 = vmax.f32 %v730, %v731
      %v733 = vsel %vm375, %v317, -inf
      %v734 = vrot.slane %v733, 4
      %v735 = vmax.f32 %v733, %v734
      %v736 = vrot.slane %v735, 2
      %v737 = vmax.f32 %v735, %v736
      %v738 = vrot.slane %v737, 1
      %v739 = vmax.f32 %v737, %v738
      %v740 = vsel %vm375, %v260, -inf
      %v741 = vrot.slane %v740, 4
      %v742 = vmax.f32 %v740, %v741
      %v743 = vrot.slane %v742, 2
      %v744 = vmax.f32 %v742, %v743
      %v745 = vrot.slane %v744, 1
      %v746 = vmax.f32 %v744, %v745
      %v747 = vsel %vm375, %v318, -inf
      %v748 = vrot.slane %v747, 4
      %v749 = vmax.f32 %v747, %v748
      %v750 = vrot.slane %v749, 2
      %v751 = vmax.f32 %v749, %v750
      %v752 = vrot.slane %v751, 1
      %v753 = vmax.f32 %v751, %v752
      %v754 = vsel %vm375, %v319, -inf
      %v755 = vrot.slane %v754, 4
      %v756 = vmax.f32 %v754, %v755
      %v757 = vrot.slane %v756, 2
      %v758 = vmax.f32 %v756, %v757
      %v759 = vrot.slane %v758, 1
      %v760 = vmax.f32 %v758, %v759
      %v761 = vsel %vm375, %v320, -inf
      %v762 = vrot.slane %v761, 4
      %v763 = vmax.f32 %v761, %v762
      %v764 = vrot.slane %v763, 2
      %v765 = vmax.f32 %v763, %v764
      %v766 = vrot.slane %v765, 1
      %v767 = vmax.f32 %v765, %v766
      %v768 = vsel %vm375, %v261, -inf
      %v769 = vrot.slane %v768, 4
      %v770 = vmax.f32 %v768, %v769
      %v771 = vrot.slane %v770, 2
      %v772 = vmax.f32 %v770, %v771
      %v773 = vrot.slane %v772, 1
      %v774 = vmax.f32 %v772, %v773
      %v775 = vsel %vm375, %v321, -inf
      %v776 = vrot.slane %v775, 4
      %v777 = vmax.f32 %v775, %v776
      %v778 = vrot.slane %v777, 2
      %v779 = vmax.f32 %v777, %v778
      %v780 = vrot.slane %v779, 1
      %v781 = vmax.f32 %v779, %v780
      %v782 = vsel %vm375, %v322, -inf
      %v783 = vrot.slane %v782, 4
      %v784 = vmax.f32 %v782, %v783
      %v785 = vrot.slane %v784, 2
      %v786 = vmax.f32 %v784, %v785
      %v787 = vrot.slane %v786, 1
      %v788 = vmax.f32 %v786, %v787
      %v789 = vsel %vm375, %v323, -inf
      %v790 = vrot.slane %v789, 4
      %v791 = vmax.f32 %v789, %v790
      %v792 = vrot.slane %v791, 2
      %v793 = vmax.f32 %v791, %v792
      %v794 = vrot.slane %v793, 1
      %v795 = vmax.f32 %v793, %v794
      %v796 = vsel %vm375, %v262, -inf
      %v797 = vrot.slane %v796, 4
      %v798 = vmax.f32 %v796, %v797
      %v799 = vrot.slane %v798, 2
      %v800 = vmax.f32 %v798, %v799
      %v801 = vrot.slane %v800, 1
      %v802 = vmax.f32 %v800, %v801
      %v803 = vsel %vm375, %v324, -inf
      %v804 = vrot.slane %v803, 4
      %v805 = vmax.f32 %v803, %v804
      %v806 = vrot.slane %v805, 2
      %v807 = vmax.f32 %v805, %v806
      %v808 = vrot.slane %v807, 1
      %v809 = vmax.f32 %v807, %v808
      %v810 = vsel %vm375, %v325, -inf
      %v811 = vrot.slane %v810, 4
      %v812 = vmax.f32 %v810, %v811
      %v813 = vrot.slane %v812, 2
      %v814 = vmax.f32 %v812, %v813
      %v815 = vrot.slane %v814, 1
      %v816 = vmax.f32 %v814, %v815
      %v817 = vsel %vm375, %v326, -inf
      %v818 = vrot.slane %v817, 4
      %v819 = vmax.f32 %v817, %v818
      %v820 = vrot.slane %v819, 2
      %v821 = vmax.f32 %v819, %v820
      %v822 = vrot.slane %v821, 1
      %v823 = vmax.f32 %v821, %v822
      %vm824 = vcmask 27648
      %825 = vst.msk [vmem:[#allocation2] sm:$0xf] %vm824, 0
      %vm826 = vcmask 24576
      %827 = vst.msk [vmem:[#allocation2 + $0x4] sm:$0x1] %vm826, 0
      %s828 = scalar_lea.vmem [#allocation2], 72
      %829 = vst.msk [vmem:[%s828] sm:$0xf] %vm824, 0
      %830 = vst.msk [vmem:[%s828 + $0x4] sm:$0x1] %vm826, 0
      %vm895 = vcmask 1042434
      %v896 = vsel %vm895, %v389, %v382
      %vm897 = vcmask 1043459
      %v898 = vsel %vm897, %v396, %v896
      %vm899 = vcmask 1044484
      %v900 = vsel %vm899, %v403, %v898
      %vm901 = vcmask 1045509
      %v902 = vsel %vm901, %v410, %v900
      %vm903 = vcmask 1046534
      %v904 = vsel %vm903, %v417, %v902
      %vm905 = vcmask 1047559
      %v906 = vsel %vm905, %v424, %v904
      %v907 = vsel %vm895, %v445, %v438
      %v908 = vsel %vm897, %v452, %v907
      %v909 = vsel %vm899, %v459, %v908
      %v910 = vsel %vm901, %v466, %v909
      %v911 = vsel %vm903, %v473, %v910
      %v912 = vsel %vm905, %v480, %v911
      %v913 = vsel %vm895, %v501, %v494
      %v914 = vsel %vm897, %v508, %v913
      %v915 = vsel %vm899, %v515, %v914
      %v916 = vsel %vm901, %v522, %v915
      %v917 = vsel %vm903, %v529, %v916
      %v918 = vsel %vm905, %v536, %v917
      %v919 = vsel %vm895, %v557, %v550
      %v920 = vsel %vm897, %v564, %v919
      %v921 = vsel %vm899, %v571, %v920
      %v922 = vsel %vm901, %v578, %v921
      %v923 = vsel %vm903, %v585, %v922
      %v924 = vsel %vm905, %v592, %v923
      %v925 = vsel %vm895, %v613, %v606
      %v926 = vsel %vm897, %v620, %v925
      %v927 = vsel %vm899, %v627, %v926
      %v928 = vsel %vm901, %v634, %v927
      %v929 = vsel %vm903, %v641, %v928
      %v930 = vsel %vm905, %v648, %v929
      %v931 = vsel %vm895, %v669, %v662
      %v932 = vsel %vm897, %v676, %v931
      %v933 = vsel %vm899, %v683, %v932
      %v934 = vsel %vm901, %v690, %v933
      %v935 = vsel %vm903, %v697, %v934
      %v936 = vsel %vm905, %v704, %v935
      %v937 = vsel %vm895, %v725, %v718
      %v938 = vsel %vm897, %v732, %v937
      %v939 = vsel %vm899, %v739, %v938
      %v940 = vsel %vm901, %v746, %v939
      %v941 = vsel %vm903, %v753, %v940
      %v942 = vsel %vm905, %v760, %v941
      %v943 = vsel %vm895, %v781, %v774
      %v944 = vsel %vm897, %v788, %v943
      %v945 = vsel %vm899, %v795, %v944
      %v946 = vsel %vm901, %v802, %v945
      %v947 = vsel %vm903, %v809, %v946
      %v948 = vsel %vm905, %v816, %v947
      %vm965 = vcmask 1040384
      %v966 = vsel %vm965, 0.0, %v906
      %v967 = vsel %vm965, 0.0, %v912
      %v968 = vsel %vm965, 0.0, %v918
      %v969 = vsel %vm965, 0.0, %v924
      %v970 = vsel %vm965, 0.0, %v930
      %v971 = vsel %vm965, 0.0, %v936
      %v972 = vsel %vm965, 0.0, %v942
      %v973 = vsel %vm965, 0.0, %v948
      %v974 = vsel %vm965, %v431, 0.0
      %v975 = vsel %vm965, %v487, 0.0
      %v976 = vsel %vm965, %v543, 0.0
      %v977 = vsel %vm965, %v599, 0.0
      %v978 = vsel %vm965, %v655, 0.0
      %v979 = vsel %vm965, %v711, 0.0
      %v980 = vsel %vm965, %v767, 0.0
      %v981 = vsel %vm965, %v823, 0.0
      %v982 = vpack.c.bf16 %v966, %v966
      %v983 = vpack.c.bf16 %v974, %v974
      %v984 = vpack.c.bf16 %v967, %v967
      %v985 = vpack.c.bf16 %v975, %v975
      %v986 = vpack.c.bf16 %v968, %v968
      %v987 = vpack.c.bf16 %v976, %v976
      %v988 = vpack.c.bf16 %v969, %v969
      %v989 = vpack.c.bf16 %v977, %v977
      %v990 = vpack.c.bf16 %v970, %v970
      %v991 = vpack.c.bf16 %v978, %v978
      %v992 = vpack.c.bf16 %v971, %v971
      %v993 = vpack.c.bf16 %v979, %v979
      %v994 = vpack.c.bf16 %v972, %v972
      %v995 = vpack.c.bf16 %v980, %v980
      %v996 = vpack.c.bf16 %v973, %v973
      %v997 = vpack.c.bf16 %v981, %v981
      %s998 = scalar_lea.vmem [#allocation2], 8
      %999 = vst.msk [vmem:[%s998] sm:$0xf] %vm824, %v982
      %1000 = vst.msk [vmem:[%s998 + $0x4] sm:$0x1] %vm826, %v983
      %1001 = vst.msk [vmem:[%s998 + $0x8] sm:$0xf] %vm824, %v984
      %1002 = vst.msk [vmem:[%s998 + $0xc] sm:$0x1] %vm826, %v985
      %1003 = vst.msk [vmem:[%s998 + $0x10] sm:$0xf] %vm824, %v986
      %1004 = vst.msk [vmem:[%s998 + $0x14] sm:$0x1] %vm826, %v987
      %1005 = vst.msk [vmem:[%s998 + $0x18] sm:$0xf] %vm824, %v988
      %1006 = vst.msk [vmem:[%s998 + $0x1c] sm:$0x1] %vm826, %v989
      %1007 = vst.msk [vmem:[%s998 + $0x20] sm:$0xf] %vm824, %v990
      %1008 = vst.msk [vmem:[%s998 + $0x24] sm:$0x1] %vm826, %v991
      %1009 = vst.msk [vmem:[%s998 + $0x28] sm:$0xf] %vm824, %v992
      %1010 = vst.msk [vmem:[%s998 + $0x2c] sm:$0x1] %vm826, %v993
      %1011 = vst.msk [vmem:[%s998 + $0x30] sm:$0xf] %vm824, %v994
      %1012 = vst.msk [vmem:[%s998 + $0x34] sm:$0x1] %vm826, %v995
      %1013 = vst.msk [vmem:[%s998 + $0x38] sm:$0xf] %vm824, %v996
      %1014 = vst.msk [vmem:[%s998 + $0x3c] sm:$0x1] %vm826, %v997
      %v1015 = vld [vmem:[#allocation2] sm:$0xf]
      %v1016 = vld [vmem:[#allocation2 + $0x8] sm:$0xf]
      %v1017 = vld [vmem:[#allocation2 + $0x10] sm:$0xf]
      %v1018 = vld [vmem:[#allocation2 + $0x18] sm:$0xf]
      %v1019 = vld [vmem:[#allocation2 + $0x20] sm:$0xf]
      %v1020 = vld [vmem:[#allocation2 + $0x28] sm:$0xf]
      %v1021 = vld [vmem:[#allocation2 + $0x30] sm:$0xf]
      %v1022 = vld [vmem:[#allocation2 + $0x38] sm:$0xf]
      %v1023 = vld [vmem:[#allocation2 + $0x4] sm:$0x1]
      %v1024 = vld [vmem:[#allocation2 + $0xc] sm:$0x1]
      %v1025 = vld [vmem:[#allocation2 + $0x14] sm:$0x1]
      %v1026 = vld [vmem:[#allocation2 + $0x1c] sm:$0x1]
      %v1027 = vld [vmem:[#allocation2 + $0x24] sm:$0x1]
      %v1028 = vld [vmem:[#allocation2 + $0x2c] sm:$0x1]
      %v1029 = vld [vmem:[#allocation2 + $0x34] sm:$0x1]
      %v1030 = vld [vmem:[#allocation2 + $0x3c] sm:$0x1]
      %v1031 = vld [vmem:[#allocation2] sm:$0xe]
      %v1032 = vld [vmem:[#allocation2 + $0x8] sm:$0xe]
      %v1033 = vld [vmem:[#allocation2 + $0x10] sm:$0xe]
      %v1034 = vld [vmem:[#allocation2 + $0x18] sm:$0xe]
      %v1035 = vld [vmem:[#allocation2 + $0x20] sm:$0xe]
      %v1036 = vld [vmem:[#allocation2 + $0x28] sm:$0xe]
      %v1037 = vld [vmem:[#allocation2 + $0x30] sm:$0xe]
      %v1038 = vld [vmem:[#allocation2 + $0x38] sm:$0xe]
      %v1039 = vld [vmem:[%s998] sm:$0xf]
      %v1040 = vld [vmem:[%s998 + $0x8] sm:$0xf]
      %v1041 = vld [vmem:[%s998 + $0x10] sm:$0xf]
      %v1042 = vld [vmem:[%s998 + $0x18] sm:$0xf]
      %v1043 = vld [vmem:[%s998 + $0x20] sm:$0xf]
      %v1044 = vld [vmem:[%s998 + $0x28] sm:$0xf]
      %v1045 = vld [vmem:[%s998 + $0x30] sm:$0xf]
      %v1046 = vld [vmem:[%s998 + $0x38] sm:$0xf]
      %v1047 = vld [vmem:[%s998 + $0x4] sm:$0x1]
      %v1048 = vld [vmem:[%s998 + $0xc] sm:$0x1]
      %v1049 = vld [vmem:[%s998 + $0x14] sm:$0x1]
      %v1050 = vld [vmem:[%s998 + $0x1c] sm:$0x1]
      %v1051 = vld [vmem:[%s998 + $0x24] sm:$0x1]
      %v1052 = vld [vmem:[%s998 + $0x2c] sm:$0x1]
      %v1053 = vld [vmem:[%s998 + $0x34] sm:$0x1]
      %v1054 = vld [vmem:[%s998 + $0x3c] sm:$0x1]
      %v1055 = vld [vmem:[%s998] sm:$0xe]
      %v1056 = vld [vmem:[%s998 + $0x8] sm:$0xe]
      %v1057 = vld [vmem:[%s998 + $0x10] sm:$0xe]
      %v1058 = vld [vmem:[%s998 + $0x18] sm:$0xe]
      %v1059 = vld [vmem:[%s998 + $0x20] sm:$0xe]
      %v1060 = vld [vmem:[%s998 + $0x28] sm:$0xe]
      %v1061 = vld [vmem:[%s998 + $0x30] sm:$0xe]
      %v1062 = vld [vmem:[%s998 + $0x38] sm:$0xe]
      %s1063 = scalar_lea.vmem [#allocation2], 16
      %v1064 = vld [vmem:[%s1063] sm:$0xf]
      %v1065 = vld [vmem:[%s1063 + $0x8] sm:$0xf]
      %v1066 = vld [vmem:[%s1063 + $0x10] sm:$0xf]
      %v1067 = vld [vmem:[%s1063 + $0x18] sm:$0xf]
      %v1068 = vld [vmem:[%s1063 + $0x20] sm:$0xf]
      %v1069 = vld [vmem:[%s1063 + $0x28] sm:$0xf]
      %v1070 = vld [vmem:[%s1063 + $0x30] sm:$0xf]
      %v1071 = vld [vmem:[%s1063 + $0x38] sm:$0xf]
      %v1072 = vld [vmem:[%s1063 + $0x4] sm:$0x1]
      %v1073 = vld [vmem:[%s1063 + $0xc] sm:$0x1]
      %v1074 = vld [vmem:[%s1063 + $0x14] sm:$0x1]
      %v1075 = vld [vmem:[%s1063 + $0x1c] sm:$0x1]
      %v1076 = vld [vmem:[%s1063 + $0x24] sm:$0x1]
      %v1077 = vld [vmem:[%s1063 + $0x2c] sm:$0x1]
      %v1078 = vld [vmem:[%s1063 + $0x34] sm:$0x1]
      %v1079 = vld [vmem:[%s1063 + $0x3c] sm:$0x1]
      %v1080 = vld [vmem:[%s1063] sm:$0xe]
      %v1081 = vld [vmem:[%s1063 + $0x8] sm:$0xe]
      %v1082 = vld [vmem:[%s1063 + $0x10] sm:$0xe]
      %v1083 = vld [vmem:[%s1063 + $0x18] sm:$0xe]
      %v1084 = vld [vmem:[%s1063 + $0x20] sm:$0xe]
      %v1085 = vld [vmem:[%s1063 + $0x28] sm:$0xe]
      %v1086 = vld [vmem:[%s1063 + $0x30] sm:$0xe]
      %v1087 = vld [vmem:[%s1063 + $0x38] sm:$0xe]
      %v1104 = vunpack.c.l.b16 %v1015
      %v1105 = vunpack.c.l.b16 %v1023
      %v1106 = vunpack.c.l.b16 %v1016
      %v1107 = vunpack.c.l.b16 %v1024
      %v1108 = vunpack.c.l.b16 %v1017
      %v1109 = vunpack.c.l.b16 %v1025
      %v1110 = vunpack.c.l.b16 %v1018
      %v1111 = vunpack.c.l.b16 %v1026
      %v1112 = vunpack.c.l.b16 %v1019
      %v1113 = vunpack.c.l.b16 %v1027
      %v1114 = vunpack.c.l.b16 %v1020
      %v1115 = vunpack.c.l.b16 %v1028
      %v1116 = vunpack.c.l.b16 %v1021
      %v1117 = vunpack.c.l.b16 %v1029
      %v1118 = vunpack.c.l.b16 %v1022
      %v1119 = vunpack.c.l.b16 %v1030
      %v1120 = vpack.c.b16 %v1105, %v1104
      %v1121 = vpack.c.b16 %v1107, %v1106
      %v1122 = vpack.c.b16 %v1109, %v1108
      %v1123 = vpack.c.b16 %v1111, %v1110
      %v1124 = vpack.c.b16 %v1113, %v1112
      %v1125 = vpack.c.b16 %v1115, %v1114
      %v1126 = vpack.c.b16 %v1117, %v1116
      %v1127 = vpack.c.b16 %v1119, %v1118
      %v1129 = vshrl.u32 %v1120, 16
      %v1131 = vshll.u32 %v1120, 16
      %v1133 = vrot.slane %v1131, 1
      %v1134 = vor.u32 %v1129, %v1133
      %v1136 = vshrl.u32 %v1121, 16
      %v1138 = vshll.u32 %v1121, 16
      %v1140 = vrot.slane %v1138, 1
      %v1141 = vor.u32 %v1136, %v1140
      %v1143 = vshrl.u32 %v1122, 16
      %v1145 = vshll.u32 %v1122, 16
      %v1147 = vrot.slane %v1145, 1
      %v1148 = vor.u32 %v1143, %v1147
      %v1150 = vshrl.u32 %v1123, 16
      %v1152 = vshll.u32 %v1123, 16
      %v1154 = vrot.slane %v1152, 1
      %v1155 = vor.u32 %v1150, %v1154
      %v1157 = vshrl.u32 %v1124, 16
      %v1159 = vshll.u32 %v1124, 16
      %v1161 = vrot.slane %v1159, 1
      %v1162 = vor.u32 %v1157, %v1161
      %v1164 = vshrl.u32 %v1125, 16
      %v1166 = vshll.u32 %v1125, 16
      %v1168 = vrot.slane %v1166, 1
      %v1169 = vor.u32 %v1164, %v1168
      %v1171 = vshrl.u32 %v1126, 16
      %v1173 = vshll.u32 %v1126, 16
      %v1175 = vrot.slane %v1173, 1
      %v1176 = vor.u32 %v1171, %v1175
      %v1178 = vshrl.u32 %v1127, 16
      %v1180 = vshll.u32 %v1127, 16
      %v1182 = vrot.slane %v1180, 1
      %v1183 = vor.u32 %v1178, %v1182
      %1184 = vrot.lane.b32.xlu0 %v1134, 4
      %v1185 = vpop.permute.xlu0 %1184
      %1186 = vrot.lane.b32.xlu0 %v1141, 4
      %v1187 = vpop.permute.xlu0 %1186
      %1188 = vrot.lane.b32.xlu0 %v1148, 4
      %v1189 = vpop.permute.xlu0 %1188
      %1190 = vrot.lane.b32.xlu0 %v1155, 4
      %v1191 = vpop.permute.xlu0 %1190
      %1192 = vrot.lane.b32.xlu0 %v1162, 4
      %v1193 = vpop.permute.xlu0 %1192
      %1194 = vrot.lane.b32.xlu0 %v1169, 4
      %v1195 = vpop.permute.xlu0 %1194
      %1196 = vrot.lane.b32.xlu0 %v1176, 4
      %v1197 = vpop.permute.xlu0 %1196
      %1198 = vrot.lane.b32.xlu0 %v1183, 4
      %v1199 = vpop.permute.xlu0 %1198
      %v1208 = vunpack.c.l.b16 %v1031
      %v1209 = vunpack.c.l.b16 %v1032
      %v1210 = vunpack.c.l.b16 %v1033
      %v1211 = vunpack.c.l.b16 %v1034
      %v1212 = vunpack.c.l.b16 %v1035
      %v1213 = vunpack.c.l.b16 %v1036
      %v1214 = vunpack.c.l.b16 %v1037
      %v1215 = vunpack.c.l.b16 %v1038
      %v1216 = vpack.c.b16 %v1105, %v1208
      %v1217 = vpack.c.b16 %v1107, %v1209
      %v1218 = vpack.c.b16 %v1109, %v1210
      %v1219 = vpack.c.b16 %v1111, %v1211
      %v1220 = vpack.c.b16 %v1113, %v1212
      %v1221 = vpack.c.b16 %v1115, %v1213
      %v1222 = vpack.c.b16 %v1117, %v1214
      %v1223 = vpack.c.b16 %v1119, %v1215
      %v1224 = vrot.slane %v1216, 1
      %v1225 = vrot.slane %v1217, 1
      %v1226 = vrot.slane %v1218, 1
      %v1227 = vrot.slane %v1219, 1
      %v1228 = vrot.slane %v1220, 1
      %v1229 = vrot.slane %v1221, 1
      %v1230 = vrot.slane %v1222, 1
      %v1231 = vrot.slane %v1223, 1
      %1232 = vrot.lane.b32.xlu0 %v1224, 8
      %v1233 = vpop.permute.xlu0 %1232
      %1234 = vrot.lane.b32.xlu0 %v1225, 8
      %v1235 = vpop.permute.xlu0 %1234
      %1236 = vrot.lane.b32.xlu0 %v1226, 8
      %v1237 = vpop.permute.xlu0 %1236
      %1238 = vrot.lane.b32.xlu0 %v1227, 8
      %v1239 = vpop.permute.xlu0 %1238
      %1240 = vrot.lane.b32.xlu0 %v1228, 8
      %v1241 = vpop.permute.xlu0 %1240
      %1242 = vrot.lane.b32.xlu0 %v1229, 8
      %v1243 = vpop.permute.xlu0 %1242
      %1244 = vrot.lane.b32.xlu0 %v1230, 8
      %v1245 = vpop.permute.xlu0 %1244
      %1246 = vrot.lane.b32.xlu0 %v1231, 8
      %v1247 = vpop.permute.xlu0 %1246
      %v1256 = vunpack.c.l.b16 %v1039
      %v1257 = vunpack.c.l.b16 %v1040
      %v1258 = vunpack.c.l.b16 %v1041
      %v1259 = vunpack.c.l.b16 %v1042
      %v1260 = vunpack.c.l.b16 %v1043
      %v1261 = vunpack.c.l.b16 %v1044
      %v1262 = vunpack.c.l.b16 %v1045
      %v1263 = vunpack.c.l.b16 %v1046
      %v1264 = vpack.c.b16 %v1256, %v1256
      %v1265 = vpack.c.b16 %v1257, %v1257
      %v1266 = vpack.c.b16 %v1258, %v1258
      %v1267 = vpack.c.b16 %v1259, %v1259
      %v1268 = vpack.c.b16 %v1260, %v1260
      %v1269 = vpack.c.b16 %v1261, %v1261
      %v1270 = vpack.c.b16 %v1262, %v1262
      %v1271 = vpack.c.b16 %v1263, %v1263
      %1272 = vrot.lane.b32.xlu0 %v1264, 12
      %v1273 = vpop.permute.xlu0 %1272
      %1274 = vrot.lane.b32.xlu0 %v1265, 12
      %v1275 = vpop.permute.xlu0 %1274
      %1276 = vrot.lane.b32.xlu0 %v1266, 12
      %v1277 = vpop.permute.xlu0 %1276
      %1278 = vrot.lane.b32.xlu0 %v1267, 12
      %v1279 = vpop.permute.xlu0 %1278
      %1280 = vrot.lane.b32.xlu0 %v1268, 12
      %v1281 = vpop.permute.xlu0 %1280
      %1282 = vrot.lane.b32.xlu0 %v1269, 12
      %v1283 = vpop.permute.xlu0 %1282
      %1284 = vrot.lane.b32.xlu0 %v1270, 12
      %v1285 = vpop.permute.xlu0 %1284
      %1286 = vrot.lane.b32.xlu0 %v1271, 12
      %v1287 = vpop.permute.xlu0 %1286
      %v1296 = vunpack.c.l.b16 %v1047
      %v1297 = vunpack.c.l.b16 %v1048
      %v1298 = vunpack.c.l.b16 %v1049
      %v1299 = vunpack.c.l.b16 %v1050
      %v1300 = vunpack.c.l.b16 %v1051
      %v1301 = vunpack.c.l.b16 %v1052
      %v1302 = vunpack.c.l.b16 %v1053
      %v1303 = vunpack.c.l.b16 %v1054
      %v1304 = vpack.c.b16 %v1296, %v1256
      %v1305 = vpack.c.b16 %v1297, %v1257
      %v1306 = vpack.c.b16 %v1298, %v1258
      %v1307 = vpack.c.b16 %v1299, %v1259
      %v1308 = vpack.c.b16 %v1300, %v1260
      %v1309 = vpack.c.b16 %v1301, %v1261
      %v1310 = vpack.c.b16 %v1302, %v1262
      %v1311 = vpack.c.b16 %v1303, %v1263
      %v1313 = vshrl.u32 %v1304, 16
      %v1315 = vshll.u32 %v1304, 16
      %v1317 = vrot.slane %v1315, 1
      %v1318 = vor.u32 %v1313, %v1317
      %v1320 = vshrl.u32 %v1305, 16
      %v1322 = vshll.u32 %v1305, 16
      %v1324 = vrot.slane %v1322, 1
      %v1325 = vor.u32 %v1320, %v1324
      %v1327 = vshrl.u32 %v1306, 16
      %v1329 = vshll.u32 %v1306, 16
      %v1331 = vrot.slane %v1329, 1
      %v1332 = vor.u32 %v1327, %v1331
      %v1334 = vshrl.u32 %v1307, 16
      %v1336 = vshll.u32 %v1307, 16
      %v1338 = vrot.slane %v1336, 1
      %v1339 = vor.u32 %v1334, %v1338
      %v1341 = vshrl.u32 %v1308, 16
      %v1343 = vshll.u32 %v1308, 16
      %v1345 = vrot.slane %v1343, 1
      %v1346 = vor.u32 %v1341, %v1345
      %v1348 = vshrl.u32 %v1309, 16
      %v1350 = vshll.u32 %v1309, 16
      %v1352 = vrot.slane %v1350, 1
      %v1353 = vor.u32 %v1348, %v1352
      %v1355 = vshrl.u32 %v1310, 16
      %v1357 = vshll.u32 %v1310, 16
      %v1359 = vrot.slane %v1357, 1
      %v1360 = vor.u32 %v1355, %v1359
      %v1362 = vshrl.u32 %v1311, 16
      %v1364 = vshll.u32 %v1311, 16
      %v1366 = vrot.slane %v1364, 1
      %v1367 = vor.u32 %v1362, %v1366
      %1368 = vrot.lane.b32.xlu0 %v1318, 16
      %v1369 = vpop.permute.xlu0 %1368
      %1370 = vrot.lane.b32.xlu0 %v1325, 16
      %v1371 = vpop.permute.xlu0 %1370
      %1372 = vrot.lane.b32.xlu0 %v1332, 16
      %v1373 = vpop.permute.xlu0 %1372
      %1374 = vrot.lane.b32.xlu0 %v1339, 16
      %v1375 = vpop.permute.xlu0 %1374
      %1376 = vrot.lane.b32.xlu0 %v1346, 16
      %v1377 = vpop.permute.xlu0 %1376
      %1378 = vrot.lane.b32.xlu0 %v1353, 16
      %v1379 = vpop.permute.xlu0 %1378
      %1380 = vrot.lane.b32.xlu0 %v1360, 16
      %v1381 = vpop.permute.xlu0 %1380
      %1382 = vrot.lane.b32.xlu0 %v1367, 16
      %v1383 = vpop.permute.xlu0 %1382
      %v1392 = vunpack.c.l.b16 %v1055
      %v1393 = vunpack.c.l.b16 %v1056
      %v1394 = vunpack.c.l.b16 %v1057
      %v1395 = vunpack.c.l.b16 %v1058
      %v1396 = vunpack.c.l.b16 %v1059
      %v1397 = vunpack.c.l.b16 %v1060
      %v1398 = vunpack.c.l.b16 %v1061
      %v1399 = vunpack.c.l.b16 %v1062
      %v1400 = vpack.c.b16 %v1296, %v1392
      %v1401 = vpack.c.b16 %v1297, %v1393
      %v1402 = vpack.c.b16 %v1298, %v1394
      %v1403 = vpack.c.b16 %v1299, %v1395
      %v1404 = vpack.c.b16 %v1300, %v1396
      %v1405 = vpack.c.b16 %v1301, %v1397
      %v1406 = vpack.c.b16 %v1302, %v1398
      %v1407 = vpack.c.b16 %v1303, %v1399
      %v1408 = vrot.slane %v1400, 1
      %v1409 = vrot.slane %v1401, 1
      %v1410 = vrot.slane %v1402, 1
      %v1411 = vrot.slane %v1403, 1
      %v1412 = vrot.slane %v1404, 1
      %v1413 = vrot.slane %v1405, 1
      %v1414 = vrot.slane %v1406, 1
      %v1415 = vrot.slane %v1407, 1
      %1416 = vrot.lane.b32.xlu0 %v1408, 20
      %v1417 = vpop.permute.xlu0 %1416
      %1418 = vrot.lane.b32.xlu0 %v1409, 20
      %v1419 = vpop.permute.xlu0 %1418
      %1420 = vrot.lane.b32.xlu0 %v1410, 20
      %v1421 = vpop.permute.xlu0 %1420
      %1422 = vrot.lane.b32.xlu0 %v1411, 20
      %v1423 = vpop.permute.xlu0 %1422
      %1424 = vrot.lane.b32.xlu0 %v1412, 20
      %v1425 = vpop.permute.xlu0 %1424
      %1426 = vrot.lane.b32.xlu0 %v1413, 20
      %v1427 = vpop.permute.xlu0 %1426
      %1428 = vrot.lane.b32.xlu0 %v1414, 20
      %v1429 = vpop.permute.xlu0 %1428
      %1430 = vrot.lane.b32.xlu0 %v1415, 20
      %v1431 = vpop.permute.xlu0 %1430
      %v1440 = vunpack.c.l.b16 %v1064
      %v1441 = vunpack.c.l.b16 %v1065
      %v1442 = vunpack.c.l.b16 %v1066
      %v1443 = vunpack.c.l.b16 %v1067
      %v1444 = vunpack.c.l.b16 %v1068
      %v1445 = vunpack.c.l.b16 %v1069
      %v1446 = vunpack.c.l.b16 %v1070
      %v1447 = vunpack.c.l.b16 %v1071
      %v1448 = vpack.c.b16 %v1440, %v1440
      %v1449 = vpack.c.b16 %v1441, %v1441
      %v1450 = vpack.c.b16 %v1442, %v1442
      %v1451 = vpack.c.b16 %v1443, %v1443
      %v1452 = vpack.c.b16 %v1444, %v1444
      %v1453 = vpack.c.b16 %v1445, %v1445
      %v1454 = vpack.c.b16 %v1446, %v1446
      %v1455 = vpack.c.b16 %v1447, %v1447
      %1456 = vrot.lane.b32.xlu0 %v1448, 24
      %v1457 = vpop.permute.xlu0 %1456
      %1458 = vrot.lane.b32.xlu0 %v1449, 24
      %v1459 = vpop.permute.xlu0 %1458
      %1460 = vrot.lane.b32.xlu0 %v1450, 24
      %v1461 = vpop.permute.xlu0 %1460
      %1462 = vrot.lane.b32.xlu0 %v1451, 24
      %v1463 = vpop.permute.xlu0 %1462
      %1464 = vrot.lane.b32.xlu0 %v1452, 24
      %v1465 = vpop.permute.xlu0 %1464
      %1466 = vrot.lane.b32.xlu0 %v1453, 24
      %v1467 = vpop.permute.xlu0 %1466
      %1468 = vrot.lane.b32.xlu0 %v1454, 24
      %v1469 = vpop.permute.xlu0 %1468
      %1470 = vrot.lane.b32.xlu0 %v1455, 24
      %v1471 = vpop.permute.xlu0 %1470
      %v1480 = vunpack.c.l.b16 %v1072
      %v1481 = vunpack.c.l.b16 %v1073
      %v1482 = vunpack.c.l.b16 %v1074
      %v1483 = vunpack.c.l.b16 %v1075
      %v1484 = vunpack.c.l.b16 %v1076
      %v1485 = vunpack.c.l.b16 %v1077
      %v1486 = vunpack.c.l.b16 %v1078
      %v1487 = vunpack.c.l.b16 %v1079
      %v1488 = vpack.c.b16 %v1480, %v1440
      %v1489 = vpack.c.b16 %v1481, %v1441
      %v1490 = vpack.c.b16 %v1482, %v1442
      %v1491 = vpack.c.b16 %v1483, %v1443
      %v1492 = vpack.c.b16 %v1484, %v1444
      %v1493 = vpack.c.b16 %v1485, %v1445
      %v1494 = vpack.c.b16 %v1486, %v1446
      %v1495 = vpack.c.b16 %v1487, %v1447
      %v1497 = vshrl.u32 %v1488, 16
      %v1499 = vshll.u32 %v1488, 16
      %v1501 = vrot.slane %v1499, 1
      %v1502 = vor.u32 %v1497, %v1501
      %v1504 = vshrl.u32 %v1489, 16
      %v1506 = vshll.u32 %v1489, 16
      %v1508 = vrot.slane %v1506, 1
      %v1509 = vor.u32 %v1504, %v1508
      %v1511 = vshrl.u32 %v1490, 16
      %v1513 = vshll.u32 %v1490, 16
      %v1515 = vrot.slane %v1513, 1
      %v1516 = vor.u32 %v1511, %v1515
      %v1518 = vshrl.u32 %v1491, 16
      %v1520 = vshll.u32 %v1491, 16
      %v1522 = vrot.slane %v1520, 1
      %v1523 = vor.u32 %v1518, %v1522
      %v1525 = vshrl.u32 %v1492, 16
      %v1527 = vshll.u32 %v1492, 16
      %v1529 = vrot.slane %v1527, 1
      %v1530 = vor.u32 %v1525, %v1529
      %v1532 = vshrl.u32 %v1493, 16
      %v1534 = vshll.u32 %v1493, 16
      %v1536 = vrot.slane %v1534, 1
      %v1537 = vor.u32 %v1532, %v1536
      %v1539 = vshrl.u32 %v1494, 16
      %v1541 = vshll.u32 %v1494, 16
      %v1543 = vrot.slane %v1541, 1
      %v1544 = vor.u32 %v1539, %v1543
      %v1546 = vshrl.u32 %v1495, 16
      %v1548 = vshll.u32 %v1495, 16
      %v1550 = vrot.slane %v1548, 1
      %v1551 = vor.u32 %v1546, %v1550
      %1552 = vrot.lane.b32.xlu0 %v1502, 28
      %v1553 = vpop.permute.xlu0 %1552
      %1554 = vrot.lane.b32.xlu0 %v1509, 28
      %v1555 = vpop.permute.xlu0 %1554
      %1556 = vrot.lane.b32.xlu0 %v1516, 28
      %v1557 = vpop.permute.xlu0 %1556
      %1558 = vrot.lane.b32.xlu0 %v1523, 28
      %v1559 = vpop.permute.xlu0 %1558
      %1560 = vrot.lane.b32.xlu0 %v1530, 28
      %v1561 = vpop.permute.xlu0 %1560
      %1562 = vrot.lane.b32.xlu0 %v1537, 28
      %v1563 = vpop.permute.xlu0 %1562
      %1564 = vrot.lane.b32.xlu0 %v1544, 28
      %v1565 = vpop.permute.xlu0 %1564
      %1566 = vrot.lane.b32.xlu0 %v1551, 28
      %v1567 = vpop.permute.xlu0 %1566
      %v1576 = vunpack.c.l.b16 %v1080
      %v1577 = vunpack.c.l.b16 %v1081
      %v1578 = vunpack.c.l.b16 %v1082
      %v1579 = vunpack.c.l.b16 %v1083
      %v1580 = vunpack.c.l.b16 %v1084
      %v1581 = vunpack.c.l.b16 %v1085
      %v1582 = vunpack.c.l.b16 %v1086
      %v1583 = vunpack.c.l.b16 %v1087
      %v1584 = vpack.c.b16 %v1480, %v1576
      %v1585 = vpack.c.b16 %v1481, %v1577
      %v1586 = vpack.c.b16 %v1482, %v1578
      %v1587 = vpack.c.b16 %v1483, %v1579
      %v1588 = vpack.c.b16 %v1484, %v1580
      %v1589 = vpack.c.b16 %v1485, %v1581
      %v1590 = vpack.c.b16 %v1486, %v1582
      %v1591 = vpack.c.b16 %v1487, %v1583
      %v1592 = vrot.slane %v1584, 1
      %v1593 = vrot.slane %v1585, 1
      %v1594 = vrot.slane %v1586, 1
      %v1595 = vrot.slane %v1587, 1
      %v1596 = vrot.slane %v1588, 1
      %v1597 = vrot.slane %v1589, 1
      %v1598 = vrot.slane %v1590, 1
      %v1599 = vrot.slane %v1591, 1
      %1600 = vrot.lane.b32.xlu0 %v1592, 32
      %v1601 = vpop.permute.xlu0 %1600
      %1602 = vrot.lane.b32.xlu0 %v1593, 32
      %v1603 = vpop.permute.xlu0 %1602
      %1604 = vrot.lane.b32.xlu0 %v1594, 32
      %v1605 = vpop.permute.xlu0 %1604
      %1606 = vrot.lane.b32.xlu0 %v1595, 32
      %v1607 = vpop.permute.xlu0 %1606
      %1608 = vrot.lane.b32.xlu0 %v1596, 32
      %v1609 = vpop.permute.xlu0 %1608
      %1610 = vrot.lane.b32.xlu0 %v1597, 32
      %v1611 = vpop.permute.xlu0 %1610
      %1612 = vrot.lane.b32.xlu0 %v1598, 32
      %v1613 = vpop.permute.xlu0 %1612
      %1614 = vrot.lane.b32.xlu0 %v1599, 32
      %v1615 = vpop.permute.xlu0 %1614
      %vm1616 = vcmask 31744
      %v1619 = vsel %vm1616, %v1015, %v1185
      %v1622 = vsel %vm1616, %v1016, %v1187
      %v1625 = vsel %vm1616, %v1017, %v1189
      %v1628 = vsel %vm1616, %v1018, %v1191
      %v1631 = vsel %vm1616, %v1019, %v1193
      %v1634 = vsel %vm1616, %v1020, %v1195
      %v1637 = vsel %vm1616, %v1021, %v1197
      %v1640 = vsel %vm1616, %v1022, %v1199
      %vm1641 = vcmask 64512
      %v1643 = vsel %vm1641, %v1619, %v1233
      %v1645 = vsel %vm1641, %v1622, %v1235
      %v1647 = vsel %vm1641, %v1625, %v1237
      %v1649 = vsel %vm1641, %v1628, %v1239
      %v1651 = vsel %vm1641, %v1631, %v1241
      %v1653 = vsel %vm1641, %v1634, %v1243
      %v1655 = vsel %vm1641, %v1637, %v1245
      %v1657 = vsel %vm1641, %v1640, %v1247
      %vm1658 = vcmask 97280
      %v1660 = vsel %vm1658, %v1643, %v1273
      %v1662 = vsel %vm1658, %v1645, %v1275
      %v1664 = vsel %vm1658, %v1647, %v1277
      %v1666 = vsel %vm1658, %v1649, %v1279
      %v1668 = vsel %vm1658, %v1651, %v1281
      %v1670 = vsel %vm1658, %v1653, %v1283
      %v1672 = vsel %vm1658, %v1655, %v1285
      %v1674 = vsel %vm1658, %v1657, %v1287
      %vm1675 = vcmask 130048
      %v1677 = vsel %vm1675, %v1660, %v1369
      %v1679 = vsel %vm1675, %v1662, %v1371
      %v1681 = vsel %vm1675, %v1664, %v1373
      %v1683 = vsel %vm1675, %v1666, %v1375
      %v1685 = vsel %vm1675, %v1668, %v1377
      %v1687 = vsel %vm1675, %v1670, %v1379
      %v1689 = vsel %vm1675, %v1672, %v1381
      %v1691 = vsel %vm1675, %v1674, %v1383
      %vm1692 = vcmask 162816
      %v1694 = vsel %vm1692, %v1677, %v1417
      %v1696 = vsel %vm1692, %v1679, %v1419
      %v1698 = vsel %vm1692, %v1681, %v1421
      %v1700 = vsel %vm1692, %v1683, %v1423
      %v1702 = vsel %vm1692, %v1685, %v1425
      %v1704 = vsel %vm1692, %v1687, %v1427
      %v1706 = vsel %vm1692, %v1689, %v1429
      %v1708 = vsel %vm1692, %v1691, %v1431
      %vm1709 = vcmask 195584
      %v1711 = vsel %vm1709, %v1694, %v1457
      %v1713 = vsel %vm1709, %v1696, %v1459
      %v1715 = vsel %vm1709, %v1698, %v1461
      %v1717 = vsel %vm1709, %v1700, %v1463
      %v1719 = vsel %vm1709, %v1702, %v1465
      %v1721 = vsel %vm1709, %v1704, %v1467
      %v1723 = vsel %vm1709, %v1706, %v1469
      %v1725 = vsel %vm1709, %v1708, %v1471
      %vm1726 = vcmask 228352
      %v1728 = vsel %vm1726, %v1711, %v1553
      %v1730 = vsel %vm1726, %v1713, %v1555
      %v1732 = vsel %vm1726, %v1715, %v1557
      %v1734 = vsel %vm1726, %v1717, %v1559
      %v1736 = vsel %vm1726, %v1719, %v1561
      %v1738 = vsel %vm1726, %v1721, %v1563
      %v1740 = vsel %vm1726, %v1723, %v1565
      %v1742 = vsel %vm1726, %v1725, %v1567
      %vm1743 = vcmask 261120
      %v1745 = vsel %vm1743, %v1728, %v1601
      %v1747 = vsel %vm1743, %v1730, %v1603
      %v1749 = vsel %vm1743, %v1732, %v1605
      %v1751 = vsel %vm1743, %v1734, %v1607
      %v1753 = vsel %vm1743, %v1736, %v1609
      %v1755 = vsel %vm1743, %v1738, %v1611
      %v1757 = vsel %vm1743, %v1740, %v1613
      %v1759 = vsel %vm1743, %v1742, %v1615
      %v1760 = vld [vmem:[%s1] sm:$0xf]
      %v1761 = vld [vmem:[%s1 + $0x4] sm:$0xf]
      %v1762 = vld [vmem:[%s1 + $0x8] sm:$0xf]
      %v1763 = vld [vmem:[%s1 + $0xc] sm:$0xf]
      %v1764 = vld [vmem:[%s1 + $0x10] sm:$0x3]
      %v1773 = vunpack.c.l.b16 %v1745
      %v1774 = vunpack.c.l.b16 %v1747
      %v1775 = vunpack.c.l.b16 %v1749
      %v1776 = vunpack.c.l.b16 %v1751
      %v1777 = vunpack.c.l.b16 %v1753
      %v1778 = vunpack.c.l.b16 %v1755
      %v1779 = vunpack.c.l.b16 %v1757
      %v1780 = vunpack.c.l.b16 %v1759
      %v1781 = vpack.c.b16 %v1774, %v1773
      %v1782 = vpack.c.b16 %v1776, %v1775
      %v1783 = vpack.c.b16 %v1778, %v1777
      %v1784 = vpack.c.b16 %v1780, %v1779
      %v1790 = vunpack.c.l.b16 %v1760
      %v1791 = vunpack.c.l.b16 %v1761
      %v1792 = vunpack.c.l.b16 %v1762
      %v1793 = vunpack.c.l.b16 %v1763
      %v1794 = vunpack.c.l.b16 %v1764
      %v1795 = vpack.c.b16 %v1791, %v1790
      %v1796 = vpack.c.b16 %v1793, %v1792
      %v1797 = vpack.c.b16 %v1794, %v1794
      %vm1800 = vcmask 293888
      %v1802 = vsel %vm1800, %v1781, 0
      %v1805 = vsel %vm1800, %v1782, 0
      %v1808 = vsel %vm1800, %v1783, 0
      %v1811 = vsel %vm1800, %v1784, 0
      %vm1813 = vcmask 1041408
      %v1815 = vsel %vm1813, %v1797, 0
      %1817 = vmatpush.bf16.msra.mxu0 0
      %1818 = vmatpush.bf16.msra.mxu0 0
      %1819 = vmatpush.bf16.msra.mxu0 0
      %1820 = vmatpush.bf16.msra.mxu0 0
      %1821 = vmatpush.bf16.msra.mxu0 0
      %1822 = vmatpush.bf16.msra.mxu0 %v1815
      %1823 = vmatpush.bf16.msra.mxu0 %v1796
      %1824 = vmatpush.bf16.msra.mxu0 %v1795
      %1825 = vmatmul.bf16.gmra.mxu0 %v1802
      %v1826 = vpop.f32.mrf.mxu0
      %v1827 = vadd.f32 0.0, %v1826
      %v1828 = vpop.f32.mrf.mxu0
      %v1829 = vadd.f32 0.0, %v1828
      %1830 = vmatmul.bf16.gmra.mxu0 %v1805
      %v1831 = vpop.f32.mrf.mxu0
      %v1832 = vadd.f32 0.0, %v1831
      %v1833 = vpop.f32.mrf.mxu0
      %v1834 = vadd.f32 0.0, %v1833
      %1835 = vmatmul.bf16.gmra.mxu0 %v1808
      %v1836 = vpop.f32.mrf.mxu0
      %v1837 = vadd.f32 0.0, %v1836
      %v1838 = vpop.f32.mrf.mxu0
      %v1839 = vadd.f32 0.0, %v1838
      %1840 = vmatmul.bf16.gmra.mxu0 %v1811
      %v1841 = vpop.f32.mrf.mxu0
      %v1842 = vadd.f32 0.0, %v1841
      %v1843 = vpop.f32.mrf.mxu0
      %v1844 = vadd.f32 0.0, %v1843
      %1845 = vdwg.mxu0
      %v1846 = vsel %vm1641, %v1827, 0.0
      %v1847 = vsel %vm1641, %v1829, 0.0
      %v1848 = vadd.f32 %v1846, %v1847
      %v1849 = vsel %vm1641, %v1832, 0.0
      %v1850 = vadd.f32 %v1848, %v1849
      %v1851 = vsel %vm1641, %v1834, 0.0
      %v1852 = vadd.f32 %v1850, %v1851
      %v1853 = vsel %vm1641, %v1837, 0.0
      %v1854 = vadd.f32 %v1852, %v1853
      %v1855 = vsel %vm1641, %v1839, 0.0
      %v1856 = vadd.f32 %v1854, %v1855
      %v1857 = vsel %vm1641, %v1842, 0.0
      %v1858 = vadd.f32 %v1856, %v1857
      %v1859 = vsel %vm1641, %v1844, 0.0
      %v1860 = vadd.f32 %v1858, %v1859
      %v1861 = vrot.slane %v1860, 4
      %v1862 = vadd.f32 %v1860, %v1861
      %v1863 = vrot.slane %v1862, 2
      %v1864 = vadd.f32 %v1862, %v1863
      %v1865 = vrot.slane %v1864, 1
      %v1866 = vadd.f32 %v1864, %v1865
      %v1867 = vrcp.pop 64.0
      %v1868 = vmul.f32 64.0, %v1867
      %v1869 = vsub.f32 1.0, %v1868
      %v1870 = vmul.f32 %v1867, %v1869
      %v1871 = vadd.f32 %v1867, %v1870
      %vm1872 = vweird.f32 %v1867
      %v1873 = vsel %vm1872, %v1867, %v1871
      %v1874 = vmul.f32 %v1866, %v1873
      %v1875 = vsub.f32 %v1827, %v1874
      %v1876 = vsub.f32 %v1829, %v1874
      %v1877 = vsub.f32 %v1832, %v1874
      %v1878 = vsub.f32 %v1834, %v1874
      %v1879 = vsub.f32 %v1837, %v1874
      %v1880 = vsub.f32 %v1839, %v1874
      %v1881 = vsub.f32 %v1842, %v1874
      %v1882 = vsub.f32 %v1844, %v1874
      %v1883 = vmul.f32 %v1875, %v1875
      %v1884 = vmul.f32 %v1876, %v1876
      %v1885 = vmul.f32 %v1877, %v1877
      %v1886 = vmul.f32 %v1878, %v1878
      %v1887 = vmul.f32 %v1879, %v1879
      %v1888 = vmul.f32 %v1880, %v1880
      %v1889 = vmul.f32 %v1881, %v1881
      %v1890 = vmul.f32 %v1882, %v1882
      %v1891 = vsel %vm1641, %v1883, 0.0
      %v1892 = vsel %vm1641, %v1884, 0.0
      %v1893 = vadd.f32 %v1891, %v1892
      %v1894 = vsel %vm1641, %v1885, 0.0
      %v1895 = vadd.f32 %v1893, %v1894
      %v1896 = vsel %vm1641, %v1886, 0.0
      %v1897 = vadd.f32 %v1895, %v1896
      %v1898 = vsel %vm1641, %v1887, 0.0
      %v1899 = vadd.f32 %v1897, %v1898
      %v1900 = vsel %vm1641, %v1888, 0.0
      %v1901 = vadd.f32 %v1899, %v1900
      %v1902 = vsel %vm1641, %v1889, 0.0
      %v1903 = vadd.f32 %v1901, %v1902
      %v1904 = vsel %vm1641, %v1890, 0.0
      %v1905 = vadd.f32 %v1903, %v1904
      %v1906 = vrot.slane %v1905, 4
      %v1907 = vadd.f32 %v1905, %v1906
      %v1908 = vrot.slane %v1907, 2
      %v1909 = vadd.f32 %v1907, %v1908
      %v1910 = vrot.slane %v1909, 1
      %v1911 = vadd.f32 %v1909, %v1910
      %vm1912 = vcmask 57344
      %1913 = vst.msk [vmem:[%s181] sm:$0x1] %vm1912, %v1866
      %1914 = vst.msk [vmem:[%s181 + $0x1] sm:$0x1] %vm1912, %v1911
      %v1915 = vpack.c.bf16 %v1827, %v1827
      %v1916 = vpack.c.bf16 %v1829, %v1829
      %v1917 = vpack.c.bf16 %v1832, %v1832
      %v1918 = vpack.c.bf16 %v1834, %v1834
      %v1919 = vpack.c.bf16 %v1837, %v1837
      %v1920 = vpack.c.bf16 %v1839, %v1839
      %v1921 = vpack.c.bf16 %v1842, %v1842
      %v1922 = vpack.c.bf16 %v1844, %v1844
      %vm1923 = vcmask 60416
      %1924 = vst.msk [vmem:[%s177] sm:$0xf] %vm1923, %v1915
      %1925 = vst.msk [vmem:[%s177 + $0x4] sm:$0xf] %vm1923, %v1916
      %1926 = vst.msk [vmem:[%s177 + $0x8] sm:$0xf] %vm1923, %v1917
      %1927 = vst.msk [vmem:[%s177 + $0xc] sm:$0xf] %vm1923, %v1918
      %1928 = vst.msk [vmem:[%s177 + $0x10] sm:$0xf] %vm1923, %v1919
      %1929 = vst.msk [vmem:[%s177 + $0x14] sm:$0xf] %vm1923, %v1920
      %1930 = vst.msk [vmem:[%s177 + $0x18] sm:$0xf] %vm1923, %v1921
      %1931 = vst.msk [vmem:[%s177 + $0x1c] sm:$0xf] %vm1923, %v1922
      %p1932 = scmp.lt.s32.totalorder %s15, 1
      %s1933 = scalar_select %p1932, %s15, 1
      %s1934 = smul.addr %s1933, 8
      %s1935 = smul.addr %s1934, 4
      %s1936 = scalar_lea.vmem %s2, %s1935
      %p1937 = scmp.lt.s32.totalorder %s15, 1
      %s1938 = scalar_select %p1937, %s15, 1
      %s1939 = smul.addr %s1938, 2
      %s1940 = scalar_lea.vmem %s3, %s1939
      // Predicated region
      $region29: #{downsample.3} parent=27 // pred_check
        %p1941 = pneg %p80
      $region30: #{downsample.3} parent=27 // pred_check_branch
        %1943 = sbr.rel (%p1941) target = $region32
      $region31: #{downsample.3} parent=27 // pred_region
        _
      $region32: #{downsample.3} parent=27 // pred_fallthru
        _
      // Predicated region
      $region33: #{downsample.3} parent=27 // pred_check
        %p1944 = pneg %p106
      $region34: #{downsample.3} parent=27 // pred_check_branch
        %1946 = sbr.rel (%p1944) target = $region36
      $region35: #{downsample.3} parent=27 // pred_region
        _
      $region36: #{downsample.3} parent=27 // pred_fallthru
        _
    $region28: #{downsample.3} parent=5 // pred_fallthru
      _
    %p1947 = scmp.le.s32.totalorder 2, %s10
    // Predicated region
    $region37: #{downsample.3} parent=5 // pred_check
      %p1948 = pneg %p1947
    $region38: #{downsample.3} parent=5 // pred_check_branch
      %1950 = sbr.rel (%p1948) target = $region40
    $region39: #{downsample.3} parent=5 // pred_region
      %s1951 = ssub.s32 %s10, 2
      // Predicated region
      $region41: #{downsample.3} parent=39 // pred_check
        %p1952 = pneg %p86
      $region42: #{downsample.3} parent=39 // pred_check_branch
        %1954 = sbr.rel (%p1952) target = $region44
      $region43: #{downsample.3} parent=39 // pred_region
        %p1955 = scmp.lt.s32.totalorder %s16, 1
        %s1956 = scalar_select %p1955, %s16, 1
        %s1957 = smul.addr %s1956, 8
        %s1958 = smul.addr %s1957, 4
        %s1959 = scalar_lea.vmem %s2, %s1958
      $region44: #{downsample.3} parent=39 // pred_fallthru
        _
      // Predicated region
      $region45: #{downsample.3} parent=39 // pred_check
        %p1960 = pneg %p112
      $region46: #{downsample.3} parent=39 // pred_check_branch
        %1962 = sbr.rel (%p1960) target = $region48
      $region47: #{downsample.3} parent=39 // pred_region
        %p1963 = scmp.lt.s32.totalorder %s16, 1
        %s1964 = scalar_select %p1963, %s16, 1
        %s1965 = smul.addr %s1964, 2
        %s1966 = scalar_lea.vmem %s3, %s1965
      $region48: #{downsample.3} parent=39 // pred_fallthru
        _
    $region40: #{downsample.3} parent=5 // pred_fallthru
      _
  $region6: #{downsample.3} parent=0 // loop_footer
    %s14 = sadd.s32 1, %s10
  $region7: #{downsample.3} parent=0 // loop_footer_branch
    %9 = sbr.rel target = $region3
  $region8: #{downsample.3} parent=0 // loop_exit
    _

</llo_original>
